<compile_context>
chip_gen: v5e
topology: v5e:2x2
jax: 0.10.0
libtpu: 0.0.40
codegen_flags: <defaults>
</compile_context>

<pallas_src>
import math
from functools import partial

import jax
import jax.numpy as jnp
from jax.experimental import pallas as pl
from jax.experimental.pallas import tpu as pltpu


def _round_up(x, m):
    return ((x + m - 1) // m) * m


def _layernorm(x, gamma, beta, eps=1e-5):
    mu = jnp.mean(x, axis=-1, keepdims=True)
    var = jnp.mean((x - mu) ** 2, axis=-1, keepdims=True)
    return (x - mu) * jax.lax.rsqrt(var + eps) * gamma + beta


# ----------------------------------------------------------------------------
# Single fused kernel: embeddings + N encoders (both towers) + gate + output
# ----------------------------------------------------------------------------
def _fused_forward_kernel(x_ref, xt_ref, wemb_ref, bemb_ref,
                          ws1_ref, vs1_ref, ws2_ref, vs2_ref,
                          wh1_ref, wh2_ref, bh_ref,
                          out_ref, gate_ref, enc_ref, emb1_ref, emb2_ref,
                          sc1_ref, sc2_ref,
                          *, T, C, D, H, q, v, h, N, d_out):
    f32 = jnp.float32
    hq, hv = h * q, h * v
    CQKV = 2 * hq + hv
    # 128-lane aligned column offsets inside the per-layer weight slab
    PQ, PD, PH = _round_up(CQKV, 128), _round_up(D, 128), _round_up(H, 128)

    def encoder(xin, ws_ref, vs_ref, l, score_ref):
        # weight slab columns: [ wqkv | wo | w1 | w2 ]  (each 128-lane aligned)
        wqkv = ws_ref[l, 0:D, 0:CQKV]
        wo = ws_ref[l, 0:hv, PQ:PQ + D]
        w1 = ws_ref[l, 0:D, PQ + PD:PQ + PD + H]
        w2 = ws_ref[l, 0:H, PQ + PD + PH:PQ + PD + PH + D]
        # vector slab rows: bqkv, bo, b1, b2, g1, be1, g2, be2
        bqkv = vs_ref[l, 0:1, 0:CQKV]
        bo = vs_ref[l, 1:2, 0:D]
        b1 = vs_ref[l, 2:3, 0:H]
        b2 = vs_ref[l, 3:4, 0:D]
        g1 = vs_ref[l, 4:5, 0:D]
        be1 = vs_ref[l, 5:6, 0:D]
        g2 = vs_ref[l, 6:7, 0:D]
        be2 = vs_ref[l, 7:8, 0:D]

        # fused QKV projection: one (S,D)x(D,2hq+hv) matmul
        qkv = jnp.dot(xin, wqkv, preferred_element_type=f32) + bqkv
        Qm = qkv[:, 0:hq]
        Km = qkv[:, hq:2 * hq]
        Vm = qkv[:, 2 * hq:CQKV]

        inv_sqrt_q = 1.0 / math.sqrt(q)
        heads = []
        for i in range(h):                      # h is small & static -> unrolled
            Qi = Qm[:, i * q:(i + 1) * q]
            Ki = Km[:, i * q:(i + 1) * q]
            Vi = Vm[:, i * v:(i + 1) * v]
            s = jax.lax.dot_general(Qi, Ki, (((1,), (1,)), ((), ())),
                                    preferred_element_type=f32) * inv_sqrt_q
            m = jnp.max(s, axis=-1, keepdims=True)
            e = jnp.exp(s - m)
            p = e / jnp.sum(e, axis=-1, keepdims=True)   # exact softmax (returned)
            if score_ref is not None:           # only last layer's scores are returned
                score_ref[0, i] = p
            heads.append(jnp.dot(p, Vi, preferred_element_type=f32))       # (S, v)
        ctx = jnp.concatenate(heads, axis=-1)                              # (S, h*v)
        sa = jnp.dot(ctx, wo, preferred_element_type=f32) + bo
        # dropout omitted (identity / eval mode)
        x1 = _layernorm(sa + xin, g1, be1)
        hid = jnp.maximum(jnp.dot(x1, w1, preferred_element_type=f32) + b1, 0.0)
        ff = jnp.dot(hid, w2, preferred_element_type=f32) + b2
        return _layernorm(ff + x1, g2, be2)

    x = x_ref[0]                                                           # (T, C)
    xt = xt_ref[0]                                                         # (C, T)

    # embeddings (channel -> step-wise tower, input -> channel-wise tower)
    e1 = jnp.dot(x, wemb_ref[0:C, :], preferred_element_type=f32) + bemb_ref[0:1, :]
    emb1_ref[0] = e1
    e2 = jnp.dot(xt, wemb_ref[C:C + T, :], preferred_element_type=f32) + bemb_ref[1:2, :]
    emb2_ref[0] = e2
    # TODO(synk): pe=True positional-encoding and mask=True branches not implemented
    # (module defaults are pe=False / mask=False); dropout is eval-mode identity.

    for l in range(N):
        e1 = encoder(e1, ws1_ref, vs1_ref, l, sc1_ref if l == N - 1 else None)
    for l in range(N):
        e2 = encoder(e2, ws2_ref, vs2_ref, l, sc2_ref if l == N - 1 else None)

    # ---- fused gate + output-linear head (no flatten / no concat needed) ----
    # wh*_ref are the gate|output weights pre-reshaped to (K, S, D) so that
    # a[k] = sum_{s,d} e[s,d] * wh[k,s,d]  ==  e_flat @ W[:, k]
    def head_partial(e, wh_ref):
        prod = e[None, :, :] * wh_ref[...]                                  # (K, S, D)
        return jnp.sum(jnp.sum(prod, axis=2), axis=1, keepdims=True)        # (K, 1)

    bh = bh_ref[...]                                                        # (K, 1)
    a1 = head_partial(e1, wh1_ref)
    a2 = head_partial(e2, wh2_ref)
    logits = a1[0:2] + a2[0:2] + bh[0:2]                                    # (2, 1)
    m = jnp.max(logits, axis=0, keepdims=True)
    eg = jnp.exp(logits - m)
    gate = eg / jnp.sum(eg, axis=0, keepdims=True)                          # exact softmax
    gate_ref[0] = gate                                                      # (2, 1)
    out_ref[0] = gate[0:1] * a1[2:] + gate[1:2] * a2[2:] + bh[2:]           # (d_out, 1)
    # gated encoding: rows 0:T = e1*gate0, rows T:T+C = e2*gate1; row-major
    # flatten of (T+C, D) == torch.cat([e1_flat*g0, e2_flat*g1], -1)
    enc_ref[0, 0:T, :] = e1 * gate[0:1]
    enc_ref[0, T:T + C, :] = e2 * gate[1:2]


# ----------------------------------------------------------------------------
# Wrapper
# ----------------------------------------------------------------------------
def _const_spec(shape):
    n = len(shape)
    return pl.BlockSpec(tuple(int(s) for s in shape), lambda b: (0,) * n)


def _batched_spec(shape):
    n = len(shape)
    block = (1,) + tuple(int(s) for s in shape[1:])
    return pl.BlockSpec(block, lambda b: (b,) + (0,) * (n - 1))


def transformer_forward(packed, x, cfg):
    B, T, C = x.shape
    D, H = cfg["d_model"], cfg["d_hidden"]
    q, v, h, N, d_out = cfg["q"], cfg["v"], cfg["h"], cfg["N"], cfg["d_output"]

    xt = jnp.swapaxes(x, 1, 2)                  # hoist transpose out of the kernel

    inputs = (x, xt, packed["wemb"], packed["bemb"],
              packed["ws1"], packed["vs1"], packed["ws2"], packed["vs2"],
              packed["wh1"], packed["wh2"], packed["bh"])
    in_specs = [_batched_spec(x.shape), _batched_spec(xt.shape)] + \
               [_const_spec(a.shape) for a in inputs[2:]]

    out_shapes = (
        jax.ShapeDtypeStruct((B, d_out, 1), jnp.float32),   # output (as column)
        jax.ShapeDtypeStruct((B, 2, 1), jnp.float32),       # gate (as column)
        jax.ShapeDtypeStruct((B, T + C, D), jnp.float32),   # gated encoding rows
        jax.ShapeDtypeStruct((B, T, D), jnp.float32),       # input_to_gather
        jax.ShapeDtypeStruct((B, C, D), jnp.float32),       # channel_to_gather
        jax.ShapeDtypeStruct((B, h, T, T), jnp.float32),    # last-layer scores (step-wise)
        jax.ShapeDtypeStruct((B, h, C, C), jnp.float32),    # last-layer scores (channel-wise)
    )
    out_specs = tuple(_batched_spec(s.shape) for s in out_shapes)

    kernel = partial(_fused_forward_kernel, T=T, C=C, D=D, H=H,
                     q=q, v=v, h=h, N=N, d_out=d_out)
    (out3, gate3, enc, emb1, emb2, sc1, sc2) = pl.pallas_call(
        kernel,
        out_shape=out_shapes,
        grid_spec=pltpu.PrefetchScalarGridSpec(
            num_scalar_prefetch=0,
            grid=(B,),
            in_specs=in_specs,
            out_specs=out_specs),
        compiler_params=pltpu.CompilerParams(dimension_semantics=("parallel",)),
    )(*inputs)

    output = out3.reshape(B, d_out)
    gate = gate3.reshape(B, 2)
    encoding = enc.reshape(B, (T + C) * D)
    # (B, h, S, S) -> (h*B, S, S): identical ordering to
    # torch.cat(torch.chunk(score, h, dim=-1), dim=0) used by the PyTorch module.
    score_input = jnp.transpose(sc1, (1, 0, 2, 3)).reshape(h * B, T, T)
    score_channel = jnp.transpose(sc2, (1, 0, 2, 3)).reshape(h * B, C, C)
    return (output, encoding, score_input, score_channel, emb1, emb2, gate)


# ----------------------------------------------------------------------------
# Parameter init (PyTorch nn.Linear default scheme) and one-time packing
# ----------------------------------------------------------------------------
def init_linear(key, d_in, d_out):
    kw, kb = jax.random.split(key)
    bound = 1.0 / math.sqrt(d_in)
    w = jax.random.uniform(kw, (d_in, d_out), jnp.float32, -bound, bound)
    b = jax.random.uniform(kb, (1, d_out), jnp.float32, -bound, bound)
    return w, b


def init_params(key, cfg):
    D, T, C = cfg["d_model"], cfg["d_input"], cfg["d_channel"]
    H, q, v, h, N = cfg["d_hidden"], cfg["q"], cfg["v"], cfg["h"], cfg["N"]
    keys = jax.random.split(key, 4 + 2 * N)

    def enc_params(k):
        ks = jax.random.split(k, 6)
        wq, bq = init_linear(ks[0], D, q * h)
        wk, bk = init_linear(ks[1], D, q * h)
        wv, bv = init_linear(ks[2], D, v * h)
        wo, bo = init_linear(ks[3], v * h, D)
        w1, b1 = init_linear(ks[4], D, H)
        w2, b2 = init_linear(ks[5], H, D)
        return dict(wq=wq, bq=bq, wk=wk, bk=bk, wv=wv, bv=bv, wo=wo, bo=bo,
                    w1=w1, b1=b1, w2=w2, b2=b2,
                    g1=jnp.ones((1, D), jnp.float32), be1=jnp.zeros((1, D), jnp.float32),
                    g2=jnp.ones((1, D), jnp.float32), be2=jnp.zeros((1, D), jnp.float32))

    F = D * T + D * C
    return {
        "embedding_channel": init_linear(keys[0], C, D),
        "embedding_input": init_linear(keys[1], T, D),
        "gate": init_linear(keys[2], F, 2),
        "output_linear": init_linear(keys[3], F, cfg["d_output"]),
        "encoder_list_1": [enc_params(keys[4 + i]) for i in range(N)],
        "encoder_list_2": [enc_params(keys[4 + N + i]) for i in range(N)],
    }


def pack_params(params, cfg):
    """One-time (outside jit) packing of the PyTorch-style params into VMEM slabs."""
    T, C, D, H = cfg["d_input"], cfg["d_channel"], cfg["d_model"], cfg["d_hidden"]
    q, v, h, d_out = cfg["q"], cfg["v"], cfg["h"], cfg["d_output"]
    hq, hv = h * q, h * v
    CQKV = 2 * hq + hv
    PQ, PD, PH = _round_up(CQKV, 128), _round_up(D, 128), _round_up(H, 128)
    R = max(D, hv, H)
    CW = PQ + PD + PH + PD
    VW = max(PQ, PD, PH)

    def pack_tower(layers):
        Ws, Vs = [], []
        for p in layers:
            W = jnp.zeros((R, CW), jnp.float32)
            W = W.at[0:D, 0:CQKV].set(jnp.concatenate([p["wq"], p["wk"], p["wv"]], axis=1))
            W = W.at[0:hv, PQ:PQ + D].set(p["wo"])
            W = W.at[0:D, PQ + PD:PQ + PD + H].set(p["w1"])
            W = W.at[0:H, PQ + PD + PH:PQ + PD + PH + D].set(p["w2"])
            Vv = jnp.zeros((8, VW), jnp.float32)
            Vv = Vv.at[0, 0:CQKV].set(jnp.concatenate([p["bq"], p["bk"], p["bv"]], axis=1)[0])
            Vv = Vv.at[1, 0:D].set(p["bo"][0])
            Vv = Vv.at[2, 0:H].set(p["b1"][0])
            Vv = Vv.at[3, 0:D].set(p["b2"][0])
            Vv = Vv.at[4, 0:D].set(p["g1"][0])
            Vv = Vv.at[5, 0:D].set(p["be1"][0])
            Vv = Vv.at[6, 0:D].set(p["g2"][0])
            Vv = Vv.at[7, 0:D].set(p["be2"][0])
            Ws.append(W)
            Vs.append(Vv)
        return jnp.stack(Ws), jnp.stack(Vs)

    ws1, vs1 = pack_tower(params["encoder_list_1"])
    ws2, vs2 = pack_tower(params["encoder_list_2"])

    wec, bec = params["embedding_channel"]
    wei, bei = params["embedding_input"]
    wemb = jnp.concatenate([wec, wei], axis=0)          # (C+T, D)
    bemb = jnp.concatenate([bec, bei], axis=0)          # (2, D)

    K = 2 + d_out
    wg, bg = params["gate"]                             # (F, 2), (1, 2)
    wo_, bo_ = params["output_linear"]                  # (F, d_out), (1, d_out)
    wh = jnp.concatenate([wg, wo_], axis=1)             # (F, K)
    F1 = T * D
    wh1 = jnp.transpose(wh[0:F1].reshape(T, D, K), (2, 0, 1))   # (K, T, D)
    wh2 = jnp.transpose(wh[F1:].reshape(C, D, K), (2, 0, 1))    # (K, C, D)
    bh = jnp.concatenate([bg, bo_], axis=1).reshape(K, 1)       # (K, 1)

    return dict(wemb=wemb, bemb=bemb, ws1=ws1, vs1=vs1, ws2=ws2, vs2=vs2,
                wh1=wh1, wh2=wh2, bh=bh)


# ----------------------------------------------------------------------------
if __name__ == "__main__":
    cfg = dict(d_model=32, d_input=8, d_channel=4, d_output=4,
               d_hidden=32, q=8, v=8, h=4, N=2)

    key = jax.random.PRNGKey(0)
    kx, kp = jax.random.split(key)
    x = jax.random.normal(kx, (2, cfg["d_input"], cfg["d_channel"]), jnp.float32)
    params = init_params(kp, cfg)
    packed = pack_params(params, cfg)       # one-time packing, outside the jitted hot path

    fwd = jax.jit(partial(transformer_forward, cfg=cfg))
    outs = fwd(packed, x)
    jax.block_until_ready(outs)

    (output, encoding, score_input, score_channel,
     input_to_gather, channel_to_gather, gate) = outs
    B = x.shape[0]
    assert output.shape == (B, cfg["d_output"])
    assert encoding.shape == (B, cfg["d_model"] * (cfg["d_input"] + cfg["d_channel"]))
    assert score_input.shape == (cfg["h"] * B, cfg["d_input"], cfg["d_input"])
    assert score_channel.shape == (cfg["h"] * B, cfg["d_channel"], cfg["d_channel"])
    assert input_to_gather.shape == (B, cfg["d_input"], cfg["d_model"])
    assert channel_to_gather.shape == (B, cfg["d_channel"], cfg["d_model"])
    assert gate.shape == (B, 2)
    print("KERNEL_OK")
</pallas_src>

<mosaic_0001>
module attributes {stable_mosaic.version = 11 : i64} {
  func.func @_fused_forward_kernel(%arg0: i32, %arg1: memref<1x8x4xf32, #tpu.memory_space<vmem>>, %arg2: memref<1x4x8xf32, #tpu.memory_space<vmem>>, %arg3: memref<12x32xf32, #tpu.memory_space<vmem>>, %arg4: memref<2x32xf32, #tpu.memory_space<vmem>>, %arg5: memref<2x32x512xf32, #tpu.memory_space<vmem>>, %arg6: memref<2x8x128xf32, #tpu.memory_space<vmem>>, %arg7: memref<2x32x512xf32, #tpu.memory_space<vmem>>, %arg8: memref<2x8x128xf32, #tpu.memory_space<vmem>>, %arg9: memref<6x8x32xf32, #tpu.memory_space<vmem>>, %arg10: memref<6x4x32xf32, #tpu.memory_space<vmem>>, %arg11: memref<6x1xf32, #tpu.memory_space<vmem>>, %arg12: memref<1x4x1xf32, #tpu.memory_space<vmem>>, %arg13: memref<1x2x1xf32, #tpu.memory_space<vmem>>, %arg14: memref<1x12x32xf32, #tpu.memory_space<vmem>>, %arg15: memref<1x8x32xf32, #tpu.memory_space<vmem>>, %arg16: memref<1x4x32xf32, #tpu.memory_space<vmem>>, %arg17: memref<1x4x8x8xf32, #tpu.memory_space<vmem>>, %arg18: memref<1x4x4x4xf32, #tpu.memory_space<vmem>>) attributes {dimension_semantics = [#tpu.dimension_semantics<parallel>], iteration_bounds = array<i64: 2>, scalar_prefetch = 0 : i64, scratch_operands = 0 : i64, tpu.core_type = #tpu.core_type<tc>, window_params = [{transform_indices = @transform_0, window_bounds = array<i64: 1, 8, 4>}, {transform_indices = @transform_1, window_bounds = array<i64: 1, 4, 8>}, {pipeline_mode = #tpu.pipeline_mode<synchronous>, transform_indices = @transform_2, window_bounds = array<i64: 12, 32>}, {pipeline_mode = #tpu.pipeline_mode<synchronous>, transform_indices = @transform_3, window_bounds = array<i64: 2, 32>}, {pipeline_mode = #tpu.pipeline_mode<synchronous>, transform_indices = @transform_4, window_bounds = array<i64: 2, 32, 512>}, {pipeline_mode = #tpu.pipeline_mode<synchronous>, transform_indices = @transform_5, window_bounds = array<i64: 2, 8, 128>}, {pipeline_mode = #tpu.pipeline_mode<synchronous>, transform_indices = @transform_6, window_bounds = array<i64: 2, 32, 512>}, {pipeline_mode = #tpu.pipeline_mode<synchronous>, transform_indices = @transform_7, window_bounds = array<i64: 2, 8, 128>}, {pipeline_mode = #tpu.pipeline_mode<synchronous>, transform_indices = @transform_8, window_bounds = array<i64: 6, 8, 32>}, {pipeline_mode = #tpu.pipeline_mode<synchronous>, transform_indices = @transform_9, window_bounds = array<i64: 6, 4, 32>}, {pipeline_mode = #tpu.pipeline_mode<synchronous>, transform_indices = @transform_10, window_bounds = array<i64: 6, 1>}, {transform_indices = @transform_11, window_bounds = array<i64: 1, 4, 1>}, {transform_indices = @transform_12, window_bounds = array<i64: 1, 2, 1>}, {transform_indices = @transform_13, window_bounds = array<i64: 1, 12, 32>}, {transform_indices = @transform_14, window_bounds = array<i64: 1, 8, 32>}, {transform_indices = @transform_15, window_bounds = array<i64: 1, 4, 32>}, {transform_indices = @transform_16, window_bounds = array<i64: 1, 4, 8, 8>}, {transform_indices = @transform_17, window_bounds = array<i64: 1, 4, 4, 4>}]} {
    %c0 = arith.constant 0 : index
    %c0_0 = arith.constant 0 : index
    %c0_1 = arith.constant 0 : index
    %0 = vector.load %arg1[%c0, %c0_0, %c0_1] : memref<1x8x4xf32, #tpu.memory_space<vmem>>, vector<1x8x4xf32>
    %1 = vector.shape_cast %0 : vector<1x8x4xf32> to vector<8x4xf32>
    %c0_2 = arith.constant 0 : index
    %c0_3 = arith.constant 0 : index
    %c0_4 = arith.constant 0 : index
    %2 = vector.load %arg2[%c0_2, %c0_3, %c0_4] : memref<1x4x8xf32, #tpu.memory_space<vmem>>, vector<1x4x8xf32>
    %3 = vector.shape_cast %2 : vector<1x4x8xf32> to vector<4x8xf32>
    %c0_5 = arith.constant 0 : index
    %c0_6 = arith.constant 0 : index
    %4 = vector.load %arg3[%c0_5, %c0_6] : memref<12x32xf32, #tpu.memory_space<vmem>>, vector<4x32xf32>
    %cst = arith.constant dense<0.000000e+00> : vector<8x32xf32>
    %5 = tpu.matmul %1, %4, %cst {dimension_numbers = #tpu.dot_dimension_numbers<[1], [0], [0], [1], [0, 0, 1, 1], [], []>} : vector<8x4xf32>, vector<4x32xf32>, vector<8x32xf32> -> vector<8x32xf32>
    %c0_7 = arith.constant 0 : index
    %c0_8 = arith.constant 0 : index
    %6 = vector.load %arg4[%c0_7, %c0_8] : memref<2x32xf32, #tpu.memory_space<vmem>>, vector<1x32xf32>
    %7 = vector.broadcast %6 : vector<1x32xf32> to vector<8x32xf32>
    %8 = arith.addf %5, %7 : vector<8x32xf32>
    %c0_9 = arith.constant 0 : index
    %c0_10 = arith.constant 0 : index
    %c0_11 = arith.constant 0 : index
    %9 = vector.load %arg15[%c0_9, %c0_10, %c0_11] : memref<1x8x32xf32, #tpu.memory_space<vmem>>, vector<1x8x32xf32>
    %10 = vector.shape_cast %9 : vector<1x8x32xf32> to vector<8x32xf32>
    %11 = vector.shape_cast %8 : vector<8x32xf32> to vector<1x8x32xf32>
    tpu.vector_store %arg15[%c0_9, %c0_10, %c0_11], %11 {strides = array<i32>} : memref<1x8x32xf32, #tpu.memory_space<vmem>>, vector<1x8x32xf32>,
    %c4 = arith.constant 4 : index
    %c0_12 = arith.constant 0 : index
    %12 = vector.load %arg3[%c4, %c0_12] : memref<12x32xf32, #tpu.memory_space<vmem>>, vector<8x32xf32>
    %cst_13 = arith.constant dense<0.000000e+00> : vector<4x32xf32>
    %13 = tpu.matmul %3, %12, %cst_13 {dimension_numbers = #tpu.dot_dimension_numbers<[1], [0], [0], [1], [0, 0, 1, 1], [], []>} : vector<4x8xf32>, vector<8x32xf32>, vector<4x32xf32> -> vector<4x32xf32>
    %c1 = arith.constant 1 : index
    %c0_14 = arith.constant 0 : index
    %14 = vector.load %arg4[%c1, %c0_14] : memref<2x32xf32, #tpu.memory_space<vmem>>, vector<1x32xf32>
    %15 = vector.broadcast %14 : vector<1x32xf32> to vector<4x32xf32>
    %16 = arith.addf %13, %15 : vector<4x32xf32>
    %c0_15 = arith.constant 0 : index
    %c0_16 = arith.constant 0 : index
    %c0_17 = arith.constant 0 : index
    %17 = vector.load %arg16[%c0_15, %c0_16, %c0_17] : memref<1x4x32xf32, #tpu.memory_space<vmem>>, vector<1x4x32xf32>
    %18 = vector.shape_cast %17 : vector<1x4x32xf32> to vector<4x32xf32>
    %19 = vector.shape_cast %16 : vector<4x32xf32> to vector<1x4x32xf32>
    tpu.vector_store %arg16[%c0_15, %c0_16, %c0_17], %19 {strides = array<i32>} : memref<1x4x32xf32, #tpu.memory_space<vmem>>, vector<1x4x32xf32>,
    %c0_18 = arith.constant 0 : index
    %c0_19 = arith.constant 0 : index
    %c0_20 = arith.constant 0 : index
    %20 = vector.load %arg5[%c0_18, %c0_19, %c0_20] : memref<2x32x512xf32, #tpu.memory_space<vmem>>, vector<1x32x96xf32>
    %21 = vector.shape_cast %20 : vector<1x32x96xf32> to vector<32x96xf32>
    %c0_21 = arith.constant 0 : index
    %c0_22 = arith.constant 0 : index
    %c128 = arith.constant 128 : index
    %22 = vector.load %arg5[%c0_21, %c0_22, %c128] : memref<2x32x512xf32, #tpu.memory_space<vmem>>, vector<1x32x32xf32>
    %23 = vector.shape_cast %22 : vector<1x32x32xf32> to vector<32x32xf32>
    %c0_23 = arith.constant 0 : index
    %c0_24 = arith.constant 0 : index
    %c256 = arith.constant 256 : index
    %24 = vector.load %arg5[%c0_23, %c0_24, %c256] : memref<2x32x512xf32, #tpu.memory_space<vmem>>, vector<1x32x32xf32>
    %25 = vector.shape_cast %24 : vector<1x32x32xf32> to vector<32x32xf32>
    %c0_25 = arith.constant 0 : index
    %c0_26 = arith.constant 0 : index
    %c384 = arith.constant 384 : index
    %26 = vector.load %arg5[%c0_25, %c0_26, %c384] : memref<2x32x512xf32, #tpu.memory_space<vmem>>, vector<1x32x32xf32>
    %27 = vector.shape_cast %26 : vector<1x32x32xf32> to vector<32x32xf32>
    %c0_27 = arith.constant 0 : index
    %c0_28 = arith.constant 0 : index
    %c0_29 = arith.constant 0 : index
    %28 = vector.load %arg6[%c0_27, %c0_28, %c0_29] : memref<2x8x128xf32, #tpu.memory_space<vmem>>, vector<1x1x96xf32>
    %29 = vector.shape_cast %28 : vector<1x1x96xf32> to vector<1x96xf32>
    %c0_30 = arith.constant 0 : index
    %c1_31 = arith.constant 1 : index
    %c0_32 = arith.constant 0 : index
    %30 = vector.load %arg6[%c0_30, %c1_31, %c0_32] : memref<2x8x128xf32, #tpu.memory_space<vmem>>, vector<1x1x32xf32>
    %31 = vector.shape_cast %30 : vector<1x1x32xf32> to vector<1x32xf32>
    %c0_33 = arith.constant 0 : index
    %c2 = arith.constant 2 : index
    %c0_34 = arith.constant 0 : index
    %32 = vector.load %arg6[%c0_33, %c2, %c0_34] : memref<2x8x128xf32, #tpu.memory_space<vmem>>, vector<1x1x32xf32>
    %33 = vector.shape_cast %32 : vector<1x1x32xf32> to vector<1x32xf32>
    %c0_35 = arith.constant 0 : index
    %c3 = arith.constant 3 : index
    %c0_36 = arith.constant 0 : index
    %34 = vector.load %arg6[%c0_35, %c3, %c0_36] : memref<2x8x128xf32, #tpu.memory_space<vmem>>, vector<1x1x32xf32>
    %35 = vector.shape_cast %34 : vector<1x1x32xf32> to vector<1x32xf32>
    %c0_37 = arith.constant 0 : index
    %c4_38 = arith.constant 4 : index
    %c0_39 = arith.constant 0 : index
    %36 = vector.load %arg6[%c0_37, %c4_38, %c0_39] : memref<2x8x128xf32, #tpu.memory_space<vmem>>, vector<1x1x32xf32>
    %37 = vector.shape_cast %36 : vector<1x1x32xf32> to vector<1x32xf32>
    %c0_40 = arith.constant 0 : index
    %c5 = arith.constant 5 : index
    %c0_41 = arith.constant 0 : index
    %38 = vector.load %arg6[%c0_40, %c5, %c0_41] : memref<2x8x128xf32, #tpu.memory_space<vmem>>, vector<1x1x32xf32>
    %39 = vector.shape_cast %38 : vector<1x1x32xf32> to vector<1x32xf32>
    %c0_42 = arith.constant 0 : index
    %c6 = arith.constant 6 : index
    %c0_43 = arith.constant 0 : index
    %40 = vector.load %arg6[%c0_42, %c6, %c0_43] : memref<2x8x128xf32, #tpu.memory_space<vmem>>, vector<1x1x32xf32>
    %41 = vector.shape_cast %40 : vector<1x1x32xf32> to vector<1x32xf32>
    %c0_44 = arith.constant 0 : index
    %c7 = arith.constant 7 : index
    %c0_45 = arith.constant 0 : index
    %42 = vector.load %arg6[%c0_44, %c7, %c0_45] : memref<2x8x128xf32, #tpu.memory_space<vmem>>, vector<1x1x32xf32>
    %43 = vector.shape_cast %42 : vector<1x1x32xf32> to vector<1x32xf32>
    %cst_46 = arith.constant dense<0.000000e+00> : vector<8x96xf32>
    %44 = tpu.matmul %8, %21, %cst_46 {dimension_numbers = #tpu.dot_dimension_numbers<[1], [0], [0], [1], [0, 0, 1, 1], [], []>} : vector<8x32xf32>, vector<32x96xf32>, vector<8x96xf32> -> vector<8x96xf32>
    %45 = vector.broadcast %29 : vector<1x96xf32> to vector<8x96xf32>
    %46 = arith.addf %44, %45 : vector<8x96xf32>
    %47 = vector.extract_strided_slice %46 {offsets = [0, 0], sizes = [8, 32], strides = [1, 1]} : vector<8x96xf32> to vector<8x32xf32>
    %48 = vector.extract_strided_slice %46 {offsets = [0, 32], sizes = [8, 32], strides = [1, 1]} : vector<8x96xf32> to vector<8x32xf32>
    %49 = vector.extract_strided_slice %46 {offsets = [0, 64], sizes = [8, 32], strides = [1, 1]} : vector<8x96xf32> to vector<8x32xf32>
    %50 = vector.extract_strided_slice %47 {offsets = [0, 0], sizes = [8, 8], strides = [1, 1]} : vector<8x32xf32> to vector<8x8xf32>
    %51 = vector.extract_strided_slice %48 {offsets = [0, 0], sizes = [8, 8], strides = [1, 1]} : vector<8x32xf32> to vector<8x8xf32>
    %52 = vector.extract_strided_slice %49 {offsets = [0, 0], sizes = [8, 8], strides = [1, 1]} : vector<8x32xf32> to vector<8x8xf32>
    %cst_47 = arith.constant dense<0.000000e+00> : vector<8x8xf32>
    %53 = tpu.matmul %50, %51, %cst_47 {dimension_numbers = #tpu.dot_dimension_numbers<[1], [1], [0], [0], [0, 0, 1, 0], [], []>} : vector<8x8xf32>, vector<8x8xf32>, vector<8x8xf32> -> vector<8x8xf32>
    %cst_48 = arith.constant 0.353553385 : f32
    %54 = vector.broadcast %cst_48 : f32 to vector<8x8xf32>
    %55 = arith.mulf %53, %54 : vector<8x8xf32>
    %cst_49 = arith.constant dense<0xFF800000> : vector<8xf32>
    %56 = vector.multi_reduction <maximumf>, %55, %cst_49 [1] : vector<8x8xf32> to vector<8xf32>
    %57 = vector.shape_cast %56 : vector<8xf32> to vector<8x1xf32>
    %58 = vector.broadcast %57 : vector<8x1xf32> to vector<8x8xf32>
    %59 = arith.subf %55, %58 : vector<8x8xf32>
    %60 = math.exp %59 : vector<8x8xf32>
    %cst_50 = arith.constant dense<0.000000e+00> : vector<8xf32>
    %61 = vector.multi_reduction <add>, %60, %cst_50 [1] : vector<8x8xf32> to vector<8xf32>
    %62 = vector.shape_cast %61 : vector<8xf32> to vector<8x1xf32>
    %63 = vector.broadcast %62 : vector<8x1xf32> to vector<8x8xf32>
    %64 = arith.divf %60, %63 : vector<8x8xf32>
    %cst_51 = arith.constant dense<0.000000e+00> : vector<8x8xf32>
    %65 = tpu.matmul %64, %52, %cst_51 {dimension_numbers = #tpu.dot_dimension_numbers<[1], [0], [0], [1], [0, 0, 1, 1], [], []>} : vector<8x8xf32>, vector<8x8xf32>, vector<8x8xf32> -> vector<8x8xf32>
    %66 = vector.extract_strided_slice %47 {offsets = [0, 8], sizes = [8, 8], strides = [1, 1]} : vector<8x32xf32> to vector<8x8xf32>
    %67 = vector.extract_strided_slice %48 {offsets = [0, 8], sizes = [8, 8], strides = [1, 1]} : vector<8x32xf32> to vector<8x8xf32>
    %68 = vector.extract_strided_slice %49 {offsets = [0, 8], sizes = [8, 8], strides = [1, 1]} : vector<8x32xf32> to vector<8x8xf32>
    %cst_52 = arith.constant dense<0.000000e+00> : vector<8x8xf32>
    %69 = tpu.matmul %66, %67, %cst_52 {dimension_numbers = #tpu.dot_dimension_numbers<[1], [1], [0], [0], [0, 0, 1, 0], [], []>} : vector<8x8xf32>, vector<8x8xf32>, vector<8x8xf32> -> vector<8x8xf32>
    %cst_53 = arith.constant 0.353553385 : f32
    %70 = vector.broadcast %cst_53 : f32 to vector<8x8xf32>
    %71 = arith.mulf %69, %70 : vector<8x8xf32>
    %cst_54 = arith.constant dense<0xFF800000> : vector<8xf32>
    %72 = vector.multi_reduction <maximumf>, %71, %cst_54 [1] : vector<8x8xf32> to vector<8xf32>
    %73 = vector.shape_cast %72 : vector<8xf32> to vector<8x1xf32>
    %74 = vector.broadcast %73 : vector<8x1xf32> to vector<8x8xf32>
    %75 = arith.subf %71, %74 : vector<8x8xf32>
    %76 = math.exp %75 : vector<8x8xf32>
    %cst_55 = arith.constant dense<0.000000e+00> : vector<8xf32>
    %77 = vector.multi_reduction <add>, %76, %cst_55 [1] : vector<8x8xf32> to vector<8xf32>
    %78 = vector.shape_cast %77 : vector<8xf32> to vector<8x1xf32>
    %79 = vector.broadcast %78 : vector<8x1xf32> to vector<8x8xf32>
    %80 = arith.divf %76, %79 : vector<8x8xf32>
    %cst_56 = arith.constant dense<0.000000e+00> : vector<8x8xf32>
    %81 = tpu.matmul %80, %68, %cst_56 {dimension_numbers = #tpu.dot_dimension_numbers<[1], [0], [0], [1], [0, 0, 1, 1], [], []>} : vector<8x8xf32>, vector<8x8xf32>, vector<8x8xf32> -> vector<8x8xf32>
    %82 = vector.extract_strided_slice %47 {offsets = [0, 16], sizes = [8, 8], strides = [1, 1]} : vector<8x32xf32> to vector<8x8xf32>
    %83 = vector.extract_strided_slice %48 {offsets = [0, 16], sizes = [8, 8], strides = [1, 1]} : vector<8x32xf32> to vector<8x8xf32>
    %84 = vector.extract_strided_slice %49 {offsets = [0, 16], sizes = [8, 8], strides = [1, 1]} : vector<8x32xf32> to vector<8x8xf32>
    %cst_57 = arith.constant dense<0.000000e+00> : vector<8x8xf32>
    %85 = tpu.matmul %82, %83, %cst_57 {dimension_numbers = #tpu.dot_dimension_numbers<[1], [1], [0], [0], [0, 0, 1, 0], [], []>} : vector<8x8xf32>, vector<8x8xf32>, vector<8x8xf32> -> vector<8x8xf32>
    %cst_58 = arith.constant 0.353553385 : f32
    %86 = vector.broadcast %cst_58 : f32 to vector<8x8xf32>
    %87 = arith.mulf %85, %86 : vector<8x8xf32>
    %cst_59 = arith.constant dense<0xFF800000> : vector<8xf32>
    %88 = vector.multi_reduction <maximumf>, %87, %cst_59 [1] : vector<8x8xf32> to vector<8xf32>
    %89 = vector.shape_cast %88 : vector<8xf32> to vector<8x1xf32>
    %90 = vector.broadcast %89 : vector<8x1xf32> to vector<8x8xf32>
    %91 = arith.subf %87, %90 : vector<8x8xf32>
    %92 = math.exp %91 : vector<8x8xf32>
    %cst_60 = arith.constant dense<0.000000e+00> : vector<8xf32>
    %93 = vector.multi_reduction <add>, %92, %cst_60 [1] : vector<8x8xf32> to vector<8xf32>
    %94 = vector.shape_cast %93 : vector<8xf32> to vector<8x1xf32>
    %95 = vector.broadcast %94 : vector<8x1xf32> to vector<8x8xf32>
    %96 = arith.divf %92, %95 : vector<8x8xf32>
    %cst_61 = arith.constant dense<0.000000e+00> : vector<8x8xf32>
    %97 = tpu.matmul %96, %84, %cst_61 {dimension_numbers = #tpu.dot_dimension_numbers<[1], [0], [0], [1], [0, 0, 1, 1], [], []>} : vector<8x8xf32>, vector<8x8xf32>, vector<8x8xf32> -> vector<8x8xf32>
    %98 = vector.extract_strided_slice %47 {offsets = [0, 24], sizes = [8, 8], strides = [1, 1]} : vector<8x32xf32> to vector<8x8xf32>
    %99 = vector.extract_strided_slice %48 {offsets = [0, 24], sizes = [8, 8], strides = [1, 1]} : vector<8x32xf32> to vector<8x8xf32>
    %100 = vector.extract_strided_slice %49 {offsets = [0, 24], sizes = [8, 8], strides = [1, 1]} : vector<8x32xf32> to vector<8x8xf32>
    %cst_62 = arith.constant dense<0.000000e+00> : vector<8x8xf32>
    %101 = tpu.matmul %98, %99, %cst_62 {dimension_numbers = #tpu.dot_dimension_numbers<[1], [1], [0], [0], [0, 0, 1, 0], [], []>} : vector<8x8xf32>, vector<8x8xf32>, vector<8x8xf32> -> vector<8x8xf32>
    %cst_63 = arith.constant 0.353553385 : f32
    %102 = vector.broadcast %cst_63 : f32 to vector<8x8xf32>
    %103 = arith.mulf %101, %102 : vector<8x8xf32>
    %cst_64 = arith.constant dense<0xFF800000> : vector<8xf32>
    %104 = vector.multi_reduction <maximumf>, %103, %cst_64 [1] : vector<8x8xf32> to vector<8xf32>
    %105 = vector.shape_cast %104 : vector<8xf32> to vector<8x1xf32>
    %106 = vector.broadcast %105 : vector<8x1xf32> to vector<8x8xf32>
    %107 = arith.subf %103, %106 : vector<8x8xf32>
    %108 = math.exp %107 : vector<8x8xf32>
    %cst_65 = arith.constant dense<0.000000e+00> : vector<8xf32>
    %109 = vector.multi_reduction <add>, %108, %cst_65 [1] : vector<8x8xf32> to vector<8xf32>
    %110 = vector.shape_cast %109 : vector<8xf32> to vector<8x1xf32>
    %111 = vector.broadcast %110 : vector<8x1xf32> to vector<8x8xf32>
    %112 = arith.divf %108, %111 : vector<8x8xf32>
    %cst_66 = arith.constant dense<0.000000e+00> : vector<8x8xf32>
    %113 = tpu.matmul %112, %100, %cst_66 {dimension_numbers = #tpu.dot_dimension_numbers<[1], [0], [0], [1], [0, 0, 1, 1], [], []>} : vector<8x8xf32>, vector<8x8xf32>, vector<8x8xf32> -> vector<8x8xf32>
    %114 = tpu.concatenate %65, %81, %97, %113 in 1 : vector<8x8xf32>, vector<8x8xf32>, vector<8x8xf32>, vector<8x8xf32> -> vector<8x32xf32>
    %cst_67 = arith.constant dense<0.000000e+00> : vector<8x32xf32>
    %115 = tpu.matmul %114, %23, %cst_67 {dimension_numbers = #tpu.dot_dimension_numbers<[1], [0], [0], [1], [0, 0, 1, 1], [], []>} : vector<8x32xf32>, vector<32x32xf32>, vector<8x32xf32> -> vector<8x32xf32>
    %116 = vector.broadcast %31 : vector<1x32xf32> to vector<8x32xf32>
    %117 = arith.addf %115, %116 : vector<8x32xf32>
    %118 = arith.addf %117, %8 : vector<8x32xf32>
    %cst_68 = arith.constant dense<0.000000e+00> : vector<8xf32>
    %119 = vector.multi_reduction <add>, %118, %cst_68 [1] : vector<8x32xf32> to vector<8xf32>
    %120 = vector.shape_cast %119 : vector<8xf32> to vector<8x1xf32>
    %cst_69 = arith.constant 3.200000e+01 : f32
    %121 = vector.broadcast %cst_69 : f32 to vector<8x1xf32>
    %122 = arith.divf %120, %121 : vector<8x1xf32>
    %123 = vector.broadcast %122 : vector<8x1xf32> to vector<8x32xf32>
    %124 = arith.subf %118, %123 : vector<8x32xf32>
    %125 = arith.mulf %124, %124 : vector<8x32xf32>
    %cst_70 = arith.constant dense<0.000000e+00> : vector<8xf32>
    %126 = vector.multi_reduction <add>, %125, %cst_70 [1] : vector<8x32xf32> to vector<8xf32>
    %127 = vector.shape_cast %126 : vector<8xf32> to vector<8x1xf32>
    %cst_71 = arith.constant 3.200000e+01 : f32
    %128 = vector.broadcast %cst_71 : f32 to vector<8x1xf32>
    %129 = arith.divf %127, %128 : vector<8x1xf32>
    %130 = vector.broadcast %122 : vector<8x1xf32> to vector<8x32xf32>
    %131 = arith.subf %118, %130 : vector<8x32xf32>
    %cst_72 = arith.constant 9.99999974E-6 : f32
    %132 = vector.broadcast %cst_72 : f32 to vector<8x1xf32>
    %133 = arith.addf %129, %132 : vector<8x1xf32>
    %134 = math.rsqrt %133 : vector<8x1xf32>
    %135 = vector.broadcast %134 : vector<8x1xf32> to vector<8x32xf32>
    %136 = arith.mulf %131, %135 : vector<8x32xf32>
    %137 = vector.broadcast %37 : vector<1x32xf32> to vector<8x32xf32>
    %138 = arith.mulf %136, %137 : vector<8x32xf32>
    %139 = vector.broadcast %39 : vector<1x32xf32> to vector<8x32xf32>
    %140 = arith.addf %138, %139 : vector<8x32xf32>
    %cst_73 = arith.constant dense<0.000000e+00> : vector<8x32xf32>
    %141 = tpu.matmul %140, %25, %cst_73 {dimension_numbers = #tpu.dot_dimension_numbers<[1], [0], [0], [1], [0, 0, 1, 1], [], []>} : vector<8x32xf32>, vector<32x32xf32>, vector<8x32xf32> -> vector<8x32xf32>
    %142 = vector.broadcast %33 : vector<1x32xf32> to vector<8x32xf32>
    %143 = arith.addf %141, %142 : vector<8x32xf32>
    %cst_74 = arith.constant 0.000000e+00 : f32
    %144 = vector.broadcast %cst_74 : f32 to vector<8x32xf32>
    %145 = arith.maximumf %143, %144 : vector<8x32xf32>
    %cst_75 = arith.constant dense<0.000000e+00> : vector<8x32xf32>
    %146 = tpu.matmul %145, %27, %cst_75 {dimension_numbers = #tpu.dot_dimension_numbers<[1], [0], [0], [1], [0, 0, 1, 1], [], []>} : vector<8x32xf32>, vector<32x32xf32>, vector<8x32xf32> -> vector<8x32xf32>
    %147 = vector.broadcast %35 : vector<1x32xf32> to vector<8x32xf32>
    %148 = arith.addf %146, %147 : vector<8x32xf32>
    %149 = arith.addf %148, %140 : vector<8x32xf32>
    %cst_76 = arith.constant dense<0.000000e+00> : vector<8xf32>
    %150 = vector.multi_reduction <add>, %149, %cst_76 [1] : vector<8x32xf32> to vector<8xf32>
    %151 = vector.shape_cast %150 : vector<8xf32> to vector<8x1xf32>
    %cst_77 = arith.constant 3.200000e+01 : f32
    %152 = vector.broadcast %cst_77 : f32 to vector<8x1xf32>
    %153 = arith.divf %151, %152 : vector<8x1xf32>
    %154 = vector.broadcast %153 : vector<8x1xf32> to vector<8x32xf32>
    %155 = arith.subf %149, %154 : vector<8x32xf32>
    %156 = arith.mulf %155, %155 : vector<8x32xf32>
    %cst_78 = arith.constant dense<0.000000e+00> : vector<8xf32>
    %157 = vector.multi_reduction <add>, %156, %cst_78 [1] : vector<8x32xf32> to vector<8xf32>
    %158 = vector.shape_cast %157 : vector<8xf32> to vector<8x1xf32>
    %cst_79 = arith.constant 3.200000e+01 : f32
    %159 = vector.broadcast %cst_79 : f32 to vector<8x1xf32>
    %160 = arith.divf %158, %159 : vector<8x1xf32>
    %161 = vector.broadcast %153 : vector<8x1xf32> to vector<8x32xf32>
    %162 = arith.subf %149, %161 : vector<8x32xf32>
    %cst_80 = arith.constant 9.99999974E-6 : f32
    %163 = vector.broadcast %cst_80 : f32 to vector<8x1xf32>
    %164 = arith.addf %160, %163 : vector<8x1xf32>
    %165 = math.rsqrt %164 : vector<8x1xf32>
    %166 = vector.broadcast %165 : vector<8x1xf32> to vector<8x32xf32>
    %167 = arith.mulf %162, %166 : vector<8x32xf32>
    %168 = vector.broadcast %41 : vector<1x32xf32> to vector<8x32xf32>
    %169 = arith.mulf %167, %168 : vector<8x32xf32>
    %170 = vector.broadcast %43 : vector<1x32xf32> to vector<8x32xf32>
    %171 = arith.addf %169, %170 : vector<8x32xf32>
    %c1_81 = arith.constant 1 : index
    %c0_82 = arith.constant 0 : index
    %c0_83 = arith.constant 0 : index
    %172 = vector.load %arg5[%c1_81, %c0_82, %c0_83] : memref<2x32x512xf32, #tpu.memory_space<vmem>>, vector<1x32x96xf32>
    %173 = vector.shape_cast %172 : vector<1x32x96xf32> to vector<32x96xf32>
    %c1_84 = arith.constant 1 : index
    %c0_85 = arith.constant 0 : index
    %c128_86 = arith.constant 128 : index
    %174 = vector.load %arg5[%c1_84, %c0_85, %c128_86] : memref<2x32x512xf32, #tpu.memory_space<vmem>>, vector<1x32x32xf32>
    %175 = vector.shape_cast %174 : vector<1x32x32xf32> to vector<32x32xf32>
    %c1_87 = arith.constant 1 : index
    %c0_88 = arith.constant 0 : index
    %c256_89 = arith.constant 256 : index
    %176 = vector.load %arg5[%c1_87, %c0_88, %c256_89] : memref<2x32x512xf32, #tpu.memory_space<vmem>>, vector<1x32x32xf32>
    %177 = vector.shape_cast %176 : vector<1x32x32xf32> to vector<32x32xf32>
    %c1_90 = arith.constant 1 : index
    %c0_91 = arith.constant 0 : index
    %c384_92 = arith.constant 384 : index
    %178 = vector.load %arg5[%c1_90, %c0_91, %c384_92] : memref<2x32x512xf32, #tpu.memory_space<vmem>>, vector<1x32x32xf32>
    %179 = vector.shape_cast %178 : vector<1x32x32xf32> to vector<32x32xf32>
    %c1_93 = arith.constant 1 : index
    %c0_94 = arith.constant 0 : index
    %c0_95 = arith.constant 0 : index
    %180 = vector.load %arg6[%c1_93, %c0_94, %c0_95] : memref<2x8x128xf32, #tpu.memory_space<vmem>>, vector<1x1x96xf32>
    %181 = vector.shape_cast %180 : vector<1x1x96xf32> to vector<1x96xf32>
    %c1_96 = arith.constant 1 : index
    %c1_97 = arith.constant 1 : index
    %c0_98 = arith.constant 0 : index
    %182 = vector.load %arg6[%c1_96, %c1_97, %c0_98] : memref<2x8x128xf32, #tpu.memory_space<vmem>>, vector<1x1x32xf32>
    %183 = vector.shape_cast %182 : vector<1x1x32xf32> to vector<1x32xf32>
    %c1_99 = arith.constant 1 : index
    %c2_100 = arith.constant 2 : index
    %c0_101 = arith.constant 0 : index
    %184 = vector.load %arg6[%c1_99, %c2_100, %c0_101] : memref<2x8x128xf32, #tpu.memory_space<vmem>>, vector<1x1x32xf32>
    %185 = vector.shape_cast %184 : vector<1x1x32xf32> to vector<1x32xf32>
    %c1_102 = arith.constant 1 : index
    %c3_103 = arith.constant 3 : index
    %c0_104 = arith.constant 0 : index
    %186 = vector.load %arg6[%c1_102, %c3_103, %c0_104] : memref<2x8x128xf32, #tpu.memory_space<vmem>>, vector<1x1x32xf32>
    %187 = vector.shape_cast %186 : vector<1x1x32xf32> to vector<1x32xf32>
    %c1_105 = arith.constant 1 : index
    %c4_106 = arith.constant 4 : index
    %c0_107 = arith.constant 0 : index
    %188 = vector.load %arg6[%c1_105, %c4_106, %c0_107] : memref<2x8x128xf32, #tpu.memory_space<vmem>>, vector<1x1x32xf32>
    %189 = vector.shape_cast %188 : vector<1x1x32xf32> to vector<1x32xf32>
    %c1_108 = arith.constant 1 : index
    %c5_109 = arith.constant 5 : index
    %c0_110 = arith.constant 0 : index
    %190 = vector.load %arg6[%c1_108, %c5_109, %c0_110] : memref<2x8x128xf32, #tpu.memory_space<vmem>>, vector<1x1x32xf32>
    %191 = vector.shape_cast %190 : vector<1x1x32xf32> to vector<1x32xf32>
    %c1_111 = arith.constant 1 : index
    %c6_112 = arith.constant 6 : index
    %c0_113 = arith.constant 0 : index
    %192 = vector.load %arg6[%c1_111, %c6_112, %c0_113] : memref<2x8x128xf32, #tpu.memory_space<vmem>>, vector<1x1x32xf32>
    %193 = vector.shape_cast %192 : vector<1x1x32xf32> to vector<1x32xf32>
    %c1_114 = arith.constant 1 : index
    %c7_115 = arith.constant 7 : index
    %c0_116 = arith.constant 0 : index
    %194 = vector.load %arg6[%c1_114, %c7_115, %c0_116] : memref<2x8x128xf32, #tpu.memory_space<vmem>>, vector<1x1x32xf32>
    %195 = vector.shape_cast %194 : vector<1x1x32xf32> to vector<1x32xf32>
    %cst_117 = arith.constant dense<0.000000e+00> : vector<8x96xf32>
    %196 = tpu.matmul %171, %173, %cst_117 {dimension_numbers = #tpu.dot_dimension_numbers<[1], [0], [0], [1], [0, 0, 1, 1], [], []>} : vector<8x32xf32>, vector<32x96xf32>, vector<8x96xf32> -> vector<8x96xf32>
    %197 = vector.broadcast %181 : vector<1x96xf32> to vector<8x96xf32>
    %198 = arith.addf %196, %197 : vector<8x96xf32>
    %199 = vector.extract_strided_slice %198 {offsets = [0, 0], sizes = [8, 32], strides = [1, 1]} : vector<8x96xf32> to vector<8x32xf32>
    %200 = vector.extract_strided_slice %198 {offsets = [0, 32], sizes = [8, 32], strides = [1, 1]} : vector<8x96xf32> to vector<8x32xf32>
    %201 = vector.extract_strided_slice %198 {offsets = [0, 64], sizes = [8, 32], strides = [1, 1]} : vector<8x96xf32> to vector<8x32xf32>
    %202 = vector.extract_strided_slice %199 {offsets = [0, 0], sizes = [8, 8], strides = [1, 1]} : vector<8x32xf32> to vector<8x8xf32>
    %203 = vector.extract_strided_slice %200 {offsets = [0, 0], sizes = [8, 8], strides = [1, 1]} : vector<8x32xf32> to vector<8x8xf32>
    %204 = vector.extract_strided_slice %201 {offsets = [0, 0], sizes = [8, 8], strides = [1, 1]} : vector<8x32xf32> to vector<8x8xf32>
    %cst_118 = arith.constant dense<0.000000e+00> : vector<8x8xf32>
    %205 = tpu.matmul %202, %203, %cst_118 {dimension_numbers = #tpu.dot_dimension_numbers<[1], [1], [0], [0], [0, 0, 1, 0], [], []>} : vector<8x8xf32>, vector<8x8xf32>, vector<8x8xf32> -> vector<8x8xf32>
    %cst_119 = arith.constant 0.353553385 : f32
    %206 = vector.broadcast %cst_119 : f32 to vector<8x8xf32>
    %207 = arith.mulf %205, %206 : vector<8x8xf32>
    %cst_120 = arith.constant dense<0xFF800000> : vector<8xf32>
    %208 = vector.multi_reduction <maximumf>, %207, %cst_120 [1] : vector<8x8xf32> to vector<8xf32>
    %209 = vector.shape_cast %208 : vector<8xf32> to vector<8x1xf32>
    %210 = vector.broadcast %209 : vector<8x1xf32> to vector<8x8xf32>
    %211 = arith.subf %207, %210 : vector<8x8xf32>
    %212 = math.exp %211 : vector<8x8xf32>
    %cst_121 = arith.constant dense<0.000000e+00> : vector<8xf32>
    %213 = vector.multi_reduction <add>, %212, %cst_121 [1] : vector<8x8xf32> to vector<8xf32>
    %214 = vector.shape_cast %213 : vector<8xf32> to vector<8x1xf32>
    %215 = vector.broadcast %214 : vector<8x1xf32> to vector<8x8xf32>
    %216 = arith.divf %212, %215 : vector<8x8xf32>
    %c0_122 = arith.constant 0 : index
    %c0_123 = arith.constant 0 : index
    %c0_124 = arith.constant 0 : index
    %c0_125 = arith.constant 0 : index
    %217 = vector.load %arg17[%c0_122, %c0_123, %c0_124, %c0_125] : memref<1x4x8x8xf32, #tpu.memory_space<vmem>>, vector<1x1x8x8xf32>
    %218 = vector.shape_cast %217 : vector<1x1x8x8xf32> to vector<8x8xf32>
    %219 = vector.shape_cast %216 : vector<8x8xf32> to vector<1x1x8x8xf32>
    tpu.vector_store %arg17[%c0_122, %c0_123, %c0_124, %c0_125], %219 {strides = array<i32>} : memref<1x4x8x8xf32, #tpu.memory_space<vmem>>, vector<1x1x8x8xf32>,
    %cst_126 = arith.constant dense<0.000000e+00> : vector<8x8xf32>
    %220 = tpu.matmul %216, %204, %cst_126 {dimension_numbers = #tpu.dot_dimension_numbers<[1], [0], [0], [1], [0, 0, 1, 1], [], []>} : vector<8x8xf32>, vector<8x8xf32>, vector<8x8xf32> -> vector<8x8xf32>
    %221 = vector.extract_strided_slice %199 {offsets = [0, 8], sizes = [8, 8], strides = [1, 1]} : vector<8x32xf32> to vector<8x8xf32>
    %222 = vector.extract_strided_slice %200 {offsets = [0, 8], sizes = [8, 8], strides = [1, 1]} : vector<8x32xf32> to vector<8x8xf32>
    %223 = vector.extract_strided_slice %201 {offsets = [0, 8], sizes = [8, 8], strides = [1, 1]} : vector<8x32xf32> to vector<8x8xf32>
    %cst_127 = arith.constant dense<0.000000e+00> : vector<8x8xf32>
    %224 = tpu.matmul %221, %222, %cst_127 {dimension_numbers = #tpu.dot_dimension_numbers<[1], [1], [0], [0], [0, 0, 1, 0], [], []>} : vector<8x8xf32>, vector<8x8xf32>, vector<8x8xf32> -> vector<8x8xf32>
    %cst_128 = arith.constant 0.353553385 : f32
    %225 = vector.broadcast %cst_128 : f32 to vector<8x8xf32>
    %226 = arith.mulf %224, %225 : vector<8x8xf32>
    %cst_129 = arith.constant dense<0xFF800000> : vector<8xf32>
    %227 = vector.multi_reduction <maximumf>, %226, %cst_129 [1] : vector<8x8xf32> to vector<8xf32>
    %228 = vector.shape_cast %227 : vector<8xf32> to vector<8x1xf32>
    %229 = vector.broadcast %228 : vector<8x1xf32> to vector<8x8xf32>
    %230 = arith.subf %226, %229 : vector<8x8xf32>
    %231 = math.exp %230 : vector<8x8xf32>
    %cst_130 = arith.constant dense<0.000000e+00> : vector<8xf32>
    %232 = vector.multi_reduction <add>, %231, %cst_130 [1] : vector<8x8xf32> to vector<8xf32>
    %233 = vector.shape_cast %232 : vector<8xf32> to vector<8x1xf32>
    %234 = vector.broadcast %233 : vector<8x1xf32> to vector<8x8xf32>
    %235 = arith.divf %231, %234 : vector<8x8xf32>
    %c0_131 = arith.constant 0 : index
    %c1_132 = arith.constant 1 : index
    %c0_133 = arith.constant 0 : index
    %c0_134 = arith.constant 0 : index
    %236 = vector.load %arg17[%c0_131, %c1_132, %c0_133, %c0_134] : memref<1x4x8x8xf32, #tpu.memory_space<vmem>>, vector<1x1x8x8xf32>
    %237 = vector.shape_cast %236 : vector<1x1x8x8xf32> to vector<8x8xf32>
    %238 = vector.shape_cast %235 : vector<8x8xf32> to vector<1x1x8x8xf32>
    tpu.vector_store %arg17[%c0_131, %c1_132, %c0_133, %c0_134], %238 {strides = array<i32>} : memref<1x4x8x8xf32, #tpu.memory_space<vmem>>, vector<1x1x8x8xf32>,
    %cst_135 = arith.constant dense<0.000000e+00> : vector<8x8xf32>
    %239 = tpu.matmul %235, %223, %cst_135 {dimension_numbers = #tpu.dot_dimension_numbers<[1], [0], [0], [1], [0, 0, 1, 1], [], []>} : vector<8x8xf32>, vector<8x8xf32>, vector<8x8xf32> -> vector<8x8xf32>
    %240 = vector.extract_strided_slice %199 {offsets = [0, 16], sizes = [8, 8], strides = [1, 1]} : vector<8x32xf32> to vector<8x8xf32>
    %241 = vector.extract_strided_slice %200 {offsets = [0, 16], sizes = [8, 8], strides = [1, 1]} : vector<8x32xf32> to vector<8x8xf32>
    %242 = vector.extract_strided_slice %201 {offsets = [0, 16], sizes = [8, 8], strides = [1, 1]} : vector<8x32xf32> to vector<8x8xf32>
    %cst_136 = arith.constant dense<0.000000e+00> : vector<8x8xf32>
    %243 = tpu.matmul %240, %241, %cst_136 {dimension_numbers = #tpu.dot_dimension_numbers<[1], [1], [0], [0], [0, 0, 1, 0], [], []>} : vector<8x8xf32>, vector<8x8xf32>, vector<8x8xf32> -> vector<8x8xf32>
    %cst_137 = arith.constant 0.353553385 : f32
    %244 = vector.broadcast %cst_137 : f32 to vector<8x8xf32>
    %245 = arith.mulf %243, %244 : vector<8x8xf32>
    %cst_138 = arith.constant dense<0xFF800000> : vector<8xf32>
    %246 = vector.multi_reduction <maximumf>, %245, %cst_138 [1] : vector<8x8xf32> to vector<8xf32>
    %247 = vector.shape_cast %246 : vector<8xf32> to vector<8x1xf32>
    %248 = vector.broadcast %247 : vector<8x1xf32> to vector<8x8xf32>
    %249 = arith.subf %245, %248 : vector<8x8xf32>
    %250 = math.exp %249 : vector<8x8xf32>
    %cst_139 = arith.constant dense<0.000000e+00> : vector<8xf32>
    %251 = vector.multi_reduction <add>, %250, %cst_139 [1] : vector<8x8xf32> to vector<8xf32>
    %252 = vector.shape_cast %251 : vector<8xf32> to vector<8x1xf32>
    %253 = vector.broadcast %252 : vector<8x1xf32> to vector<8x8xf32>
    %254 = arith.divf %250, %253 : vector<8x8xf32>
    %c0_140 = arith.constant 0 : index
    %c2_141 = arith.constant 2 : index
    %c0_142 = arith.constant 0 : index
    %c0_143 = arith.constant 0 : index
    %255 = vector.load %arg17[%c0_140, %c2_141, %c0_142, %c0_143] : memref<1x4x8x8xf32, #tpu.memory_space<vmem>>, vector<1x1x8x8xf32>
    %256 = vector.shape_cast %255 : vector<1x1x8x8xf32> to vector<8x8xf32>
    %257 = vector.shape_cast %254 : vector<8x8xf32> to vector<1x1x8x8xf32>
    tpu.vector_store %arg17[%c0_140, %c2_141, %c0_142, %c0_143], %257 {strides = array<i32>} : memref<1x4x8x8xf32, #tpu.memory_space<vmem>>, vector<1x1x8x8xf32>,
    %cst_144 = arith.constant dense<0.000000e+00> : vector<8x8xf32>
    %258 = tpu.matmul %254, %242, %cst_144 {dimension_numbers = #tpu.dot_dimension_numbers<[1], [0], [0], [1], [0, 0, 1, 1], [], []>} : vector<8x8xf32>, vector<8x8xf32>, vector<8x8xf32> -> vector<8x8xf32>
    %259 = vector.extract_strided_slice %199 {offsets = [0, 24], sizes = [8, 8], strides = [1, 1]} : vector<8x32xf32> to vector<8x8xf32>
    %260 = vector.extract_strided_slice %200 {offsets = [0, 24], sizes = [8, 8], strides = [1, 1]} : vector<8x32xf32> to vector<8x8xf32>
    %261 = vector.extract_strided_slice %201 {offsets = [0, 24], sizes = [8, 8], strides = [1, 1]} : vector<8x32xf32> to vector<8x8xf32>
    %cst_145 = arith.constant dense<0.000000e+00> : vector<8x8xf32>
    %262 = tpu.matmul %259, %260, %cst_145 {dimension_numbers = #tpu.dot_dimension_numbers<[1], [1], [0], [0], [0, 0, 1, 0], [], []>} : vector<8x8xf32>, vector<8x8xf32>, vector<8x8xf32> -> vector<8x8xf32>
    %cst_146 = arith.constant 0.353553385 : f32
    %263 = vector.broadcast %cst_146 : f32 to vector<8x8xf32>
    %264 = arith.mulf %262, %263 : vector<8x8xf32>
    %cst_147 = arith.constant dense<0xFF800000> : vector<8xf32>
    %265 = vector.multi_reduction <maximumf>, %264, %cst_147 [1] : vector<8x8xf32> to vector<8xf32>
    %266 = vector.shape_cast %265 : vector<8xf32> to vector<8x1xf32>
    %267 = vector.broadcast %266 : vector<8x1xf32> to vector<8x8xf32>
    %268 = arith.subf %264, %267 : vector<8x8xf32>
    %269 = math.exp %268 : vector<8x8xf32>
    %cst_148 = arith.constant dense<0.000000e+00> : vector<8xf32>
    %270 = vector.multi_reduction <add>, %269, %cst_148 [1] : vector<8x8xf32> to vector<8xf32>
    %271 = vector.shape_cast %270 : vector<8xf32> to vector<8x1xf32>
    %272 = vector.broadcast %271 : vector<8x1xf32> to vector<8x8xf32>
    %273 = arith.divf %269, %272 : vector<8x8xf32>
    %c0_149 = arith.constant 0 : index
    %c3_150 = arith.constant 3 : index
    %c0_151 = arith.constant 0 : index
    %c0_152 = arith.constant 0 : index
    %274 = vector.load %arg17[%c0_149, %c3_150, %c0_151, %c0_152] : memref<1x4x8x8xf32, #tpu.memory_space<vmem>>, vector<1x1x8x8xf32>
    %275 = vector.shape_cast %274 : vector<1x1x8x8xf32> to vector<8x8xf32>
    %276 = vector.shape_cast %273 : vector<8x8xf32> to vector<1x1x8x8xf32>
    tpu.vector_store %arg17[%c0_149, %c3_150, %c0_151, %c0_152], %276 {strides = array<i32>} : memref<1x4x8x8xf32, #tpu.memory_space<vmem>>, vector<1x1x8x8xf32>,
    %cst_153 = arith.constant dense<0.000000e+00> : vector<8x8xf32>
    %277 = tpu.matmul %273, %261, %cst_153 {dimension_numbers = #tpu.dot_dimension_numbers<[1], [0], [0], [1], [0, 0, 1, 1], [], []>} : vector<8x8xf32>, vector<8x8xf32>, vector<8x8xf32> -> vector<8x8xf32>
    %278 = tpu.concatenate %220, %239, %258, %277 in 1 : vector<8x8xf32>, vector<8x8xf32>, vector<8x8xf32>, vector<8x8xf32> -> vector<8x32xf32>
    %cst_154 = arith.constant dense<0.000000e+00> : vector<8x32xf32>
    %279 = tpu.matmul %278, %175, %cst_154 {dimension_numbers = #tpu.dot_dimension_numbers<[1], [0], [0], [1], [0, 0, 1, 1], [], []>} : vector<8x32xf32>, vector<32x32xf32>, vector<8x32xf32> -> vector<8x32xf32>
    %280 = vector.broadcast %183 : vector<1x32xf32> to vector<8x32xf32>
    %281 = arith.addf %279, %280 : vector<8x32xf32>
    %282 = arith.addf %281, %171 : vector<8x32xf32>
    %cst_155 = arith.constant dense<0.000000e+00> : vector<8xf32>
    %283 = vector.multi_reduction <add>, %282, %cst_155 [1] : vector<8x32xf32> to vector<8xf32>
    %284 = vector.shape_cast %283 : vector<8xf32> to vector<8x1xf32>
    %cst_156 = arith.constant 3.200000e+01 : f32
    %285 = vector.broadcast %cst_156 : f32 to vector<8x1xf32>
    %286 = arith.divf %284, %285 : vector<8x1xf32>
    %287 = vector.broadcast %286 : vector<8x1xf32> to vector<8x32xf32>
    %288 = arith.subf %282, %287 : vector<8x32xf32>
    %289 = arith.mulf %288, %288 : vector<8x32xf32>
    %cst_157 = arith.constant dense<0.000000e+00> : vector<8xf32>
    %290 = vector.multi_reduction <add>, %289, %cst_157 [1] : vector<8x32xf32> to vector<8xf32>
    %291 = vector.shape_cast %290 : vector<8xf32> to vector<8x1xf32>
    %cst_158 = arith.constant 3.200000e+01 : f32
    %292 = vector.broadcast %cst_158 : f32 to vector<8x1xf32>
    %293 = arith.divf %291, %292 : vector<8x1xf32>
    %294 = vector.broadcast %286 : vector<8x1xf32> to vector<8x32xf32>
    %295 = arith.subf %282, %294 : vector<8x32xf32>
    %cst_159 = arith.constant 9.99999974E-6 : f32
    %296 = vector.broadcast %cst_159 : f32 to vector<8x1xf32>
    %297 = arith.addf %293, %296 : vector<8x1xf32>
    %298 = math.rsqrt %297 : vector<8x1xf32>
    %299 = vector.broadcast %298 : vector<8x1xf32> to vector<8x32xf32>
    %300 = arith.mulf %295, %299 : vector<8x32xf32>
    %301 = vector.broadcast %189 : vector<1x32xf32> to vector<8x32xf32>
    %302 = arith.mulf %300, %301 : vector<8x32xf32>
    %303 = vector.broadcast %191 : vector<1x32xf32> to vector<8x32xf32>
    %304 = arith.addf %302, %303 : vector<8x32xf32>
    %cst_160 = arith.constant dense<0.000000e+00> : vector<8x32xf32>
    %305 = tpu.matmul %304, %177, %cst_160 {dimension_numbers = #tpu.dot_dimension_numbers<[1], [0], [0], [1], [0, 0, 1, 1], [], []>} : vector<8x32xf32>, vector<32x32xf32>, vector<8x32xf32> -> vector<8x32xf32>
    %306 = vector.broadcast %185 : vector<1x32xf32> to vector<8x32xf32>
    %307 = arith.addf %305, %306 : vector<8x32xf32>
    %cst_161 = arith.constant 0.000000e+00 : f32
    %308 = vector.broadcast %cst_161 : f32 to vector<8x32xf32>
    %309 = arith.maximumf %307, %308 : vector<8x32xf32>
    %cst_162 = arith.constant dense<0.000000e+00> : vector<8x32xf32>
    %310 = tpu.matmul %309, %179, %cst_162 {dimension_numbers = #tpu.dot_dimension_numbers<[1], [0], [0], [1], [0, 0, 1, 1], [], []>} : vector<8x32xf32>, vector<32x32xf32>, vector<8x32xf32> -> vector<8x32xf32>
    %311 = vector.broadcast %187 : vector<1x32xf32> to vector<8x32xf32>
    %312 = arith.addf %310, %311 : vector<8x32xf32>
    %313 = arith.addf %312, %304 : vector<8x32xf32>
    %cst_163 = arith.constant dense<0.000000e+00> : vector<8xf32>
    %314 = vector.multi_reduction <add>, %313, %cst_163 [1] : vector<8x32xf32> to vector<8xf32>
    %315 = vector.shape_cast %314 : vector<8xf32> to vector<8x1xf32>
    %cst_164 = arith.constant 3.200000e+01 : f32
    %316 = vector.broadcast %cst_164 : f32 to vector<8x1xf32>
    %317 = arith.divf %315, %316 : vector<8x1xf32>
    %318 = vector.broadcast %317 : vector<8x1xf32> to vector<8x32xf32>
    %319 = arith.subf %313, %318 : vector<8x32xf32>
    %320 = arith.mulf %319, %319 : vector<8x32xf32>
    %cst_165 = arith.constant dense<0.000000e+00> : vector<8xf32>
    %321 = vector.multi_reduction <add>, %320, %cst_165 [1] : vector<8x32xf32> to vector<8xf32>
    %322 = vector.shape_cast %321 : vector<8xf32> to vector<8x1xf32>
    %cst_166 = arith.constant 3.200000e+01 : f32
    %323 = vector.broadcast %cst_166 : f32 to vector<8x1xf32>
    %324 = arith.divf %322, %323 : vector<8x1xf32>
    %325 = vector.broadcast %317 : vector<8x1xf32> to vector<8x32xf32>
    %326 = arith.subf %313, %325 : vector<8x32xf32>
    %cst_167 = arith.constant 9.99999974E-6 : f32
    %327 = vector.broadcast %cst_167 : f32 to vector<8x1xf32>
    %328 = arith.addf %324, %327 : vector<8x1xf32>
    %329 = math.rsqrt %328 : vector<8x1xf32>
    %330 = vector.broadcast %329 : vector<8x1xf32> to vector<8x32xf32>
    %331 = arith.mulf %326, %330 : vector<8x32xf32>
    %332 = vector.broadcast %193 : vector<1x32xf32> to vector<8x32xf32>
    %333 = arith.mulf %331, %332 : vector<8x32xf32>
    %334 = vector.broadcast %195 : vector<1x32xf32> to vector<8x32xf32>
    %335 = arith.addf %333, %334 : vector<8x32xf32>
    %c0_168 = arith.constant 0 : index
    %c0_169 = arith.constant 0 : index
    %c0_170 = arith.constant 0 : index
    %336 = vector.load %arg7[%c0_168, %c0_169, %c0_170] : memref<2x32x512xf32, #tpu.memory_space<vmem>>, vector<1x32x96xf32>
    %337 = vector.shape_cast %336 : vector<1x32x96xf32> to vector<32x96xf32>
    %c0_171 = arith.constant 0 : index
    %c0_172 = arith.constant 0 : index
    %c128_173 = arith.constant 128 : index
    %338 = vector.load %arg7[%c0_171, %c0_172, %c128_173] : memref<2x32x512xf32, #tpu.memory_space<vmem>>, vector<1x32x32xf32>
    %339 = vector.shape_cast %338 : vector<1x32x32xf32> to vector<32x32xf32>
    %c0_174 = arith.constant 0 : index
    %c0_175 = arith.constant 0 : index
    %c256_176 = arith.constant 256 : index
    %340 = vector.load %arg7[%c0_174, %c0_175, %c256_176] : memref<2x32x512xf32, #tpu.memory_space<vmem>>, vector<1x32x32xf32>
    %341 = vector.shape_cast %340 : vector<1x32x32xf32> to vector<32x32xf32>
    %c0_177 = arith.constant 0 : index
    %c0_178 = arith.constant 0 : index
    %c384_179 = arith.constant 384 : index
    %342 = vector.load %arg7[%c0_177, %c0_178, %c384_179] : memref<2x32x512xf32, #tpu.memory_space<vmem>>, vector<1x32x32xf32>
    %343 = vector.shape_cast %342 : vector<1x32x32xf32> to vector<32x32xf32>
    %c0_180 = arith.constant 0 : index
    %c0_181 = arith.constant 0 : index
    %c0_182 = arith.constant 0 : index
    %344 = vector.load %arg8[%c0_180, %c0_181, %c0_182] : memref<2x8x128xf32, #tpu.memory_space<vmem>>, vector<1x1x96xf32>
    %345 = vector.shape_cast %344 : vector<1x1x96xf32> to vector<1x96xf32>
    %c0_183 = arith.constant 0 : index
    %c1_184 = arith.constant 1 : index
    %c0_185 = arith.constant 0 : index
    %346 = vector.load %arg8[%c0_183, %c1_184, %c0_185] : memref<2x8x128xf32, #tpu.memory_space<vmem>>, vector<1x1x32xf32>
    %347 = vector.shape_cast %346 : vector<1x1x32xf32> to vector<1x32xf32>
    %c0_186 = arith.constant 0 : index
    %c2_187 = arith.constant 2 : index
    %c0_188 = arith.constant 0 : index
    %348 = vector.load %arg8[%c0_186, %c2_187, %c0_188] : memref<2x8x128xf32, #tpu.memory_space<vmem>>, vector<1x1x32xf32>
    %349 = vector.shape_cast %348 : vector<1x1x32xf32> to vector<1x32xf32>
    %c0_189 = arith.constant 0 : index
    %c3_190 = arith.constant 3 : index
    %c0_191 = arith.constant 0 : index
    %350 = vector.load %arg8[%c0_189, %c3_190, %c0_191] : memref<2x8x128xf32, #tpu.memory_space<vmem>>, vector<1x1x32xf32>
    %351 = vector.shape_cast %350 : vector<1x1x32xf32> to vector<1x32xf32>
    %c0_192 = arith.constant 0 : index
    %c4_193 = arith.constant 4 : index
    %c0_194 = arith.constant 0 : index
    %352 = vector.load %arg8[%c0_192, %c4_193, %c0_194] : memref<2x8x128xf32, #tpu.memory_space<vmem>>, vector<1x1x32xf32>
    %353 = vector.shape_cast %352 : vector<1x1x32xf32> to vector<1x32xf32>
    %c0_195 = arith.constant 0 : index
    %c5_196 = arith.constant 5 : index
    %c0_197 = arith.constant 0 : index
    %354 = vector.load %arg8[%c0_195, %c5_196, %c0_197] : memref<2x8x128xf32, #tpu.memory_space<vmem>>, vector<1x1x32xf32>
    %355 = vector.shape_cast %354 : vector<1x1x32xf32> to vector<1x32xf32>
    %c0_198 = arith.constant 0 : index
    %c6_199 = arith.constant 6 : index
    %c0_200 = arith.constant 0 : index
    %356 = vector.load %arg8[%c0_198, %c6_199, %c0_200] : memref<2x8x128xf32, #tpu.memory_space<vmem>>, vector<1x1x32xf32>
    %357 = vector.shape_cast %356 : vector<1x1x32xf32> to vector<1x32xf32>
    %c0_201 = arith.constant 0 : index
    %c7_202 = arith.constant 7 : index
    %c0_203 = arith.constant 0 : index
    %358 = vector.load %arg8[%c0_201, %c7_202, %c0_203] : memref<2x8x128xf32, #tpu.memory_space<vmem>>, vector<1x1x32xf32>
    %359 = vector.shape_cast %358 : vector<1x1x32xf32> to vector<1x32xf32>
    %cst_204 = arith.constant dense<0.000000e+00> : vector<4x96xf32>
    %360 = tpu.matmul %16, %337, %cst_204 {dimension_numbers = #tpu.dot_dimension_numbers<[1], [0], [0], [1], [0, 0, 1, 1], [], []>} : vector<4x32xf32>, vector<32x96xf32>, vector<4x96xf32> -> vector<4x96xf32>
    %361 = vector.broadcast %345 : vector<1x96xf32> to vector<4x96xf32>
    %362 = arith.addf %360, %361 : vector<4x96xf32>
    %363 = vector.extract_strided_slice %362 {offsets = [0, 0], sizes = [4, 32], strides = [1, 1]} : vector<4x96xf32> to vector<4x32xf32>
    %364 = vector.extract_strided_slice %362 {offsets = [0, 32], sizes = [4, 32], strides = [1, 1]} : vector<4x96xf32> to vector<4x32xf32>
    %365 = vector.extract_strided_slice %362 {offsets = [0, 64], sizes = [4, 32], strides = [1, 1]} : vector<4x96xf32> to vector<4x32xf32>
    %366 = vector.extract_strided_slice %363 {offsets = [0, 0], sizes = [4, 8], strides = [1, 1]} : vector<4x32xf32> to vector<4x8xf32>
    %367 = vector.extract_strided_slice %364 {offsets = [0, 0], sizes = [4, 8], strides = [1, 1]} : vector<4x32xf32> to vector<4x8xf32>
    %368 = vector.extract_strided_slice %365 {offsets = [0, 0], sizes = [4, 8], strides = [1, 1]} : vector<4x32xf32> to vector<4x8xf32>
    %cst_205 = arith.constant dense<0.000000e+00> : vector<4x4xf32>
    %369 = tpu.matmul %366, %367, %cst_205 {dimension_numbers = #tpu.dot_dimension_numbers<[1], [1], [0], [0], [0, 0, 1, 0], [], []>} : vector<4x8xf32>, vector<4x8xf32>, vector<4x4xf32> -> vector<4x4xf32>
    %cst_206 = arith.constant 0.353553385 : f32
    %370 = vector.broadcast %cst_206 : f32 to vector<4x4xf32>
    %371 = arith.mulf %369, %370 : vector<4x4xf32>
    %cst_207 = arith.constant dense<0xFF800000> : vector<4xf32>
    %372 = vector.multi_reduction <maximumf>, %371, %cst_207 [1] : vector<4x4xf32> to vector<4xf32>
    %373 = vector.shape_cast %372 : vector<4xf32> to vector<4x1xf32>
    %374 = vector.broadcast %373 : vector<4x1xf32> to vector<4x4xf32>
    %375 = arith.subf %371, %374 : vector<4x4xf32>
    %376 = math.exp %375 : vector<4x4xf32>
    %cst_208 = arith.constant dense<0.000000e+00> : vector<4xf32>
    %377 = vector.multi_reduction <add>, %376, %cst_208 [1] : vector<4x4xf32> to vector<4xf32>
    %378 = vector.shape_cast %377 : vector<4xf32> to vector<4x1xf32>
    %379 = vector.broadcast %378 : vector<4x1xf32> to vector<4x4xf32>
    %380 = arith.divf %376, %379 : vector<4x4xf32>
    %cst_209 = arith.constant dense<0.000000e+00> : vector<4x8xf32>
    %381 = tpu.matmul %380, %368, %cst_209 {dimension_numbers = #tpu.dot_dimension_numbers<[1], [0], [0], [1], [0, 0, 1, 1], [], []>} : vector<4x4xf32>, vector<4x8xf32>, vector<4x8xf32> -> vector<4x8xf32>
    %382 = vector.extract_strided_slice %363 {offsets = [0, 8], sizes = [4, 8], strides = [1, 1]} : vector<4x32xf32> to vector<4x8xf32>
    %383 = vector.extract_strided_slice %364 {offsets = [0, 8], sizes = [4, 8], strides = [1, 1]} : vector<4x32xf32> to vector<4x8xf32>
    %384 = vector.extract_strided_slice %365 {offsets = [0, 8], sizes = [4, 8], strides = [1, 1]} : vector<4x32xf32> to vector<4x8xf32>
    %cst_210 = arith.constant dense<0.000000e+00> : vector<4x4xf32>
    %385 = tpu.matmul %382, %383, %cst_210 {dimension_numbers = #tpu.dot_dimension_numbers<[1], [1], [0], [0], [0, 0, 1, 0], [], []>} : vector<4x8xf32>, vector<4x8xf32>, vector<4x4xf32> -> vector<4x4xf32>
    %cst_211 = arith.constant 0.353553385 : f32
    %386 = vector.broadcast %cst_211 : f32 to vector<4x4xf32>
    %387 = arith.mulf %385, %386 : vector<4x4xf32>
    %cst_212 = arith.constant dense<0xFF800000> : vector<4xf32>
    %388 = vector.multi_reduction <maximumf>, %387, %cst_212 [1] : vector<4x4xf32> to vector<4xf32>
    %389 = vector.shape_cast %388 : vector<4xf32> to vector<4x1xf32>
    %390 = vector.broadcast %389 : vector<4x1xf32> to vector<4x4xf32>
    %391 = arith.subf %387, %390 : vector<4x4xf32>
    %392 = math.exp %391 : vector<4x4xf32>
    %cst_213 = arith.constant dense<0.000000e+00> : vector<4xf32>
    %393 = vector.multi_reduction <add>, %392, %cst_213 [1] : vector<4x4xf32> to vector<4xf32>
    %394 = vector.shape_cast %393 : vector<4xf32> to vector<4x1xf32>
    %395 = vector.broadcast %394 : vector<4x1xf32> to vector<4x4xf32>
    %396 = arith.divf %392, %395 : vector<4x4xf32>
    %cst_214 = arith.constant dense<0.000000e+00> : vector<4x8xf32>
    %397 = tpu.matmul %396, %384, %cst_214 {dimension_numbers = #tpu.dot_dimension_numbers<[1], [0], [0], [1], [0, 0, 1, 1], [], []>} : vector<4x4xf32>, vector<4x8xf32>, vector<4x8xf32> -> vector<4x8xf32>
    %398 = vector.extract_strided_slice %363 {offsets = [0, 16], sizes = [4, 8], strides = [1, 1]} : vector<4x32xf32> to vector<4x8xf32>
    %399 = vector.extract_strided_slice %364 {offsets = [0, 16], sizes = [4, 8], strides = [1, 1]} : vector<4x32xf32> to vector<4x8xf32>
    %400 = vector.extract_strided_slice %365 {offsets = [0, 16], sizes = [4, 8], strides = [1, 1]} : vector<4x32xf32> to vector<4x8xf32>
    %cst_215 = arith.constant dense<0.000000e+00> : vector<4x4xf32>
    %401 = tpu.matmul %398, %399, %cst_215 {dimension_numbers = #tpu.dot_dimension_numbers<[1], [1], [0], [0], [0, 0, 1, 0], [], []>} : vector<4x8xf32>, vector<4x8xf32>, vector<4x4xf32> -> vector<4x4xf32>
    %cst_216 = arith.constant 0.353553385 : f32
    %402 = vector.broadcast %cst_216 : f32 to vector<4x4xf32>
    %403 = arith.mulf %401, %402 : vector<4x4xf32>
    %cst_217 = arith.constant dense<0xFF800000> : vector<4xf32>
    %404 = vector.multi_reduction <maximumf>, %403, %cst_217 [1] : vector<4x4xf32> to vector<4xf32>
    %405 = vector.shape_cast %404 : vector<4xf32> to vector<4x1xf32>
    %406 = vector.broadcast %405 : vector<4x1xf32> to vector<4x4xf32>
    %407 = arith.subf %403, %406 : vector<4x4xf32>
    %408 = math.exp %407 : vector<4x4xf32>
    %cst_218 = arith.constant dense<0.000000e+00> : vector<4xf32>
    %409 = vector.multi_reduction <add>, %408, %cst_218 [1] : vector<4x4xf32> to vector<4xf32>
    %410 = vector.shape_cast %409 : vector<4xf32> to vector<4x1xf32>
    %411 = vector.broadcast %410 : vector<4x1xf32> to vector<4x4xf32>
    %412 = arith.divf %408, %411 : vector<4x4xf32>
    %cst_219 = arith.constant dense<0.000000e+00> : vector<4x8xf32>
    %413 = tpu.matmul %412, %400, %cst_219 {dimension_numbers = #tpu.dot_dimension_numbers<[1], [0], [0], [1], [0, 0, 1, 1], [], []>} : vector<4x4xf32>, vector<4x8xf32>, vector<4x8xf32> -> vector<4x8xf32>
    %414 = vector.extract_strided_slice %363 {offsets = [0, 24], sizes = [4, 8], strides = [1, 1]} : vector<4x32xf32> to vector<4x8xf32>
    %415 = vector.extract_strided_slice %364 {offsets = [0, 24], sizes = [4, 8], strides = [1, 1]} : vector<4x32xf32> to vector<4x8xf32>
    %416 = vector.extract_strided_slice %365 {offsets = [0, 24], sizes = [4, 8], strides = [1, 1]} : vector<4x32xf32> to vector<4x8xf32>
    %cst_220 = arith.constant dense<0.000000e+00> : vector<4x4xf32>
    %417 = tpu.matmul %414, %415, %cst_220 {dimension_numbers = #tpu.dot_dimension_numbers<[1], [1], [0], [0], [0, 0, 1, 0], [], []>} : vector<4x8xf32>, vector<4x8xf32>, vector<4x4xf32> -> vector<4x4xf32>
    %cst_221 = arith.constant 0.353553385 : f32
    %418 = vector.broadcast %cst_221 : f32 to vector<4x4xf32>
    %419 = arith.mulf %417, %418 : vector<4x4xf32>
    %cst_222 = arith.constant dense<0xFF800000> : vector<4xf32>
    %420 = vector.multi_reduction <maximumf>, %419, %cst_222 [1] : vector<4x4xf32> to vector<4xf32>
    %421 = vector.shape_cast %420 : vector<4xf32> to vector<4x1xf32>
    %422 = vector.broadcast %421 : vector<4x1xf32> to vector<4x4xf32>
    %423 = arith.subf %419, %422 : vector<4x4xf32>
    %424 = math.exp %423 : vector<4x4xf32>
    %cst_223 = arith.constant dense<0.000000e+00> : vector<4xf32>
    %425 = vector.multi_reduction <add>, %424, %cst_223 [1] : vector<4x4xf32> to vector<4xf32>
    %426 = vector.shape_cast %425 : vector<4xf32> to vector<4x1xf32>
    %427 = vector.broadcast %426 : vector<4x1xf32> to vector<4x4xf32>
    %428 = arith.divf %424, %427 : vector<4x4xf32>
    %cst_224 = arith.constant dense<0.000000e+00> : vector<4x8xf32>
    %429 = tpu.matmul %428, %416, %cst_224 {dimension_numbers = #tpu.dot_dimension_numbers<[1], [0], [0], [1], [0, 0, 1, 1], [], []>} : vector<4x4xf32>, vector<4x8xf32>, vector<4x8xf32> -> vector<4x8xf32>
    %430 = tpu.concatenate %381, %397, %413, %429 in 1 : vector<4x8xf32>, vector<4x8xf32>, vector<4x8xf32>, vector<4x8xf32> -> vector<4x32xf32>
    %cst_225 = arith.constant dense<0.000000e+00> : vector<4x32xf32>
    %431 = tpu.matmul %430, %339, %cst_225 {dimension_numbers = #tpu.dot_dimension_numbers<[1], [0], [0], [1], [0, 0, 1, 1], [], []>} : vector<4x32xf32>, vector<32x32xf32>, vector<4x32xf32> -> vector<4x32xf32>
    %432 = vector.broadcast %347 : vector<1x32xf32> to vector<4x32xf32>
    %433 = arith.addf %431, %432 : vector<4x32xf32>
    %434 = arith.addf %433, %16 : vector<4x32xf32>
    %cst_226 = arith.constant dense<0.000000e+00> : vector<4xf32>
    %435 = vector.multi_reduction <add>, %434, %cst_226 [1] : vector<4x32xf32> to vector<4xf32>
    %436 = vector.shape_cast %435 : vector<4xf32> to vector<4x1xf32>
    %cst_227 = arith.constant 3.200000e+01 : f32
    %437 = vector.broadcast %cst_227 : f32 to vector<4x1xf32>
    %438 = arith.divf %436, %437 : vector<4x1xf32>
    %439 = vector.broadcast %438 : vector<4x1xf32> to vector<4x32xf32>
    %440 = arith.subf %434, %439 : vector<4x32xf32>
    %441 = arith.mulf %440, %440 : vector<4x32xf32>
    %cst_228 = arith.constant dense<0.000000e+00> : vector<4xf32>
    %442 = vector.multi_reduction <add>, %441, %cst_228 [1] : vector<4x32xf32> to vector<4xf32>
    %443 = vector.shape_cast %442 : vector<4xf32> to vector<4x1xf32>
    %cst_229 = arith.constant 3.200000e+01 : f32
    %444 = vector.broadcast %cst_229 : f32 to vector<4x1xf32>
    %445 = arith.divf %443, %444 : vector<4x1xf32>
    %446 = vector.broadcast %438 : vector<4x1xf32> to vector<4x32xf32>
    %447 = arith.subf %434, %446 : vector<4x32xf32>
    %cst_230 = arith.constant 9.99999974E-6 : f32
    %448 = vector.broadcast %cst_230 : f32 to vector<4x1xf32>
    %449 = arith.addf %445, %448 : vector<4x1xf32>
    %450 = math.rsqrt %449 : vector<4x1xf32>
    %451 = vector.broadcast %450 : vector<4x1xf32> to vector<4x32xf32>
    %452 = arith.mulf %447, %451 : vector<4x32xf32>
    %453 = vector.broadcast %353 : vector<1x32xf32> to vector<4x32xf32>
    %454 = arith.mulf %452, %453 : vector<4x32xf32>
    %455 = vector.broadcast %355 : vector<1x32xf32> to vector<4x32xf32>
    %456 = arith.addf %454, %455 : vector<4x32xf32>
    %cst_231 = arith.constant dense<0.000000e+00> : vector<4x32xf32>
    %457 = tpu.matmul %456, %341, %cst_231 {dimension_numbers = #tpu.dot_dimension_numbers<[1], [0], [0], [1], [0, 0, 1, 1], [], []>} : vector<4x32xf32>, vector<32x32xf32>, vector<4x32xf32> -> vector<4x32xf32>
    %458 = vector.broadcast %349 : vector<1x32xf32> to vector<4x32xf32>
    %459 = arith.addf %457, %458 : vector<4x32xf32>
    %cst_232 = arith.constant 0.000000e+00 : f32
    %460 = vector.broadcast %cst_232 : f32 to vector<4x32xf32>
    %461 = arith.maximumf %459, %460 : vector<4x32xf32>
    %cst_233 = arith.constant dense<0.000000e+00> : vector<4x32xf32>
    %462 = tpu.matmul %461, %343, %cst_233 {dimension_numbers = #tpu.dot_dimension_numbers<[1], [0], [0], [1], [0, 0, 1, 1], [], []>} : vector<4x32xf32>, vector<32x32xf32>, vector<4x32xf32> -> vector<4x32xf32>
    %463 = vector.broadcast %351 : vector<1x32xf32> to vector<4x32xf32>
    %464 = arith.addf %462, %463 : vector<4x32xf32>
    %465 = arith.addf %464, %456 : vector<4x32xf32>
    %cst_234 = arith.constant dense<0.000000e+00> : vector<4xf32>
    %466 = vector.multi_reduction <add>, %465, %cst_234 [1] : vector<4x32xf32> to vector<4xf32>
    %467 = vector.shape_cast %466 : vector<4xf32> to vector<4x1xf32>
    %cst_235 = arith.constant 3.200000e+01 : f32
    %468 = vector.broadcast %cst_235 : f32 to vector<4x1xf32>
    %469 = arith.divf %467, %468 : vector<4x1xf32>
    %470 = vector.broadcast %469 : vector<4x1xf32> to vector<4x32xf32>
    %471 = arith.subf %465, %470 : vector<4x32xf32>
    %472 = arith.mulf %471, %471 : vector<4x32xf32>
    %cst_236 = arith.constant dense<0.000000e+00> : vector<4xf32>
    %473 = vector.multi_reduction <add>, %472, %cst_236 [1] : vector<4x32xf32> to vector<4xf32>
    %474 = vector.shape_cast %473 : vector<4xf32> to vector<4x1xf32>
    %cst_237 = arith.constant 3.200000e+01 : f32
    %475 = vector.broadcast %cst_237 : f32 to vector<4x1xf32>
    %476 = arith.divf %474, %475 : vector<4x1xf32>
    %477 = vector.broadcast %469 : vector<4x1xf32> to vector<4x32xf32>
    %478 = arith.subf %465, %477 : vector<4x32xf32>
    %cst_238 = arith.constant 9.99999974E-6 : f32
    %479 = vector.broadcast %cst_238 : f32 to vector<4x1xf32>
    %480 = arith.addf %476, %479 : vector<4x1xf32>
    %481 = math.rsqrt %480 : vector<4x1xf32>
    %482 = vector.broadcast %481 : vector<4x1xf32> to vector<4x32xf32>
    %483 = arith.mulf %478, %482 : vector<4x32xf32>
    %484 = vector.broadcast %357 : vector<1x32xf32> to vector<4x32xf32>
    %485 = arith.mulf %483, %484 : vector<4x32xf32>
    %486 = vector.broadcast %359 : vector<1x32xf32> to vector<4x32xf32>
    %487 = arith.addf %485, %486 : vector<4x32xf32>
    %c1_239 = arith.constant 1 : index
    %c0_240 = arith.constant 0 : index
    %c0_241 = arith.constant 0 : index
    %488 = vector.load %arg7[%c1_239, %c0_240, %c0_241] : memref<2x32x512xf32, #tpu.memory_space<vmem>>, vector<1x32x96xf32>
    %489 = vector.shape_cast %488 : vector<1x32x96xf32> to vector<32x96xf32>
    %c1_242 = arith.constant 1 : index
    %c0_243 = arith.constant 0 : index
    %c128_244 = arith.constant 128 : index
    %490 = vector.load %arg7[%c1_242, %c0_243, %c128_244] : memref<2x32x512xf32, #tpu.memory_space<vmem>>, vector<1x32x32xf32>
    %491 = vector.shape_cast %490 : vector<1x32x32xf32> to vector<32x32xf32>
    %c1_245 = arith.constant 1 : index
    %c0_246 = arith.constant 0 : index
    %c256_247 = arith.constant 256 : index
    %492 = vector.load %arg7[%c1_245, %c0_246, %c256_247] : memref<2x32x512xf32, #tpu.memory_space<vmem>>, vector<1x32x32xf32>
    %493 = vector.shape_cast %492 : vector<1x32x32xf32> to vector<32x32xf32>
    %c1_248 = arith.constant 1 : index
    %c0_249 = arith.constant 0 : index
    %c384_250 = arith.constant 384 : index
    %494 = vector.load %arg7[%c1_248, %c0_249, %c384_250] : memref<2x32x512xf32, #tpu.memory_space<vmem>>, vector<1x32x32xf32>
    %495 = vector.shape_cast %494 : vector<1x32x32xf32> to vector<32x32xf32>
    %c1_251 = arith.constant 1 : index
    %c0_252 = arith.constant 0 : index
    %c0_253 = arith.constant 0 : index
    %496 = vector.load %arg8[%c1_251, %c0_252, %c0_253] : memref<2x8x128xf32, #tpu.memory_space<vmem>>, vector<1x1x96xf32>
    %497 = vector.shape_cast %496 : vector<1x1x96xf32> to vector<1x96xf32>
    %c1_254 = arith.constant 1 : index
    %c1_255 = arith.constant 1 : index
    %c0_256 = arith.constant 0 : index
    %498 = vector.load %arg8[%c1_254, %c1_255, %c0_256] : memref<2x8x128xf32, #tpu.memory_space<vmem>>, vector<1x1x32xf32>
    %499 = vector.shape_cast %498 : vector<1x1x32xf32> to vector<1x32xf32>
    %c1_257 = arith.constant 1 : index
    %c2_258 = arith.constant 2 : index
    %c0_259 = arith.constant 0 : index
    %500 = vector.load %arg8[%c1_257, %c2_258, %c0_259] : memref<2x8x128xf32, #tpu.memory_space<vmem>>, vector<1x1x32xf32>
    %501 = vector.shape_cast %500 : vector<1x1x32xf32> to vector<1x32xf32>
    %c1_260 = arith.constant 1 : index
    %c3_261 = arith.constant 3 : index
    %c0_262 = arith.constant 0 : index
    %502 = vector.load %arg8[%c1_260, %c3_261, %c0_262] : memref<2x8x128xf32, #tpu.memory_space<vmem>>, vector<1x1x32xf32>
    %503 = vector.shape_cast %502 : vector<1x1x32xf32> to vector<1x32xf32>
    %c1_263 = arith.constant 1 : index
    %c4_264 = arith.constant 4 : index
    %c0_265 = arith.constant 0 : index
    %504 = vector.load %arg8[%c1_263, %c4_264, %c0_265] : memref<2x8x128xf32, #tpu.memory_space<vmem>>, vector<1x1x32xf32>
    %505 = vector.shape_cast %504 : vector<1x1x32xf32> to vector<1x32xf32>
    %c1_266 = arith.constant 1 : index
    %c5_267 = arith.constant 5 : index
    %c0_268 = arith.constant 0 : index
    %506 = vector.load %arg8[%c1_266, %c5_267, %c0_268] : memref<2x8x128xf32, #tpu.memory_space<vmem>>, vector<1x1x32xf32>
    %507 = vector.shape_cast %506 : vector<1x1x32xf32> to vector<1x32xf32>
    %c1_269 = arith.constant 1 : index
    %c6_270 = arith.constant 6 : index
    %c0_271 = arith.constant 0 : index
    %508 = vector.load %arg8[%c1_269, %c6_270, %c0_271] : memref<2x8x128xf32, #tpu.memory_space<vmem>>, vector<1x1x32xf32>
    %509 = vector.shape_cast %508 : vector<1x1x32xf32> to vector<1x32xf32>
    %c1_272 = arith.constant 1 : index
    %c7_273 = arith.constant 7 : index
    %c0_274 = arith.constant 0 : index
    %510 = vector.load %arg8[%c1_272, %c7_273, %c0_274] : memref<2x8x128xf32, #tpu.memory_space<vmem>>, vector<1x1x32xf32>
    %511 = vector.shape_cast %510 : vector<1x1x32xf32> to vector<1x32xf32>
    %cst_275 = arith.constant dense<0.000000e+00> : vector<4x96xf32>
    %512 = tpu.matmul %487, %489, %cst_275 {dimension_numbers = #tpu.dot_dimension_numbers<[1], [0], [0], [1], [0, 0, 1, 1], [], []>} : vector<4x32xf32>, vector<32x96xf32>, vector<4x96xf32> -> vector<4x96xf32>
    %513 = vector.broadcast %497 : vector<1x96xf32> to vector<4x96xf32>
    %514 = arith.addf %512, %513 : vector<4x96xf32>
    %515 = vector.extract_strided_slice %514 {offsets = [0, 0], sizes = [4, 32], strides = [1, 1]} : vector<4x96xf32> to vector<4x32xf32>
    %516 = vector.extract_strided_slice %514 {offsets = [0, 32], sizes = [4, 32], strides = [1, 1]} : vector<4x96xf32> to vector<4x32xf32>
    %517 = vector.extract_strided_slice %514 {offsets = [0, 64], sizes = [4, 32], strides = [1, 1]} : vector<4x96xf32> to vector<4x32xf32>
    %518 = vector.extract_strided_slice %515 {offsets = [0, 0], sizes = [4, 8], strides = [1, 1]} : vector<4x32xf32> to vector<4x8xf32>
    %519 = vector.extract_strided_slice %516 {offsets = [0, 0], sizes = [4, 8], strides = [1, 1]} : vector<4x32xf32> to vector<4x8xf32>
    %520 = vector.extract_strided_slice %517 {offsets = [0, 0], sizes = [4, 8], strides = [1, 1]} : vector<4x32xf32> to vector<4x8xf32>
    %cst_276 = arith.constant dense<0.000000e+00> : vector<4x4xf32>
    %521 = tpu.matmul %518, %519, %cst_276 {dimension_numbers = #tpu.dot_dimension_numbers<[1], [1], [0], [0], [0, 0, 1, 0], [], []>} : vector<4x8xf32>, vector<4x8xf32>, vector<4x4xf32> -> vector<4x4xf32>
    %cst_277 = arith.constant 0.353553385 : f32
    %522 = vector.broadcast %cst_277 : f32 to vector<4x4xf32>
    %523 = arith.mulf %521, %522 : vector<4x4xf32>
    %cst_278 = arith.constant dense<0xFF800000> : vector<4xf32>
    %524 = vector.multi_reduction <maximumf>, %523, %cst_278 [1] : vector<4x4xf32> to vector<4xf32>
    %525 = vector.shape_cast %524 : vector<4xf32> to vector<4x1xf32>
    %526 = vector.broadcast %525 : vector<4x1xf32> to vector<4x4xf32>
    %527 = arith.subf %523, %526 : vector<4x4xf32>
    %528 = math.exp %527 : vector<4x4xf32>
    %cst_279 = arith.constant dense<0.000000e+00> : vector<4xf32>
    %529 = vector.multi_reduction <add>, %528, %cst_279 [1] : vector<4x4xf32> to vector<4xf32>
    %530 = vector.shape_cast %529 : vector<4xf32> to vector<4x1xf32>
    %531 = vector.broadcast %530 : vector<4x1xf32> to vector<4x4xf32>
    %532 = arith.divf %528, %531 : vector<4x4xf32>
    %c0_280 = arith.constant 0 : index
    %c0_281 = arith.constant 0 : index
    %c0_282 = arith.constant 0 : index
    %c0_283 = arith.constant 0 : index
    %533 = vector.load %arg18[%c0_280, %c0_281, %c0_282, %c0_283] : memref<1x4x4x4xf32, #tpu.memory_space<vmem>>, vector<1x1x4x4xf32>
    %534 = vector.shape_cast %533 : vector<1x1x4x4xf32> to vector<4x4xf32>
    %535 = vector.shape_cast %532 : vector<4x4xf32> to vector<1x1x4x4xf32>
    tpu.vector_store %arg18[%c0_280, %c0_281, %c0_282, %c0_283], %535 {strides = array<i32>} : memref<1x4x4x4xf32, #tpu.memory_space<vmem>>, vector<1x1x4x4xf32>,
    %cst_284 = arith.constant dense<0.000000e+00> : vector<4x8xf32>
    %536 = tpu.matmul %532, %520, %cst_284 {dimension_numbers = #tpu.dot_dimension_numbers<[1], [0], [0], [1], [0, 0, 1, 1], [], []>} : vector<4x4xf32>, vector<4x8xf32>, vector<4x8xf32> -> vector<4x8xf32>
    %537 = vector.extract_strided_slice %515 {offsets = [0, 8], sizes = [4, 8], strides = [1, 1]} : vector<4x32xf32> to vector<4x8xf32>
    %538 = vector.extract_strided_slice %516 {offsets = [0, 8], sizes = [4, 8], strides = [1, 1]} : vector<4x32xf32> to vector<4x8xf32>
    %539 = vector.extract_strided_slice %517 {offsets = [0, 8], sizes = [4, 8], strides = [1, 1]} : vector<4x32xf32> to vector<4x8xf32>
    %cst_285 = arith.constant dense<0.000000e+00> : vector<4x4xf32>
    %540 = tpu.matmul %537, %538, %cst_285 {dimension_numbers = #tpu.dot_dimension_numbers<[1], [1], [0], [0], [0, 0, 1, 0], [], []>} : vector<4x8xf32>, vector<4x8xf32>, vector<4x4xf32> -> vector<4x4xf32>
    %cst_286 = arith.constant 0.353553385 : f32
    %541 = vector.broadcast %cst_286 : f32 to vector<4x4xf32>
    %542 = arith.mulf %540, %541 : vector<4x4xf32>
    %cst_287 = arith.constant dense<0xFF800000> : vector<4xf32>
    %543 = vector.multi_reduction <maximumf>, %542, %cst_287 [1] : vector<4x4xf32> to vector<4xf32>
    %544 = vector.shape_cast %543 : vector<4xf32> to vector<4x1xf32>
    %545 = vector.broadcast %544 : vector<4x1xf32> to vector<4x4xf32>
    %546 = arith.subf %542, %545 : vector<4x4xf32>
    %547 = math.exp %546 : vector<4x4xf32>
    %cst_288 = arith.constant dense<0.000000e+00> : vector<4xf32>
    %548 = vector.multi_reduction <add>, %547, %cst_288 [1] : vector<4x4xf32> to vector<4xf32>
    %549 = vector.shape_cast %548 : vector<4xf32> to vector<4x1xf32>
    %550 = vector.broadcast %549 : vector<4x1xf32> to vector<4x4xf32>
    %551 = arith.divf %547, %550 : vector<4x4xf32>
    %c0_289 = arith.constant 0 : index
    %c1_290 = arith.constant 1 : index
    %c0_291 = arith.constant 0 : index
    %c0_292 = arith.constant 0 : index
    %552 = vector.load %arg18[%c0_289, %c1_290, %c0_291, %c0_292] : memref<1x4x4x4xf32, #tpu.memory_space<vmem>>, vector<1x1x4x4xf32>
    %553 = vector.shape_cast %552 : vector<1x1x4x4xf32> to vector<4x4xf32>
    %554 = vector.shape_cast %551 : vector<4x4xf32> to vector<1x1x4x4xf32>
    tpu.vector_store %arg18[%c0_289, %c1_290, %c0_291, %c0_292], %554 {strides = array<i32>} : memref<1x4x4x4xf32, #tpu.memory_space<vmem>>, vector<1x1x4x4xf32>,
    %cst_293 = arith.constant dense<0.000000e+00> : vector<4x8xf32>
    %555 = tpu.matmul %551, %539, %cst_293 {dimension_numbers = #tpu.dot_dimension_numbers<[1], [0], [0], [1], [0, 0, 1, 1], [], []>} : vector<4x4xf32>, vector<4x8xf32>, vector<4x8xf32> -> vector<4x8xf32>
    %556 = vector.extract_strided_slice %515 {offsets = [0, 16], sizes = [4, 8], strides = [1, 1]} : vector<4x32xf32> to vector<4x8xf32>
    %557 = vector.extract_strided_slice %516 {offsets = [0, 16], sizes = [4, 8], strides = [1, 1]} : vector<4x32xf32> to vector<4x8xf32>
    %558 = vector.extract_strided_slice %517 {offsets = [0, 16], sizes = [4, 8], strides = [1, 1]} : vector<4x32xf32> to vector<4x8xf32>
    %cst_294 = arith.constant dense<0.000000e+00> : vector<4x4xf32>
    %559 = tpu.matmul %556, %557, %cst_294 {dimension_numbers = #tpu.dot_dimension_numbers<[1], [1], [0], [0], [0, 0, 1, 0], [], []>} : vector<4x8xf32>, vector<4x8xf32>, vector<4x4xf32> -> vector<4x4xf32>
    %cst_295 = arith.constant 0.353553385 : f32
    %560 = vector.broadcast %cst_295 : f32 to vector<4x4xf32>
    %561 = arith.mulf %559, %560 : vector<4x4xf32>
    %cst_296 = arith.constant dense<0xFF800000> : vector<4xf32>
    %562 = vector.multi_reduction <maximumf>, %561, %cst_296 [1] : vector<4x4xf32> to vector<4xf32>
    %563 = vector.shape_cast %562 : vector<4xf32> to vector<4x1xf32>
    %564 = vector.broadcast %563 : vector<4x1xf32> to vector<4x4xf32>
    %565 = arith.subf %561, %564 : vector<4x4xf32>
    %566 = math.exp %565 : vector<4x4xf32>
    %cst_297 = arith.constant dense<0.000000e+00> : vector<4xf32>
    %567 = vector.multi_reduction <add>, %566, %cst_297 [1] : vector<4x4xf32> to vector<4xf32>
    %568 = vector.shape_cast %567 : vector<4xf32> to vector<4x1xf32>
    %569 = vector.broadcast %568 : vector<4x1xf32> to vector<4x4xf32>
    %570 = arith.divf %566, %569 : vector<4x4xf32>
    %c0_298 = arith.constant 0 : index
    %c2_299 = arith.constant 2 : index
    %c0_300 = arith.constant 0 : index
    %c0_301 = arith.constant 0 : index
    %571 = vector.load %arg18[%c0_298, %c2_299, %c0_300, %c0_301] : memref<1x4x4x4xf32, #tpu.memory_space<vmem>>, vector<1x1x4x4xf32>
    %572 = vector.shape_cast %571 : vector<1x1x4x4xf32> to vector<4x4xf32>
    %573 = vector.shape_cast %570 : vector<4x4xf32> to vector<1x1x4x4xf32>
    tpu.vector_store %arg18[%c0_298, %c2_299, %c0_300, %c0_301], %573 {strides = array<i32>} : memref<1x4x4x4xf32, #tpu.memory_space<vmem>>, vector<1x1x4x4xf32>,
    %cst_302 = arith.constant dense<0.000000e+00> : vector<4x8xf32>
    %574 = tpu.matmul %570, %558, %cst_302 {dimension_numbers = #tpu.dot_dimension_numbers<[1], [0], [0], [1], [0, 0, 1, 1], [], []>} : vector<4x4xf32>, vector<4x8xf32>, vector<4x8xf32> -> vector<4x8xf32>
    %575 = vector.extract_strided_slice %515 {offsets = [0, 24], sizes = [4, 8], strides = [1, 1]} : vector<4x32xf32> to vector<4x8xf32>
    %576 = vector.extract_strided_slice %516 {offsets = [0, 24], sizes = [4, 8], strides = [1, 1]} : vector<4x32xf32> to vector<4x8xf32>
    %577 = vector.extract_strided_slice %517 {offsets = [0, 24], sizes = [4, 8], strides = [1, 1]} : vector<4x32xf32> to vector<4x8xf32>
    %cst_303 = arith.constant dense<0.000000e+00> : vector<4x4xf32>
    %578 = tpu.matmul %575, %576, %cst_303 {dimension_numbers = #tpu.dot_dimension_numbers<[1], [1], [0], [0], [0, 0, 1, 0], [], []>} : vector<4x8xf32>, vector<4x8xf32>, vector<4x4xf32> -> vector<4x4xf32>
    %cst_304 = arith.constant 0.353553385 : f32
    %579 = vector.broadcast %cst_304 : f32 to vector<4x4xf32>
    %580 = arith.mulf %578, %579 : vector<4x4xf32>
    %cst_305 = arith.constant dense<0xFF800000> : vector<4xf32>
    %581 = vector.multi_reduction <maximumf>, %580, %cst_305 [1] : vector<4x4xf32> to vector<4xf32>
    %582 = vector.shape_cast %581 : vector<4xf32> to vector<4x1xf32>
    %583 = vector.broadcast %582 : vector<4x1xf32> to vector<4x4xf32>
    %584 = arith.subf %580, %583 : vector<4x4xf32>
    %585 = math.exp %584 : vector<4x4xf32>
    %cst_306 = arith.constant dense<0.000000e+00> : vector<4xf32>
    %586 = vector.multi_reduction <add>, %585, %cst_306 [1] : vector<4x4xf32> to vector<4xf32>
    %587 = vector.shape_cast %586 : vector<4xf32> to vector<4x1xf32>
    %588 = vector.broadcast %587 : vector<4x1xf32> to vector<4x4xf32>
    %589 = arith.divf %585, %588 : vector<4x4xf32>
    %c0_307 = arith.constant 0 : index
    %c3_308 = arith.constant 3 : index
    %c0_309 = arith.constant 0 : index
    %c0_310 = arith.constant 0 : index
    %590 = vector.load %arg18[%c0_307, %c3_308, %c0_309, %c0_310] : memref<1x4x4x4xf32, #tpu.memory_space<vmem>>, vector<1x1x4x4xf32>
    %591 = vector.shape_cast %590 : vector<1x1x4x4xf32> to vector<4x4xf32>
    %592 = vector.shape_cast %589 : vector<4x4xf32> to vector<1x1x4x4xf32>
    tpu.vector_store %arg18[%c0_307, %c3_308, %c0_309, %c0_310], %592 {strides = array<i32>} : memref<1x4x4x4xf32, #tpu.memory_space<vmem>>, vector<1x1x4x4xf32>,
    %cst_311 = arith.constant dense<0.000000e+00> : vector<4x8xf32>
    %593 = tpu.matmul %589, %577, %cst_311 {dimension_numbers = #tpu.dot_dimension_numbers<[1], [0], [0], [1], [0, 0, 1, 1], [], []>} : vector<4x4xf32>, vector<4x8xf32>, vector<4x8xf32> -> vector<4x8xf32>
    %594 = tpu.concatenate %536, %555, %574, %593 in 1 : vector<4x8xf32>, vector<4x8xf32>, vector<4x8xf32>, vector<4x8xf32> -> vector<4x32xf32>
    %cst_312 = arith.constant dense<0.000000e+00> : vector<4x32xf32>
    %595 = tpu.matmul %594, %491, %cst_312 {dimension_numbers = #tpu.dot_dimension_numbers<[1], [0], [0], [1], [0, 0, 1, 1], [], []>} : vector<4x32xf32>, vector<32x32xf32>, vector<4x32xf32> -> vector<4x32xf32>
    %596 = vector.broadcast %499 : vector<1x32xf32> to vector<4x32xf32>
    %597 = arith.addf %595, %596 : vector<4x32xf32>
    %598 = arith.addf %597, %487 : vector<4x32xf32>
    %cst_313 = arith.constant dense<0.000000e+00> : vector<4xf32>
    %599 = vector.multi_reduction <add>, %598, %cst_313 [1] : vector<4x32xf32> to vector<4xf32>
    %600 = vector.shape_cast %599 : vector<4xf32> to vector<4x1xf32>
    %cst_314 = arith.constant 3.200000e+01 : f32
    %601 = vector.broadcast %cst_314 : f32 to vector<4x1xf32>
    %602 = arith.divf %600, %601 : vector<4x1xf32>
    %603 = vector.broadcast %602 : vector<4x1xf32> to vector<4x32xf32>
    %604 = arith.subf %598, %603 : vector<4x32xf32>
    %605 = arith.mulf %604, %604 : vector<4x32xf32>
    %cst_315 = arith.constant dense<0.000000e+00> : vector<4xf32>
    %606 = vector.multi_reduction <add>, %605, %cst_315 [1] : vector<4x32xf32> to vector<4xf32>
    %607 = vector.shape_cast %606 : vector<4xf32> to vector<4x1xf32>
    %cst_316 = arith.constant 3.200000e+01 : f32
    %608 = vector.broadcast %cst_316 : f32 to vector<4x1xf32>
    %609 = arith.divf %607, %608 : vector<4x1xf32>
    %610 = vector.broadcast %602 : vector<4x1xf32> to vector<4x32xf32>
    %611 = arith.subf %598, %610 : vector<4x32xf32>
    %cst_317 = arith.constant 9.99999974E-6 : f32
    %612 = vector.broadcast %cst_317 : f32 to vector<4x1xf32>
    %613 = arith.addf %609, %612 : vector<4x1xf32>
    %614 = math.rsqrt %613 : vector<4x1xf32>
    %615 = vector.broadcast %614 : vector<4x1xf32> to vector<4x32xf32>
    %616 = arith.mulf %611, %615 : vector<4x32xf32>
    %617 = vector.broadcast %505 : vector<1x32xf32> to vector<4x32xf32>
    %618 = arith.mulf %616, %617 : vector<4x32xf32>
    %619 = vector.broadcast %507 : vector<1x32xf32> to vector<4x32xf32>
    %620 = arith.addf %618, %619 : vector<4x32xf32>
    %cst_318 = arith.constant dense<0.000000e+00> : vector<4x32xf32>
    %621 = tpu.matmul %620, %493, %cst_318 {dimension_numbers = #tpu.dot_dimension_numbers<[1], [0], [0], [1], [0, 0, 1, 1], [], []>} : vector<4x32xf32>, vector<32x32xf32>, vector<4x32xf32> -> vector<4x32xf32>
    %622 = vector.broadcast %501 : vector<1x32xf32> to vector<4x32xf32>
    %623 = arith.addf %621, %622 : vector<4x32xf32>
    %cst_319 = arith.constant 0.000000e+00 : f32
    %624 = vector.broadcast %cst_319 : f32 to vector<4x32xf32>
    %625 = arith.maximumf %623, %624 : vector<4x32xf32>
    %cst_320 = arith.constant dense<0.000000e+00> : vector<4x32xf32>
    %626 = tpu.matmul %625, %495, %cst_320 {dimension_numbers = #tpu.dot_dimension_numbers<[1], [0], [0], [1], [0, 0, 1, 1], [], []>} : vector<4x32xf32>, vector<32x32xf32>, vector<4x32xf32> -> vector<4x32xf32>
    %627 = vector.broadcast %503 : vector<1x32xf32> to vector<4x32xf32>
    %628 = arith.addf %626, %627 : vector<4x32xf32>
    %629 = arith.addf %628, %620 : vector<4x32xf32>
    %cst_321 = arith.constant dense<0.000000e+00> : vector<4xf32>
    %630 = vector.multi_reduction <add>, %629, %cst_321 [1] : vector<4x32xf32> to vector<4xf32>
    %631 = vector.shape_cast %630 : vector<4xf32> to vector<4x1xf32>
    %cst_322 = arith.constant 3.200000e+01 : f32
    %632 = vector.broadcast %cst_322 : f32 to vector<4x1xf32>
    %633 = arith.divf %631, %632 : vector<4x1xf32>
    %634 = vector.broadcast %633 : vector<4x1xf32> to vector<4x32xf32>
    %635 = arith.subf %629, %634 : vector<4x32xf32>
    %636 = arith.mulf %635, %635 : vector<4x32xf32>
    %cst_323 = arith.constant dense<0.000000e+00> : vector<4xf32>
    %637 = vector.multi_reduction <add>, %636, %cst_323 [1] : vector<4x32xf32> to vector<4xf32>
    %638 = vector.shape_cast %637 : vector<4xf32> to vector<4x1xf32>
    %cst_324 = arith.constant 3.200000e+01 : f32
    %639 = vector.broadcast %cst_324 : f32 to vector<4x1xf32>
    %640 = arith.divf %638, %639 : vector<4x1xf32>
    %641 = vector.broadcast %633 : vector<4x1xf32> to vector<4x32xf32>
    %642 = arith.subf %629, %641 : vector<4x32xf32>
    %cst_325 = arith.constant 9.99999974E-6 : f32
    %643 = vector.broadcast %cst_325 : f32 to vector<4x1xf32>
    %644 = arith.addf %640, %643 : vector<4x1xf32>
    %645 = math.rsqrt %644 : vector<4x1xf32>
    %646 = vector.broadcast %645 : vector<4x1xf32> to vector<4x32xf32>
    %647 = arith.mulf %642, %646 : vector<4x32xf32>
    %648 = vector.broadcast %509 : vector<1x32xf32> to vector<4x32xf32>
    %649 = arith.mulf %647, %648 : vector<4x32xf32>
    %650 = vector.broadcast %511 : vector<1x32xf32> to vector<4x32xf32>
    %651 = arith.addf %649, %650 : vector<4x32xf32>
    %c0_326 = arith.constant 0 : index
    %c0_327 = arith.constant 0 : index
    %652 = vector.load %arg11[%c0_326, %c0_327] : memref<6x1xf32, #tpu.memory_space<vmem>>, vector<6x1xf32>
    %653 = vector.shape_cast %335 : vector<8x32xf32> to vector<1x8x32xf32>
    %c0_328 = arith.constant 0 : index
    %c0_329 = arith.constant 0 : index
    %c0_330 = arith.constant 0 : index
    %654 = vector.load %arg9[%c0_328, %c0_329, %c0_330] : memref<6x8x32xf32, #tpu.memory_space<vmem>>, vector<6x8x32xf32>
    %655 = vector.broadcast %653 : vector<1x8x32xf32> to vector<6x8x32xf32>
    %656 = arith.mulf %655, %654 : vector<6x8x32xf32>
    %cst_331 = arith.constant dense<0.000000e+00> : vector<6x8xf32>
    %657 = vector.multi_reduction <add>, %656, %cst_331 [2] : vector<6x8x32xf32> to vector<6x8xf32>
    %cst_332 = arith.constant dense<0.000000e+00> : vector<6xf32>
    %658 = vector.multi_reduction <add>, %657, %cst_332 [1] : vector<6x8xf32> to vector<6xf32>
    %659 = vector.shape_cast %658 : vector<6xf32> to vector<6x1xf32>
    %660 = vector.shape_cast %651 : vector<4x32xf32> to vector<1x4x32xf32>
    %c0_333 = arith.constant 0 : index
    %c0_334 = arith.constant 0 : index
    %c0_335 = arith.constant 0 : index
    %661 = vector.load %arg10[%c0_333, %c0_334, %c0_335] : memref<6x4x32xf32, #tpu.memory_space<vmem>>, vector<6x4x32xf32>
    %662 = vector.broadcast %660 : vector<1x4x32xf32> to vector<6x4x32xf32>
    %663 = arith.mulf %662, %661 : vector<6x4x32xf32>
    %cst_336 = arith.constant dense<0.000000e+00> : vector<6x4xf32>
    %664 = vector.multi_reduction <add>, %663, %cst_336 [2] : vector<6x4x32xf32> to vector<6x4xf32>
    %cst_337 = arith.constant dense<0.000000e+00> : vector<6xf32>
    %665 = vector.multi_reduction <add>, %664, %cst_337 [1] : vector<6x4xf32> to vector<6xf32>
    %666 = vector.shape_cast %665 : vector<6xf32> to vector<6x1xf32>
    %667 = vector.extract_strided_slice %659 {offsets = [0, 0], sizes = [2, 1], strides = [1, 1]} : vector<6x1xf32> to vector<2x1xf32>
    %668 = vector.extract_strided_slice %666 {offsets = [0, 0], sizes = [2, 1], strides = [1, 1]} : vector<6x1xf32> to vector<2x1xf32>
    %669 = arith.addf %667, %668 : vector<2x1xf32>
    %670 = vector.extract_strided_slice %652 {offsets = [0, 0], sizes = [2, 1], strides = [1, 1]} : vector<6x1xf32> to vector<2x1xf32>
    %671 = arith.addf %669, %670 : vector<2x1xf32>
    %cst_338 = arith.constant dense<0xFF800000> : vector<1xf32>
    %672 = vector.multi_reduction <maximumf>, %671, %cst_338 [0] : vector<2x1xf32> to vector<1xf32>
    %673 = vector.shape_cast %672 : vector<1xf32> to vector<1x1xf32>
    %674 = vector.broadcast %673 : vector<1x1xf32> to vector<2x1xf32>
    %675 = arith.subf %671, %674 : vector<2x1xf32>
    %676 = math.exp %675 : vector<2x1xf32>
    %cst_339 = arith.constant dense<0.000000e+00> : vector<1xf32>
    %677 = vector.multi_reduction <add>, %676, %cst_339 [0] : vector<2x1xf32> to vector<1xf32>
    %678 = vector.shape_cast %677 : vector<1xf32> to vector<1x1xf32>
    %679 = vector.broadcast %678 : vector<1x1xf32> to vector<2x1xf32>
    %680 = arith.divf %676, %679 : vector<2x1xf32>
    %c0_340 = arith.constant 0 : index
    %c0_341 = arith.constant 0 : index
    %c0_342 = arith.constant 0 : index
    %681 = vector.load %arg13[%c0_340, %c0_341, %c0_342] : memref<1x2x1xf32, #tpu.memory_space<vmem>>, vector<1x2x1xf32>
    %682 = vector.shape_cast %681 : vector<1x2x1xf32> to vector<2x1xf32>
    %683 = vector.shape_cast %680 : vector<2x1xf32> to vector<1x2x1xf32>
    tpu.vector_store %arg13[%c0_340, %c0_341, %c0_342], %683 {strides = array<i32>} : memref<1x2x1xf32, #tpu.memory_space<vmem>>, vector<1x2x1xf32>,
    %684 = vector.extract_strided_slice %680 {offsets = [0, 0], sizes = [1, 1], strides = [1, 1]} : vector<2x1xf32> to vector<1x1xf32>
    %685 = vector.extract_strided_slice %659 {offsets = [2, 0], sizes = [4, 1], strides = [1, 1]} : vector<6x1xf32> to vector<4x1xf32>
    %686 = vector.broadcast %684 : vector<1x1xf32> to vector<4x1xf32>
    %687 = arith.mulf %686, %685 : vector<4x1xf32>
    %688 = vector.extract_strided_slice %680 {offsets = [1, 0], sizes = [1, 1], strides = [1, 1]} : vector<2x1xf32> to vector<1x1xf32>
    %689 = vector.extract_strided_slice %666 {offsets = [2, 0], sizes = [4, 1], strides = [1, 1]} : vector<6x1xf32> to vector<4x1xf32>
    %690 = vector.broadcast %688 : vector<1x1xf32> to vector<4x1xf32>
    %691 = arith.mulf %690, %689 : vector<4x1xf32>
    %692 = arith.addf %687, %691 : vector<4x1xf32>
    %693 = vector.extract_strided_slice %652 {offsets = [2, 0], sizes = [4, 1], strides = [1, 1]} : vector<6x1xf32> to vector<4x1xf32>
    %694 = arith.addf %692, %693 : vector<4x1xf32>
    %c0_343 = arith.constant 0 : index
    %c0_344 = arith.constant 0 : index
    %c0_345 = arith.constant 0 : index
    %695 = vector.load %arg12[%c0_343, %c0_344, %c0_345] : memref<1x4x1xf32, #tpu.memory_space<vmem>>, vector<1x4x1xf32>
    %696 = vector.shape_cast %695 : vector<1x4x1xf32> to vector<4x1xf32>
    %697 = vector.shape_cast %694 : vector<4x1xf32> to vector<1x4x1xf32>
    tpu.vector_store %arg12[%c0_343, %c0_344, %c0_345], %697 {strides = array<i32>} : memref<1x4x1xf32, #tpu.memory_space<vmem>>, vector<1x4x1xf32>,
    %698 = vector.extract_strided_slice %680 {offsets = [0, 0], sizes = [1, 1], strides = [1, 1]} : vector<2x1xf32> to vector<1x1xf32>
    %699 = vector.broadcast %698 : vector<1x1xf32> to vector<8x32xf32>
    %700 = arith.mulf %335, %699 : vector<8x32xf32>
    %c0_346 = arith.constant 0 : index
    %c0_347 = arith.constant 0 : index
    %c0_348 = arith.constant 0 : index
    %701 = vector.load %arg14[%c0_346, %c0_347, %c0_348] : memref<1x12x32xf32, #tpu.memory_space<vmem>>, vector<1x8x32xf32>
    %702 = vector.shape_cast %701 : vector<1x8x32xf32> to vector<8x32xf32>
    %703 = vector.shape_cast %700 : vector<8x32xf32> to vector<1x8x32xf32>
    tpu.vector_store %arg14[%c0_346, %c0_347, %c0_348], %703 {strides = array<i32>} : memref<1x12x32xf32, #tpu.memory_space<vmem>>, vector<1x8x32xf32>,
    %704 = vector.extract_strided_slice %680 {offsets = [1, 0], sizes = [1, 1], strides = [1, 1]} : vector<2x1xf32> to vector<1x1xf32>
    %705 = vector.broadcast %704 : vector<1x1xf32> to vector<4x32xf32>
    %706 = arith.mulf %651, %705 : vector<4x32xf32>
    %c0_349 = arith.constant 0 : index
    %c8 = arith.constant 8 : index
    %c0_350 = arith.constant 0 : index
    %707 = vector.load %arg14[%c0_349, %c8, %c0_350] : memref<1x12x32xf32, #tpu.memory_space<vmem>>, vector<1x4x32xf32>
    %708 = vector.shape_cast %707 : vector<1x4x32xf32> to vector<4x32xf32>
    %709 = vector.shape_cast %706 : vector<4x32xf32> to vector<1x4x32xf32>
    tpu.vector_store %arg14[%c0_349, %c8, %c0_350], %709 {strides = array<i32>} : memref<1x12x32xf32, #tpu.memory_space<vmem>>, vector<1x4x32xf32>,
    return
  }
  func.func @transform_0(%arg0: i32) -> (i32, i32, i32) {
    %c0_i32 = arith.constant 0 : i32
    %c0_i32_0 = arith.constant 0 : i32
    %c0_i32_1 = arith.constant 0 : i32
    return %arg0, %c0_i32, %c0_i32_0 : i32, i32, i32
  }
  func.func @transform_1(%arg0: i32) -> (i32, i32, i32) {
    %c0_i32 = arith.constant 0 : i32
    %c0_i32_0 = arith.constant 0 : i32
    %c0_i32_1 = arith.constant 0 : i32
    return %arg0, %c0_i32, %c0_i32_0 : i32, i32, i32
  }
  func.func @transform_2(%arg0: i32) -> (i32, i32) {
    %c0_i32 = arith.constant 0 : i32
    %c0_i32_0 = arith.constant 0 : i32
    %c0_i32_1 = arith.constant 0 : i32
    return %c0_i32, %c0_i32_0 : i32, i32
  }
  func.func @transform_3(%arg0: i32) -> (i32, i32) {
    %c0_i32 = arith.constant 0 : i32
    %c0_i32_0 = arith.constant 0 : i32
    %c0_i32_1 = arith.constant 0 : i32
    return %c0_i32, %c0_i32_0 : i32, i32
  }
  func.func @transform_4(%arg0: i32) -> (i32, i32, i32) {
    %c0_i32 = arith.constant 0 : i32
    %c0_i32_0 = arith.constant 0 : i32
    %c0_i32_1 = arith.constant 0 : i32
    %c0_i32_2 = arith.constant 0 : i32
    return %c0_i32, %c0_i32_0, %c0_i32_1 : i32, i32, i32
  }
  func.func @transform_5(%arg0: i32) -> (i32, i32, i32) {
    %c0_i32 = arith.constant 0 : i32
    %c0_i32_0 = arith.constant 0 : i32
    %c0_i32_1 = arith.constant 0 : i32
    %c0_i32_2 = arith.constant 0 : i32
    return %c0_i32, %c0_i32_0, %c0_i32_1 : i32, i32, i32
  }
  func.func @transform_6(%arg0: i32) -> (i32, i32, i32) {
    %c0_i32 = arith.constant 0 : i32
    %c0_i32_0 = arith.constant 0 : i32
    %c0_i32_1 = arith.constant 0 : i32
    %c0_i32_2 = arith.constant 0 : i32
    return %c0_i32, %c0_i32_0, %c0_i32_1 : i32, i32, i32
  }
  func.func @transform_7(%arg0: i32) -> (i32, i32, i32) {
    %c0_i32 = arith.constant 0 : i32
    %c0_i32_0 = arith.constant 0 : i32
    %c0_i32_1 = arith.constant 0 : i32
    %c0_i32_2 = arith.constant 0 : i32
    return %c0_i32, %c0_i32_0, %c0_i32_1 : i32, i32, i32
  }
  func.func @transform_8(%arg0: i32) -> (i32, i32, i32) {
    %c0_i32 = arith.constant 0 : i32
    %c0_i32_0 = arith.constant 0 : i32
    %c0_i32_1 = arith.constant 0 : i32
    %c0_i32_2 = arith.constant 0 : i32
    return %c0_i32, %c0_i32_0, %c0_i32_1 : i32, i32, i32
  }
  func.func @transform_9(%arg0: i32) -> (i32, i32, i32) {
    %c0_i32 = arith.constant 0 : i32
    %c0_i32_0 = arith.constant 0 : i32
    %c0_i32_1 = arith.constant 0 : i32
    %c0_i32_2 = arith.constant 0 : i32
    return %c0_i32, %c0_i32_0, %c0_i32_1 : i32, i32, i32
  }
  func.func @transform_10(%arg0: i32) -> (i32, i32) {
    %c0_i32 = arith.constant 0 : i32
    %c0_i32_0 = arith.constant 0 : i32
    %c0_i32_1 = arith.constant 0 : i32
    return %c0_i32, %c0_i32_0 : i32, i32
  }
  func.func @transform_11(%arg0: i32) -> (i32, i32, i32) {
    %c0_i32 = arith.constant 0 : i32
    %c0_i32_0 = arith.constant 0 : i32
    %c0_i32_1 = arith.constant 0 : i32
    return %arg0, %c0_i32, %c0_i32_0 : i32, i32, i32
  }
  func.func @transform_12(%arg0: i32) -> (i32, i32, i32) {
    %c0_i32 = arith.constant 0 : i32
    %c0_i32_0 = arith.constant 0 : i32
    %c0_i32_1 = arith.constant 0 : i32
    return %arg0, %c0_i32, %c0_i32_0 : i32, i32, i32
  }
  func.func @transform_13(%arg0: i32) -> (i32, i32, i32) {
    %c0_i32 = arith.constant 0 : i32
    %c0_i32_0 = arith.constant 0 : i32
    %c0_i32_1 = arith.constant 0 : i32
    return %arg0, %c0_i32, %c0_i32_0 : i32, i32, i32
  }
  func.func @transform_14(%arg0: i32) -> (i32, i32, i32) {
    %c0_i32 = arith.constant 0 : i32
    %c0_i32_0 = arith.constant 0 : i32
    %c0_i32_1 = arith.constant 0 : i32
    return %arg0, %c0_i32, %c0_i32_0 : i32, i32, i32
  }
  func.func @transform_15(%arg0: i32) -> (i32, i32, i32) {
    %c0_i32 = arith.constant 0 : i32
    %c0_i32_0 = arith.constant 0 : i32
    %c0_i32_1 = arith.constant 0 : i32
    return %arg0, %c0_i32, %c0_i32_0 : i32, i32, i32
  }
  func.func @transform_16(%arg0: i32) -> (i32, i32, i32, i32) {
    %c0_i32 = arith.constant 0 : i32
    %c0_i32_0 = arith.constant 0 : i32
    %c0_i32_1 = arith.constant 0 : i32
    %c0_i32_2 = arith.constant 0 : i32
    return %arg0, %c0_i32, %c0_i32_0, %c0_i32_1 : i32, i32, i32, i32
  }
  func.func @transform_17(%arg0: i32) -> (i32, i32, i32, i32) {
    %c0_i32 = arith.constant 0 : i32
    %c0_i32_0 = arith.constant 0 : i32
    %c0_i32_1 = arith.constant 0 : i32
    %c0_i32_2 = arith.constant 0 : i32
    return %arg0, %c0_i32, %c0_i32_0, %c0_i32_1 : i32, i32, i32, i32
  }
}

</mosaic_0001>

<llo_original>
// kernel: transformer_forward.1
$region0: #{transformer_forward.1}
  #allocation0 [shape = 'u32[]', space=smem, size = 0x4, offset = 0x4, fixed_abs, tag = 'smem constant byte address 0x4 - core index']
  #allocation1 [shape = 'u32[72,128]{1,0:T(1,128)}', space=vmem, size = 0x9000, scoped, tag = 'internal scratch']
  %s0 = inlined_call_operand.vmem [shape: f32[2,8,4], index: 0, kind: input, shape index: {}]
  %s1 = inlined_call_operand.vmem [shape: f32[2,4,8], index: 1, kind: input, shape index: {}]
  %s2 = inlined_call_operand.hbm [shape: f32[12,32], index: 2, kind: input, shape index: {}]
  %s3 = inlined_call_operand.vmem [shape: f32[2,32], index: 3, kind: input, shape index: {}]
  %s4 = inlined_call_operand.hbm [shape: f32[2,32,512], index: 4, kind: input, shape index: {}]
  %s5 = inlined_call_operand.hbm [shape: f32[2,8,128], index: 5, kind: input, shape index: {}]
  %s6 = inlined_call_operand.hbm [shape: f32[2,32,512], index: 6, kind: input, shape index: {}]
  %s7 = inlined_call_operand.hbm [shape: f32[2,8,128], index: 7, kind: input, shape index: {}]
  %s8 = inlined_call_operand.hbm [shape: f32[6,8,32], index: 8, kind: input, shape index: {}]
  %s9 = inlined_call_operand.vmem [shape: f32[6,4,32], index: 9, kind: input, shape index: {}]
  %s10 = inlined_call_operand.vmem [shape: f32[6,1], index: 10, kind: input, shape index: {}]
  %s11 = inlined_call_operand.vmem [shape: f32[2,4,1], index: 11, kind: output, shape index: {0}]
  %s12 = inlined_call_operand.vmem [shape: f32[2,2,1], index: 12, kind: output, shape index: {1}]
  %s13 = inlined_call_operand.vmem [shape: f32[2,12,32], index: 13, kind: output, shape index: {2}]
  %s14 = inlined_call_operand.hbm [shape: f32[2,8,32], index: 14, kind: output, shape index: {3}]
  %s15 = inlined_call_operand.hbm [shape: f32[2,4,32], index: 15, kind: output, shape index: {4}]
  %s16 = inlined_call_operand.vmem [shape: f32[2,4,8,8], index: 16, kind: output, shape index: {5}]
  %s17 = inlined_call_operand.vmem [shape: f32[2,4,4,4], index: 17, kind: output, shape index: {6}]
  %18 = xla_tuple %s11, %s12, %s13, %s14, %s15, %s16, %s17
  %s19 = sld [smem:[#allocation0]]
  $region149: #{transformer_forward.1} parent=0
    _
  %s21 = ssub.s32 1, %s19
  %s22 = scalar_select 0, %s21, %s19
  $region1: #{transformer_forward.1} parent=0
    #allocation2 [shape = 'u8[8192]{0}', space=vmem, size = 0x2000, scoped, tag = 'input window, operand 2, single buffered']
    #allocation3 [shape = 's32[2]{0}', space=sflag, size = 0x8, scoped, tag = 'scoped memory for transformer_forward.1']
    #allocation4 [shape = 's32[2]{0}', space=sflag, size = 0x8, scoped, tag = 'scoped memory for transformer_forward.1']
    #allocation5 [shape = 'u8[131072]{0}', space=vmem, size = 0x20000, scoped, tag = 'input window, operand 4, single buffered']
    #allocation6 [shape = 's32[1]{0}', space=sflag, size = 0x4, scoped, tag = 'scoped memory for transformer_forward.1']
    #allocation7 [shape = 'u8[8192]{0}', space=vmem, size = 0x2000, scoped, tag = 'input window, operand 5, single buffered']
    #allocation8 [shape = 'u8[131072]{0}', space=vmem, size = 0x20000, scoped, tag = 'input window, operand 6, single buffered']
    #allocation9 [shape = 's32[1]{0}', space=sflag, size = 0x4, scoped, tag = 'scoped memory for transformer_forward.1']
    #allocation10 [shape = 'u8[8192]{0}', space=vmem, size = 0x2000, scoped, tag = 'input window, operand 7, single buffered']
    #allocation11 [shape = 'u8[24576]{0}', space=vmem, size = 0x6000, scoped, tag = 'input window, operand 8, single buffered']
    #allocation12 [shape = 's32[1]{0}', space=sflag, size = 0x4, scoped, tag = 'scoped memory for transformer_forward.1']
    #allocation13 [shape = 'u8[8192]{0}', space=vmem, size = 0x2000, scoped, tag = 'output window, operand 3']
    #allocation14 [shape = 'u8[4096]{0}', space=vmem, size = 0x1000, scoped, tag = 'output window, operand 4']
    #allocation15 [shape = 's32[2]{0}', space=sflag, size = 0x8, scoped, tag = 'scoped memory for transformer_forward.1']
    %23 = vsyncpa [#allocation3], 0
    %24 = vsyncpa [#allocation6], 0
    %25 = vsyncpa [#allocation9], 0
    %26 = vsyncpa [#allocation12], 0
    %27 = vsyncpa [#allocation4], 0
    %s28 = scalar_lea.sflag [#allocation4], 1
    %29 = vsyncpa %s28, 0
    %30 = vsyncpa [#allocation15], 0
    %s31 = scalar_lea.sflag [#allocation15], 1
    %32 = vsyncpa %s31, 0
    loop: start=0, step=1, limit=4
    $region2: #{transformer_forward.1} parent=1 // loop_pre_header
      _
    $region3: #{transformer_forward.1} parent=1 // loop_header
      %s34 = sphi 0, %s38
      %p35 = scmp.ge.s32.totalorder %s34, 4
      %s44 = sphi 0, %s46
      %s47 = sphi 0, %s44
      %s48 = sphi 0, %s47
      %s64 = sphi 0, %s48
      %s70 = sphi 0, %s72
      %s73 = sphi 0, %s70
      %s74 = sphi 0, %s73
      %s90 = sphi 0, %s74
      %s94 = sphi 0, %s94
      %s96 = sphi 0, %s94
      %s97 = sphi 0, %s96
      %s111 = sphi 0, %s97
      %s115 = sphi 0, %s115
      %s117 = sphi 0, %s115
      %s118 = sphi 0, %s117
      %s132 = sphi 0, %s118
      %s136 = sphi 0, %s136
      %s138 = sphi 0, %s136
      %s139 = sphi 0, %s138
      %s153 = sphi 0, %s139
      %s157 = sphi 0, %s157
      %s159 = sphi 0, %s157
      %s160 = sphi 0, %s159
      %s174 = sphi 0, %s160
      %s178 = sphi 0, %s178
      %s180 = sphi 0, %s178
      %s181 = sphi 0, %s180
      %s195 = sphi 0, %s181
      %s199 = sphi 0, %s199
      %s201 = sphi 0, %s199
      %s202 = sphi 0, %s201
      %s216 = sphi 0, %s202
      %s220 = sphi 0, %s220
      %s222 = sphi 0, %s220
      %s223 = sphi 0, %s222
      %s237 = sphi 0, %s223
      %s241 = sphi 0, %s241
      %s243 = sphi 0, %s241
      %s244 = sphi 0, %s243
      %s258 = sphi 0, %s244
      %s262 = sphi 0, %s262
      %s264 = sphi 0, %s262
      %s265 = sphi 0, %s264
      %s279 = sphi 0, %s265
      %s285 = sphi 0, %s287
      %s288 = sphi 0, %s285
      %s289 = sphi 0, %s288
      %s305 = sphi 0, %s289
      %s311 = sphi 0, %s313
      %s314 = sphi 0, %s311
      %s315 = sphi 0, %s314
      %s331 = sphi 0, %s315
      %s337 = sphi 0, %s339
      %s340 = sphi 0, %s337
      %s341 = sphi 0, %s340
      %s357 = sphi 0, %s341
      %s363 = sphi 0, %s365
      %s366 = sphi 0, %s363
      %s367 = sphi 0, %s366
      %s383 = sphi 0, %s367
      %s389 = sphi 0, %s391
      %s392 = sphi 0, %s389
      %s393 = sphi 0, %s392
      %s409 = sphi 0, %s393
      %s415 = sphi 0, %s417
      %s418 = sphi 0, %s415
      %s419 = sphi 0, %s418
      %s435 = sphi 0, %s419
      %s441 = sphi 0, %s443
      %s444 = sphi 0, %s441
      %s445 = sphi 0, %s444
      %s461 = sphi 0, %s445
    $region4: #{transformer_forward.1} parent=1 // loop_header_branch
      %37 = sbr.rel (%p35) target = $region8
    $region5: #{transformer_forward.1} parent=1 // loop_body
      %s39 = ssub.s32 %s34, 1
      %s40 = ssub.s32 %s34, 2
      %s41 = sadd.s32 %s34, 1
      %s42 = ssub.s32 %s34, %s41
      %p43 = scmp.eq.s32.totalorder %s42, 0
      %s45 = sadd.s32 %s44, 1
      %s46 = scalar_select %p43, %s44, %s45
      %p49 = pneg %p43
      %p50 = scmp.eq.s32.totalorder %s34, 1
      %p51 = por %p49, %p50
      %p52 = scmp.ne.s32.totalorder %s44, %s47
      %p53 = scmp.eq.s32.totalorder %s34, 0
      %p54 = por %p52, %p53
      %p55 = scmp.ne.s32.totalorder %s44, %s47
      %p56 = scmp.eq.s32.totalorder %s39, 1
      %p57 = por %p55, %p56
      %p58 = scmp.ne.s32.totalorder %s47, %s48
      %p59 = scmp.eq.s32.totalorder %s39, 0
      %p60 = por %p58, %p59
      %p61 = scmp.ne.s32.totalorder %s47, %s48
      %p62 = scmp.eq.s32.totalorder %s40, 1
      %p63 = por %p61, %p62
      %p65 = scmp.ne.s32.totalorder %s48, %s64
      %p66 = scmp.eq.s32.totalorder %s40, 0
      %p67 = por %p65, %p66
      %s68 = ssub.s32 %s34, %s41
      %p69 = scmp.eq.s32.totalorder %s68, 0
      %s71 = sadd.s32 %s70, 1
      %s72 = scalar_select %p69, %s70, %s71
      %p75 = pneg %p69
      %p76 = scmp.eq.s32.totalorder %s34, 1
      %p77 = por %p75, %p76
      %p78 = scmp.ne.s32.totalorder %s70, %s73
      %p79 = scmp.eq.s32.totalorder %s34, 0
      %p80 = por %p78, %p79
      %p81 = scmp.ne.s32.totalorder %s70, %s73
      %p82 = scmp.eq.s32.totalorder %s39, 1
      %p83 = por %p81, %p82
      %p84 = scmp.ne.s32.totalorder %s73, %s74
      %p85 = scmp.eq.s32.totalorder %s39, 0
      %p86 = por %p84, %p85
      %p87 = scmp.ne.s32.totalorder %s73, %s74
      %p88 = scmp.eq.s32.totalorder %s40, 1
      %p89 = por %p87, %p88
      %p91 = scmp.ne.s32.totalorder %s74, %s90
      %p92 = scmp.eq.s32.totalorder %s40, 0
      %p93 = por %p91, %p92
      %s95 = sadd.s32 %s94, 1
      %p98 = scmp.eq.s32.totalorder %s34, 1
      %p99 = scmp.ne.s32.totalorder %s94, %s96
      %p100 = scmp.eq.s32.totalorder %s34, 0
      %p101 = por %p99, %p100
      %p102 = scmp.ne.s32.totalorder %s94, %s96
      %p103 = scmp.eq.s32.totalorder %s39, 1
      %p104 = por %p102, %p103
      %p105 = scmp.ne.s32.totalorder %s96, %s97
      %p106 = scmp.eq.s32.totalorder %s39, 0
      %p107 = por %p105, %p106
      %p108 = scmp.ne.s32.totalorder %s96, %s97
      %p109 = scmp.eq.s32.totalorder %s40, 1
      %p110 = por %p108, %p109
      %p112 = scmp.ne.s32.totalorder %s97, %s111
      %p113 = scmp.eq.s32.totalorder %s40, 0
      %p114 = por %p112, %p113
      %s116 = sadd.s32 %s115, 1
      %p119 = scmp.eq.s32.totalorder %s34, 1
      %p120 = scmp.ne.s32.totalorder %s115, %s117
      %p121 = scmp.eq.s32.totalorder %s34, 0
      %p122 = por %p120, %p121
      %p123 = scmp.ne.s32.totalorder %s115, %s117
      %p124 = scmp.eq.s32.totalorder %s39, 1
      %p125 = por %p123, %p124
      %p126 = scmp.ne.s32.totalorder %s117, %s118
      %p127 = scmp.eq.s32.totalorder %s39, 0
      %p128 = por %p126, %p127
      %p129 = scmp.ne.s32.totalorder %s117, %s118
      %p130 = scmp.eq.s32.totalorder %s40, 1
      %p131 = por %p129, %p130
      %p133 = scmp.ne.s32.totalorder %s118, %s132
      %p134 = scmp.eq.s32.totalorder %s40, 0
      %p135 = por %p133, %p134
      %s137 = sadd.s32 %s136, 1
      %p140 = scmp.eq.s32.totalorder %s34, 1
      %p141 = scmp.ne.s32.totalorder %s136, %s138
      %p142 = scmp.eq.s32.totalorder %s34, 0
      %p143 = por %p141, %p142
      %p144 = scmp.ne.s32.totalorder %s136, %s138
      %p145 = scmp.eq.s32.totalorder %s39, 1
      %p146 = por %p144, %p145
      %p147 = scmp.ne.s32.totalorder %s138, %s139
      %p148 = scmp.eq.s32.totalorder %s39, 0
      %p149 = por %p147, %p148
      %p150 = scmp.ne.s32.totalorder %s138, %s139
      %p151 = scmp.eq.s32.totalorder %s40, 1
      %p152 = por %p150, %p151
      %p154 = scmp.ne.s32.totalorder %s139, %s153
      %p155 = scmp.eq.s32.totalorder %s40, 0
      %p156 = por %p154, %p155
      %s158 = sadd.s32 %s157, 1
      %p161 = scmp.eq.s32.totalorder %s34, 1
      %p162 = scmp.ne.s32.totalorder %s157, %s159
      %p163 = scmp.eq.s32.totalorder %s34, 0
      %p164 = por %p162, %p163
      %p165 = scmp.ne.s32.totalorder %s157, %s159
      %p166 = scmp.eq.s32.totalorder %s39, 1
      %p167 = por %p165, %p166
      %p168 = scmp.ne.s32.totalorder %s159, %s160
      %p169 = scmp.eq.s32.totalorder %s39, 0
      %p170 = por %p168, %p169
      %p171 = scmp.ne.s32.totalorder %s159, %s160
      %p172 = scmp.eq.s32.totalorder %s40, 1
      %p173 = por %p171, %p172
      %p175 = scmp.ne.s32.totalorder %s160, %s174
      %p176 = scmp.eq.s32.totalorder %s40, 0
      %p177 = por %p175, %p176
      %s179 = sadd.s32 %s178, 1
      %p182 = scmp.eq.s32.totalorder %s34, 1
      %p183 = scmp.ne.s32.totalorder %s178, %s180
      %p184 = scmp.eq.s32.totalorder %s34, 0
      %p185 = por %p183, %p184
      %p186 = scmp.ne.s32.totalorder %s178, %s180
      %p187 = scmp.eq.s32.totalorder %s39, 1
      %p188 = por %p186, %p187
      %p189 = scmp.ne.s32.totalorder %s180, %s181
      %p190 = scmp.eq.s32.totalorder %s39, 0
      %p191 = por %p189, %p190
      %p192 = scmp.ne.s32.totalorder %s180, %s181
      %p193 = scmp.eq.s32.totalorder %s40, 1
      %p194 = por %p192, %p193
      %p196 = scmp.ne.s32.totalorder %s181, %s195
      %p197 = scmp.eq.s32.totalorder %s40, 0
      %p198 = por %p196, %p197
      %s200 = sadd.s32 %s199, 1
      %p203 = scmp.eq.s32.totalorder %s34, 1
      %p204 = scmp.ne.s32.totalorder %s199, %s201
      %p205 = scmp.eq.s32.totalorder %s34, 0
      %p206 = por %p204, %p205
      %p207 = scmp.ne.s32.totalorder %s199, %s201
      %p208 = scmp.eq.s32.totalorder %s39, 1
      %p209 = por %p207, %p208
      %p210 = scmp.ne.s32.totalorder %s201, %s202
      %p211 = scmp.eq.s32.totalorder %s39, 0
      %p212 = por %p210, %p211
      %p213 = scmp.ne.s32.totalorder %s201, %s202
      %p214 = scmp.eq.s32.totalorder %s40, 1
      %p215 = por %p213, %p214
      %p217 = scmp.ne.s32.totalorder %s202, %s216
      %p218 = scmp.eq.s32.totalorder %s40, 0
      %p219 = por %p217, %p218
      %s221 = sadd.s32 %s220, 1
      %p224 = scmp.eq.s32.totalorder %s34, 1
      %p225 = scmp.ne.s32.totalorder %s220, %s222
      %p226 = scmp.eq.s32.totalorder %s34, 0
      %p227 = por %p225, %p226
      %p228 = scmp.ne.s32.totalorder %s220, %s222
      %p229 = scmp.eq.s32.totalorder %s39, 1
      %p230 = por %p228, %p229
      %p231 = scmp.ne.s32.totalorder %s222, %s223
      %p232 = scmp.eq.s32.totalorder %s39, 0
      %p233 = por %p231, %p232
      %p234 = scmp.ne.s32.totalorder %s222, %s223
      %p235 = scmp.eq.s32.totalorder %s40, 1
      %p236 = por %p234, %p235
      %p238 = scmp.ne.s32.totalorder %s223, %s237
      %p239 = scmp.eq.s32.totalorder %s40, 0
      %p240 = por %p238, %p239
      %s242 = sadd.s32 %s241, 1
      %p245 = scmp.eq.s32.totalorder %s34, 1
      %p246 = scmp.ne.s32.totalorder %s241, %s243
      %p247 = scmp.eq.s32.totalorder %s34, 0
      %p248 = por %p246, %p247
      %p249 = scmp.ne.s32.totalorder %s241, %s243
      %p250 = scmp.eq.s32.totalorder %s39, 1
      %p251 = por %p249, %p250
      %p252 = scmp.ne.s32.totalorder %s243, %s244
      %p253 = scmp.eq.s32.totalorder %s39, 0
      %p254 = por %p252, %p253
      %p255 = scmp.ne.s32.totalorder %s243, %s244
      %p256 = scmp.eq.s32.totalorder %s40, 1
      %p257 = por %p255, %p256
      %p259 = scmp.ne.s32.totalorder %s244, %s258
      %p260 = scmp.eq.s32.totalorder %s40, 0
      %p261 = por %p259, %p260
      %s263 = sadd.s32 %s262, 1
      %p266 = scmp.eq.s32.totalorder %s34, 1
      %p267 = scmp.ne.s32.totalorder %s262, %s264
      %p268 = scmp.eq.s32.totalorder %s34, 0
      %p269 = por %p267, %p268
      %p270 = scmp.ne.s32.totalorder %s262, %s264
      %p271 = scmp.eq.s32.totalorder %s39, 1
      %p272 = por %p270, %p271
      %p273 = scmp.ne.s32.totalorder %s264, %s265
      %p274 = scmp.eq.s32.totalorder %s39, 0
      %p275 = por %p273, %p274
      %p276 = scmp.ne.s32.totalorder %s264, %s265
      %p277 = scmp.eq.s32.totalorder %s40, 1
      %p278 = por %p276, %p277
      %p280 = scmp.ne.s32.totalorder %s265, %s279
      %p281 = scmp.eq.s32.totalorder %s40, 0
      %p282 = por %p280, %p281
      %s283 = ssub.s32 %s34, %s41
      %p284 = scmp.eq.s32.totalorder %s283, 0
      %s286 = sadd.s32 %s285, 1
      %s287 = scalar_select %p284, %s285, %s286
      %p290 = pneg %p284
      %p291 = scmp.eq.s32.totalorder %s34, 1
      %p292 = por %p290, %p291
      %p293 = scmp.ne.s32.totalorder %s285, %s288
      %p294 = scmp.eq.s32.totalorder %s34, 0
      %p295 = por %p293, %p294
      %p296 = scmp.ne.s32.totalorder %s285, %s288
      %p297 = scmp.eq.s32.totalorder %s39, 1
      %p298 = por %p296, %p297
      %p299 = scmp.ne.s32.totalorder %s288, %s289
      %p300 = scmp.eq.s32.totalorder %s39, 0
      %p301 = por %p299, %p300
      %p302 = scmp.ne.s32.totalorder %s288, %s289
      %p303 = scmp.eq.s32.totalorder %s40, 1
      %p304 = por %p302, %p303
      %p306 = scmp.ne.s32.totalorder %s289, %s305
      %p307 = scmp.eq.s32.totalorder %s40, 0
      %p308 = por %p306, %p307
      %s309 = ssub.s32 %s34, %s41
      %p310 = scmp.eq.s32.totalorder %s309, 0
      %s312 = sadd.s32 %s311, 1
      %s313 = scalar_select %p310, %s311, %s312
      %p316 = pneg %p310
      %p317 = scmp.eq.s32.totalorder %s34, 1
      %p318 = por %p316, %p317
      %p319 = scmp.ne.s32.totalorder %s311, %s314
      %p320 = scmp.eq.s32.totalorder %s34, 0
      %p321 = por %p319, %p320
      %p322 = scmp.ne.s32.totalorder %s311, %s314
      %p323 = scmp.eq.s32.totalorder %s39, 1
      %p324 = por %p322, %p323
      %p325 = scmp.ne.s32.totalorder %s314, %s315
      %p326 = scmp.eq.s32.totalorder %s39, 0
      %p327 = por %p325, %p326
      %p328 = scmp.ne.s32.totalorder %s314, %s315
      %p329 = scmp.eq.s32.totalorder %s40, 1
      %p330 = por %p328, %p329
      %p332 = scmp.ne.s32.totalorder %s315, %s331
      %p333 = scmp.eq.s32.totalorder %s40, 0
      %p334 = por %p332, %p333
      %s335 = ssub.s32 %s34, %s41
      %p336 = scmp.eq.s32.totalorder %s335, 0
      %s338 = sadd.s32 %s337, 1
      %s339 = scalar_select %p336, %s337, %s338
      %p342 = pneg %p336
      %p343 = scmp.eq.s32.totalorder %s34, 1
      %p344 = por %p342, %p343
      %p345 = scmp.ne.s32.totalorder %s337, %s340
      %p346 = scmp.eq.s32.totalorder %s34, 0
      %p347 = por %p345, %p346
      %p348 = scmp.ne.s32.totalorder %s337, %s340
      %p349 = scmp.eq.s32.totalorder %s39, 1
      %p350 = por %p348, %p349
      %p351 = scmp.ne.s32.totalorder %s340, %s341
      %p352 = scmp.eq.s32.totalorder %s39, 0
      %p353 = por %p351, %p352
      %p354 = scmp.ne.s32.totalorder %s340, %s341
      %p355 = scmp.eq.s32.totalorder %s40, 1
      %p356 = por %p354, %p355
      %p358 = scmp.ne.s32.totalorder %s341, %s357
      %p359 = scmp.eq.s32.totalorder %s40, 0
      %p360 = por %p358, %p359
      %s361 = ssub.s32 %s34, %s41
      %p362 = scmp.eq.s32.totalorder %s361, 0
      %s364 = sadd.s32 %s363, 1
      %s365 = scalar_select %p362, %s363, %s364
      %p368 = pneg %p362
      %p369 = scmp.eq.s32.totalorder %s34, 1
      %p370 = por %p368, %p369
      %p371 = scmp.ne.s32.totalorder %s363, %s366
      %p372 = scmp.eq.s32.totalorder %s34, 0
      %p373 = por %p371, %p372
      %p374 = scmp.ne.s32.totalorder %s363, %s366
      %p375 = scmp.eq.s32.totalorder %s39, 1
      %p376 = por %p374, %p375
      %p377 = scmp.ne.s32.totalorder %s366, %s367
      %p378 = scmp.eq.s32.totalorder %s39, 0
      %p379 = por %p377, %p378
      %p380 = scmp.ne.s32.totalorder %s366, %s367
      %p381 = scmp.eq.s32.totalorder %s40, 1
      %p382 = por %p380, %p381
      %p384 = scmp.ne.s32.totalorder %s367, %s383
      %p385 = scmp.eq.s32.totalorder %s40, 0
      %p386 = por %p384, %p385
      %s387 = ssub.s32 %s34, %s41
      %p388 = scmp.eq.s32.totalorder %s387, 0
      %s390 = sadd.s32 %s389, 1
      %s391 = scalar_select %p388, %s389, %s390
      %p394 = pneg %p388
      %p395 = scmp.eq.s32.totalorder %s34, 1
      %p396 = por %p394, %p395
      %p397 = scmp.ne.s32.totalorder %s389, %s392
      %p398 = scmp.eq.s32.totalorder %s34, 0
      %p399 = por %p397, %p398
      %p400 = scmp.ne.s32.totalorder %s389, %s392
      %p401 = scmp.eq.s32.totalorder %s39, 1
      %p402 = por %p400, %p401
      %p403 = scmp.ne.s32.totalorder %s392, %s393
      %p404 = scmp.eq.s32.totalorder %s39, 0
      %p405 = por %p403, %p404
      %p406 = scmp.ne.s32.totalorder %s392, %s393
      %p407 = scmp.eq.s32.totalorder %s40, 1
      %p408 = por %p406, %p407
      %p410 = scmp.ne.s32.totalorder %s393, %s409
      %p411 = scmp.eq.s32.totalorder %s40, 0
      %p412 = por %p410, %p411
      %s413 = ssub.s32 %s34, %s41
      %p414 = scmp.eq.s32.totalorder %s413, 0
      %s416 = sadd.s32 %s415, 1
      %s417 = scalar_select %p414, %s415, %s416
      %p420 = pneg %p414
      %p421 = scmp.eq.s32.totalorder %s34, 1
      %p422 = por %p420, %p421
      %p423 = scmp.ne.s32.totalorder %s415, %s418
      %p424 = scmp.eq.s32.totalorder %s34, 0
      %p425 = por %p423, %p424
      %p426 = scmp.ne.s32.totalorder %s415, %s418
      %p427 = scmp.eq.s32.totalorder %s39, 1
      %p428 = por %p426, %p427
      %p429 = scmp.ne.s32.totalorder %s418, %s419
      %p430 = scmp.eq.s32.totalorder %s39, 0
      %p431 = por %p429, %p430
      %p432 = scmp.ne.s32.totalorder %s418, %s419
      %p433 = scmp.eq.s32.totalorder %s40, 1
      %p434 = por %p432, %p433
      %p436 = scmp.ne.s32.totalorder %s419, %s435
      %p437 = scmp.eq.s32.totalorder %s40, 0
      %p438 = por %p436, %p437
      %s439 = ssub.s32 %s34, %s41
      %p440 = scmp.eq.s32.totalorder %s439, 0
      %s442 = sadd.s32 %s441, 1
      %s443 = scalar_select %p440, %s441, %s442
      %p446 = pneg %p440
      %p447 = scmp.eq.s32.totalorder %s34, 1
      %p448 = por %p446, %p447
      %p449 = scmp.ne.s32.totalorder %s441, %s444
      %p450 = scmp.eq.s32.totalorder %s34, 0
      %p451 = por %p449, %p450
      %p452 = scmp.ne.s32.totalorder %s441, %s444
      %p453 = scmp.eq.s32.totalorder %s39, 1
      %p454 = por %p452, %p453
      %p455 = scmp.ne.s32.totalorder %s444, %s445
      %p456 = scmp.eq.s32.totalorder %s39, 0
      %p457 = por %p455, %p456
      %p458 = scmp.ne.s32.totalorder %s444, %s445
      %p459 = scmp.eq.s32.totalorder %s40, 1
      %p460 = por %p458, %p459
      %p462 = scmp.ne.s32.totalorder %s445, %s461
      %p463 = scmp.eq.s32.totalorder %s40, 0
      %p464 = por %p462, %p463
      %p465 = scmp.le.s32.totalorder 1, %s34
      %p466 = scmp.lt.s32.totalorder %s34, 3
      %p467 = pnand %p465, %p466
      %p468 = pneg %p467
      // Predicated region
      $region9: #{transformer_forward.1} parent=5 // pred_check
        _
      $region10: #{transformer_forward.1} parent=5 // pred_check_branch
        %470 = sbr.rel (%p467) target = $region12
      $region11: #{transformer_forward.1} parent=5 // pred_region
        %s471 = ssub.s32 %s34, 1
        // Predicated region
        $region13: #{transformer_forward.1} parent=11 // pred_check
          %p472 = pneg %p107
        $region14: #{transformer_forward.1} parent=11 // pred_check_branch
          %474 = sbr.rel (%p472) target = $region16
        $region15: #{transformer_forward.1} parent=11 // pred_region
          %476 = vsyncadd [#allocation3], 0
          %s477 = sshll.u32 %s2, 4
          %s478 = int_to_ptr.hbm [resolvable:$true] %s477
          %s479 = sshll.u32 [#allocation2], 4
          %s480 = int_to_ptr.vmem [resolvable:$true] %s479
          %485 = dma.hbm_to_vmem [thread:$0]  %s478, 256, %s480, [#allocation3], 128, 128, 8
        $region16: #{transformer_forward.1} parent=11 // pred_fallthru
          _
        // Predicated region
        $region17: #{transformer_forward.1} parent=11 // pred_check
          %p486 = pneg %p128
        $region18: #{transformer_forward.1} parent=11 // pred_check_branch
          %488 = sbr.rel (%p486) target = $region20
        $region19: #{transformer_forward.1} parent=11 // pred_region
          _
        $region20: #{transformer_forward.1} parent=11 // pred_fallthru
          _
        // Predicated region
        $region21: #{transformer_forward.1} parent=11 // pred_check
          %p489 = pneg %p149
        $region22: #{transformer_forward.1} parent=11 // pred_check_branch
          %491 = sbr.rel (%p489) target = $region24
        $region23: #{transformer_forward.1} parent=11 // pred_region
          %493 = vsyncadd [#allocation6], 0
          %s494 = sshll.u32 %s4, 4
          %s495 = int_to_ptr.hbm [resolvable:$true] %s494
          %s496 = sshll.u32 [#allocation5], 4
          %s497 = int_to_ptr.vmem [resolvable:$true] %s496
          %502 = dma.hbm_to_vmem [thread:$0]  %s495, 4096, %s497, [#allocation6], 512, 512, 32
        $region24: #{transformer_forward.1} parent=11 // pred_fallthru
          _
        // Predicated region
        $region25: #{transformer_forward.1} parent=11 // pred_check
          %p503 = pneg %p170
        $region26: #{transformer_forward.1} parent=11 // pred_check_branch
          %505 = sbr.rel (%p503) target = $region28
        $region27: #{transformer_forward.1} parent=11 // pred_region
          %507 = vsyncadd [#allocation6], 0
          %s508 = sshll.u32 %s5, 4
          %s509 = int_to_ptr.hbm [resolvable:$true] %s508
          %s510 = sshll.u32 [#allocation7], 4
          %s511 = int_to_ptr.vmem [resolvable:$true] %s510
          %516 = dma.hbm_to_vmem [thread:$0]  %s509, 256, %s511, [#allocation6], 128, 128, 8
        $region28: #{transformer_forward.1} parent=11 // pred_fallthru
          _
        // Predicated region
        $region29: #{transformer_forward.1} parent=11 // pred_check
          %p517 = pneg %p191
        $region30: #{transformer_forward.1} parent=11 // pred_check_branch
          %519 = sbr.rel (%p517) target = $region32
        $region31: #{transformer_forward.1} parent=11 // pred_region
          %521 = vsyncadd [#allocation9], 0
          %s522 = sshll.u32 %s6, 4
          %s523 = int_to_ptr.hbm [resolvable:$true] %s522
          %s524 = sshll.u32 [#allocation8], 4
          %s525 = int_to_ptr.vmem [resolvable:$true] %s524
          %530 = dma.hbm_to_vmem [thread:$0]  %s523, 4096, %s525, [#allocation9], 512, 512, 32
        $region32: #{transformer_forward.1} parent=11 // pred_fallthru
          _
        // Predicated region
        $region33: #{transformer_forward.1} parent=11 // pred_check
          %p531 = pneg %p212
        $region34: #{transformer_forward.1} parent=11 // pred_check_branch
          %533 = sbr.rel (%p531) target = $region36
        $region35: #{transformer_forward.1} parent=11 // pred_region
          %535 = vsyncadd [#allocation9], 0
          %s536 = sshll.u32 %s7, 4
          %s537 = int_to_ptr.hbm [resolvable:$true] %s536
          %s538 = sshll.u32 [#allocation10], 4
          %s539 = int_to_ptr.vmem [resolvable:$true] %s538
          %544 = dma.hbm_to_vmem [thread:$0]  %s537, 256, %s539, [#allocation9], 128, 128, 8
        $region36: #{transformer_forward.1} parent=11 // pred_fallthru
          _
        // Predicated region
        $region37: #{transformer_forward.1} parent=11 // pred_check
          %p545 = pneg %p233
        $region38: #{transformer_forward.1} parent=11 // pred_check_branch
          %547 = sbr.rel (%p545) target = $region40
        $region39: #{transformer_forward.1} parent=11 // pred_region
          %549 = vsyncadd [#allocation12], 0
          %s550 = sshll.u32 %s8, 4
          %s551 = int_to_ptr.hbm [resolvable:$true] %s550
          %s552 = sshll.u32 [#allocation11], 4
          %s553 = int_to_ptr.vmem [resolvable:$true] %s552
          %558 = dma.hbm_to_vmem [thread:$0]  %s551, 768, %s553, [#allocation12], 128, 128, 8
        $region40: #{transformer_forward.1} parent=11 // pred_fallthru
          _
        // Predicated region
        $region41: #{transformer_forward.1} parent=11 // pred_check
          %p559 = pneg %p254
        $region42: #{transformer_forward.1} parent=11 // pred_check_branch
          %561 = sbr.rel (%p559) target = $region44
        $region43: #{transformer_forward.1} parent=11 // pred_region
          _
        $region44: #{transformer_forward.1} parent=11 // pred_fallthru
          _
        // Predicated region
        $region45: #{transformer_forward.1} parent=11 // pred_check
          %p562 = pneg %p275
        $region46: #{transformer_forward.1} parent=11 // pred_check_branch
          %564 = sbr.rel (%p562) target = $region48
        $region47: #{transformer_forward.1} parent=11 // pred_region
          _
        $region48: #{transformer_forward.1} parent=11 // pred_fallthru
          _
      $region12: #{transformer_forward.1} parent=5 // pred_fallthru
        _
      %p565 = scmp.lt.s32.totalorder %s34, 2
      // Predicated region
      $region49: #{transformer_forward.1} parent=5 // pred_check
        %p566 = pneg %p565
      $region50: #{transformer_forward.1} parent=5 // pred_check_branch
        %568 = sbr.rel (%p566) target = $region52
      $region51: #{transformer_forward.1} parent=5 // pred_region
        // Predicated region
        $region53: #{transformer_forward.1} parent=51 // pred_check
          %p569 = pneg %p54
        $region54: #{transformer_forward.1} parent=51 // pred_check_branch
          %571 = sbr.rel (%p569) target = $region56
        $region55: #{transformer_forward.1} parent=51 // pred_region
          %p572 = scmp.lt.s32.totalorder %s34, 1
          %s573 = scalar_select %p572, %s34, 1
          %s574 = smul.addr %s573, 8
          %s575 = scalar_lea.vmem %s0, %s574
        $region56: #{transformer_forward.1} parent=51 // pred_fallthru
          _
        // Predicated region
        $region57: #{transformer_forward.1} parent=51 // pred_check
          %p576 = pneg %p80
        $region58: #{transformer_forward.1} parent=51 // pred_check_branch
          %578 = sbr.rel (%p576) target = $region60
        $region59: #{transformer_forward.1} parent=51 // pred_region
          %p579 = scmp.lt.s32.totalorder %s34, 1
          %s580 = scalar_select %p579, %s34, 1
          %s581 = smul.addr %s580, 4
          %s582 = scalar_lea.vmem %s1, %s581
        $region60: #{transformer_forward.1} parent=51 // pred_fallthru
          _
      $region52: #{transformer_forward.1} parent=5 // pred_fallthru
        _
      %p583 = scmp.le.s32.totalorder 1, %s34
      %p584 = scmp.lt.s32.totalorder %s34, 3
      %p585 = pnand %p583, %p584
      %p586 = pneg %p585
      // Predicated region
      $region61: #{transformer_forward.1} parent=5 // pred_check
        _
      $region62: #{transformer_forward.1} parent=5 // pred_check_branch
        %588 = sbr.rel (%p585) target = $region64
      $region63: #{transformer_forward.1} parent=5 // pred_region
        %s589 = ssub.s32 %s34, 1
        // Predicated region
        $region65: #{transformer_forward.1} parent=63 // pred_check
          %p590 = pneg %p107
        $region66: #{transformer_forward.1} parent=63 // pred_check_branch
          %592 = sbr.rel (%p590) target = $region68
        $region67: #{transformer_forward.1} parent=63 // pred_region
          %594 = dma.done [#allocation3], 256
        $region68: #{transformer_forward.1} parent=63 // pred_fallthru
          _
        // Predicated region
        $region69: #{transformer_forward.1} parent=63 // pred_check
          %p595 = pneg %p149
        $region70: #{transformer_forward.1} parent=63 // pred_check_branch
          %597 = sbr.rel (%p595) target = $region72
        $region71: #{transformer_forward.1} parent=63 // pred_region
          %599 = dma.done [#allocation6], 4096
        $region72: #{transformer_forward.1} parent=63 // pred_fallthru
          _
        // Predicated region
        $region73: #{transformer_forward.1} parent=63 // pred_check
          %p600 = pneg %p170
        $region74: #{transformer_forward.1} parent=63 // pred_check_branch
          %602 = sbr.rel (%p600) target = $region76
        $region75: #{transformer_forward.1} parent=63 // pred_region
          %604 = dma.done [#allocation6], 256
        $region76: #{transformer_forward.1} parent=63 // pred_fallthru
          _
        // Predicated region
        $region77: #{transformer_forward.1} parent=63 // pred_check
          %p605 = pneg %p191
        $region78: #{transformer_forward.1} parent=63 // pred_check_branch
          %607 = sbr.rel (%p605) target = $region80
        $region79: #{transformer_forward.1} parent=63 // pred_region
          %609 = dma.done [#allocation9], 4096
        $region80: #{transformer_forward.1} parent=63 // pred_fallthru
          _
        // Predicated region
        $region81: #{transformer_forward.1} parent=63 // pred_check
          %p610 = pneg %p212
        $region82: #{transformer_forward.1} parent=63 // pred_check_branch
          %612 = sbr.rel (%p610) target = $region84
        $region83: #{transformer_forward.1} parent=63 // pred_region
          %614 = dma.done [#allocation9], 256
        $region84: #{transformer_forward.1} parent=63 // pred_fallthru
          _
        // Predicated region
        $region85: #{transformer_forward.1} parent=63 // pred_check
          %p615 = pneg %p233
        $region86: #{transformer_forward.1} parent=63 // pred_check_branch
          %617 = sbr.rel (%p615) target = $region88
        $region87: #{transformer_forward.1} parent=63 // pred_region
          %619 = dma.done [#allocation12], 768
        $region88: #{transformer_forward.1} parent=63 // pred_fallthru
          _
        %p620 = scmp.lt.s32.totalorder %s39, 1
        %s621 = scalar_select %p620, %s39, 1
        %s622 = smul.addr %s621, 8
        %s623 = scalar_lea.vmem %s0, %s622
        %p624 = pneg %p60
        %p625 = pneg %p57
        %p626 = scmp.lt.s32.totalorder %s39, 1
        %s627 = scalar_select %p626, %s39, 1
        %s628 = smul.addr %s627, 4
        %s629 = scalar_lea.vmem %s1, %s628
        %p630 = pneg %p86
        %p631 = pneg %p83
        %p632 = pneg %p107
        %p633 = pneg %p104
        %p634 = pneg %p128
        %p635 = pneg %p125
        %p636 = pneg %p149
        %p637 = pneg %p146
        %p638 = pneg %p170
        %p639 = pneg %p167
        %p640 = pneg %p191
        %p641 = pneg %p188
        %p642 = pneg %p212
        %p643 = pneg %p209
        %p644 = pneg %p233
        %p645 = pneg %p230
        %p646 = pneg %p254
        %p647 = pneg %p251
        %p648 = pneg %p275
        %p649 = pneg %p272
        %p650 = pneg %p301
        %p651 = pneg %p298
        %p652 = scmp.lt.s32.totalorder %s39, 1
        %s653 = scalar_select %p652, %s39, 1
        %s654 = smul.addr %s653, 4
        %s655 = scalar_lea.vmem %s11, %s654
        %p656 = pneg %p327
        %p657 = pneg %p324
        %p658 = scmp.lt.s32.totalorder %s39, 1
        %s659 = scalar_select %p658, %s39, 1
        %s660 = smul.addr %s659, 2
        %s661 = scalar_lea.vmem %s12, %s660
        %p662 = pneg %p353
        %p663 = pneg %p350
        %p664 = scmp.lt.s32.totalorder %s39, 1
        %s665 = scalar_select %p664, %s39, 1
        %s666 = smul.addr %s665, 2
        %s667 = smul.addr %s666, 8
        %s668 = scalar_lea.vmem %s13, %s667
        %p669 = pneg %p379
        %p670 = pneg %p376
        %s671 = sand.u32 %s366, 1
        %s672 = scalar_lea.sflag [#allocation4], %s671
        %s673 = sand.u32 %s366, 1
        %s674 = smul.addr %s673, 8
        %s675 = scalar_lea.vmem [#allocation13], %s674
        %p676 = pneg %p405
        %p677 = pneg %p402
        %s678 = sand.u32 %s392, 1
        %s679 = scalar_lea.sflag [#allocation15], %s678
        %s680 = sand.u32 %s392, 1
        %s681 = smul.addr %s680, 4
        %s682 = scalar_lea.vmem [#allocation14], %s681
        %p683 = pneg %p431
        %p684 = pneg %p428
        %p685 = scmp.lt.s32.totalorder %s39, 1
        %s686 = scalar_select %p685, %s39, 1
        %s687 = smul.addr %s686, 4
        %s688 = smul.addr %s687, 8
        %s689 = scalar_lea.vmem %s16, %s688
        %p690 = pneg %p457
        %p691 = pneg %p454
        %p692 = scmp.lt.s32.totalorder %s39, 1
        %s693 = scalar_select %p692, %s39, 1
        %s694 = smul.addr %s693, 4
        %s695 = smul.addr %s694, 4
        %s696 = scalar_lea.vmem %s17, %s695
        %p697 = scmp.lt.s32.totalorder %s39, 1
        %s698 = scalar_select %p697, %s39, 1
        %s699 = smul.addr %s698, 8
        %s700 = scalar_lea.vmem %s0, %s699
        %p701 = scmp.lt.s32.totalorder %s39, 1
        %s702 = scalar_select %p701, %s39, 1
        %s703 = smul.addr %s702, 4
        %s704 = scalar_lea.vmem %s1, %s703
        %p705 = scmp.lt.s32.totalorder %s39, 1
        %s706 = scalar_select %p705, %s39, 1
        %s707 = smul.addr %s706, 4
        %s708 = scalar_lea.vmem %s11, %s707
        %p709 = scmp.lt.s32.totalorder %s39, 1
        %s710 = scalar_select %p709, %s39, 1
        %s711 = smul.addr %s710, 2
        %s712 = scalar_lea.vmem %s12, %s711
        %p713 = scmp.lt.s32.totalorder %s39, 1
        %s714 = scalar_select %p713, %s39, 1
        %s715 = smul.addr %s714, 2
        %s716 = smul.addr %s715, 8
        %s717 = scalar_lea.vmem %s13, %s716
        %p718 = scmp.lt.s32.totalorder %s39, 1
        %s719 = scalar_select %p718, %s39, 1
        %s720 = smul.addr %s719, 4
        %s721 = smul.addr %s720, 8
        %s722 = scalar_lea.vmem %s16, %s721
        %p723 = scmp.lt.s32.totalorder %s39, 1
        %s724 = scalar_select %p723, %s39, 1
        %s725 = smul.addr %s724, 4
        %s726 = smul.addr %s725, 4
        %s727 = scalar_lea.vmem %s17, %s726
        %v728 = vld [vmem:[%s700] sm:$0xff]
        %v729 = vld [vmem:[%s704] sm:$0xf]
        %v730 = vld [vmem:[#allocation2] sm:$0xf]
        %v731 = vld [vmem:[%s3] sm:$0x1]
        %v732 = vperm.slane %v731, 0
        %vm733 = vcmask 31744
        %v735 = vsel %vm733, %v728, 0
        %vm737 = vcmask 1043456
        %v739 = vsel %vm737, %v730, 0
        %741 = vmatpush.msra.mxu0 0.0
        %742 = vmatpush.msra.mxu0 0.0
        %743 = vmatpush.msra.mxu0 0.0
        %744 = vmatpush.msra.mxu0 0.0
        %745 = vmatpush.msra.mxu0 0.0
        %746 = vmatpush.msra.mxu0 0.0
        %747 = vmatpush.msra.mxu0 0.0
        %748 = vmatpush.msra.mxu0 0.0
        %749 = vmatpush.msra.mxu0 0.0
        %750 = vmatpush.msra.mxu0 0.0
        %751 = vmatpush.msra.mxu0 0.0
        %752 = vmatpush.msra.mxu0 0.0
        %753 = vmatpush.msra.mxu0 0.0
        %754 = vmatpush.msra.mxu0 0.0
        %755 = vmatpush.msra.mxu0 0.0
        %756 = vmatpush.msra.mxu0 %v739
        %757 = vmatmul.f32.gmra.mxu0 %v735
        %v758 = vpop.f32.mrf.mxu0
        %v759 = vadd.f32 %v732, %v758
        %760 = vdwg.mxu0
        %vm761 = vcmask 261120
        %762 = vst.msk [vmem:[%s675] sm:$0xff] %vm761, %v759
        %v763 = vld [vmem:[#allocation2 + $0x4] sm:$0xff]
        %v764 = vld [vmem:[%s3 + $0x1] sm:$0x1]
        %v765 = vperm.slane %v764, 0
        %vm766 = vcmask 64512
        %v768 = vsel %vm766, %v729, 0
        %770 = vmatpush.msra.mxu0 0.0
        %771 = vmatpush.msra.mxu0 0.0
        %772 = vmatpush.msra.mxu0 0.0
        %773 = vmatpush.msra.mxu0 0.0
        %774 = vmatpush.msra.mxu0 0.0
        %775 = vmatpush.msra.mxu0 0.0
        %776 = vmatpush.msra.mxu0 0.0
        %777 = vmatpush.msra.mxu0 0.0
        %778 = vmatpush.msra.mxu0 0.0
        %779 = vmatpush.msra.mxu0 0.0
        %780 = vmatpush.msra.mxu0 0.0
        %781 = vmatpush.msra.mxu0 0.0
        %782 = vmatpush.msra.mxu0 0.0
        %783 = vmatpush.msra.mxu0 0.0
        %784 = vmatpush.msra.mxu0 0.0
        %785 = vmatpush.msra.mxu0 %v763
        %786 = vmatmul.f32.gmra.mxu0 %v768
        %v787 = vpop.f32.mrf.mxu0
        %v788 = vadd.f32 %v765, %v787
        %789 = vdwg.mxu0
        %vm790 = vcmask 257024
        %791 = vst.msk [vmem:[%s682] sm:$0xf] %vm790, %v788
        %v792 = vld [vmem:[#allocation5] sm:$0xff]
        %v793 = vld [vmem:[#allocation5 + $0x20] sm:$0xff]
        %v794 = vld [vmem:[#allocation5 + $0x40] sm:$0xff]
        %v795 = vld [vmem:[#allocation5 + $0x60] sm:$0xff]
        %v796 = vld [vmem:[#allocation5 + $0x8] sm:$0xff]
        %v797 = vld [vmem:[#allocation5 + $0x28] sm:$0xff]
        %v798 = vld [vmem:[#allocation5 + $0x48] sm:$0xff]
        %v799 = vld [vmem:[#allocation5 + $0x68] sm:$0xff]
        %v800 = vld [vmem:[#allocation5 + $0x10] sm:$0xff]
        %v801 = vld [vmem:[#allocation5 + $0x30] sm:$0xff]
        %v802 = vld [vmem:[#allocation5 + $0x50] sm:$0xff]
        %v803 = vld [vmem:[#allocation5 + $0x70] sm:$0xff]
        %v804 = vld [vmem:[#allocation5 + $0x18] sm:$0xff]
        %v805 = vld [vmem:[#allocation5 + $0x38] sm:$0xff]
        %v806 = vld [vmem:[#allocation5 + $0x58] sm:$0xff]
        %v807 = vld [vmem:[#allocation5 + $0x78] sm:$0xff]
        %v808 = vld [vmem:[#allocation7] sm:$0x1]
        %v809 = vld [vmem:[#allocation7 + $0x1] sm:$0x1]
        %v810 = vld [vmem:[#allocation7 + $0x2] sm:$0x1]
        %v811 = vld [vmem:[#allocation7 + $0x3] sm:$0x1]
        %v812 = vld [vmem:[#allocation7 + $0x4] sm:$0x1]
        %v813 = vld [vmem:[#allocation7 + $0x5] sm:$0x1]
        %v814 = vld [vmem:[#allocation7 + $0x6] sm:$0x1]
        %v815 = vld [vmem:[#allocation7 + $0x7] sm:$0x1]
        %v816 = vperm.slane %v808, 0
        %v818 = vsel %vm761, %v759, 0
        %820 = vmatpush.msra.mxu0 0.0
        %821 = vmatpush.msra.mxu0 0.0
        %822 = vmatpush.msra.mxu0 0.0
        %823 = vmatpush.msra.mxu0 0.0
        %824 = vmatpush.msra.mxu0 0.0
        %825 = vmatpush.msra.mxu0 0.0
        %826 = vmatpush.msra.mxu0 0.0
        %827 = vmatpush.msra.mxu0 0.0
        %828 = vmatpush.msra.mxu0 0.0
        %829 = vmatpush.msra.mxu0 0.0
        %830 = vmatpush.msra.mxu0 0.0
        %831 = vmatpush.msra.mxu0 0.0
        %832 = vmatpush.msra.mxu0 %v795
        %833 = vmatpush.msra.mxu0 %v794
        %834 = vmatpush.msra.mxu0 %v793
        %835 = vmatpush.msra.mxu0 %v792
        %836 = vmatmul.f32.gmra.mxu0 %v818
        %v837 = vpop.f32.mrf.mxu0
        %v838 = vadd.f32 %v816, %v837
        %839 = vdwg.mxu0
        %841 = vrot.lane.b32.xlu0 %v838, 96
        %v842 = vpop.permute.xlu0 %841
        %v843 = vsel %vm766, %v838, 0
        %v845 = vsel %vm766, %v842, 0
        %847 = vmatpush.xpose.msra.mxu0 0.0
        %848 = vmatpush.xpose.msra.mxu0 0.0
        %849 = vmatpush.xpose.msra.mxu0 0.0
        %850 = vmatpush.xpose.msra.mxu0 0.0
        %851 = vmatpush.xpose.msra.mxu0 0.0
        %852 = vmatpush.xpose.msra.mxu0 0.0
        %853 = vmatpush.xpose.msra.mxu0 0.0
        %854 = vmatpush.xpose.msra.mxu0 0.0
        %855 = vmatpush.xpose.msra.mxu0 0.0
        %856 = vmatpush.xpose.msra.mxu0 0.0
        %857 = vmatpush.xpose.msra.mxu0 0.0
        %858 = vmatpush.xpose.msra.mxu0 0.0
        %859 = vmatpush.xpose.msra.mxu0 0.0
        %860 = vmatpush.xpose.msra.mxu0 0.0
        %861 = vmatpush.xpose.msra.mxu0 0.0
        %862 = vmatpush.xpose.msra.mxu0 %v845
        %863 = vmatmul.f32.gmra.mxu0 %v843
        %v864 = vpop.f32.mrf.mxu0
        %v865 = vadd.f32 0.0, %v864
        %866 = vdwg.mxu0
        %v867 = vmul.f32 %v865, 0.35355338
        %v868 = vsel %vm766, %v867, -inf
        %869 = vmax.xlane.f32.xlu0 %v868
        %v870 = vpop.xlane.xlu0 %869
        %v871 = vsub.f32 %v867, %v870
        %v872 = vmul.f32 %v871, 1.442695
        %v873 = vpow.pop %v872
        %v874 = vsel %vm766, %v873, 0.0
        %875 = vadd.xlane.f32.xlu0 %v874
        %v876 = vpop.xlane.xlu0 %875
        %v877 = vrcp.pop %v876
        %v878 = vmul.f32 %v876, %v877
        %v879 = vsub.f32 1.0, %v878
        %v880 = vmul.f32 %v877, %v879
        %v881 = vadd.f32 %v877, %v880
        %vm882 = vweird.f32 %v876
        %vm883 = vweird.f32 %v877
        %vm884 = vmor %vm882, %vm883
        %v885 = vsel %vm884, %v877, %v881
        %v886 = vand.u32 2147483647, %v876
        %vm887 = vcmp.eq.f32.partialorder %v886, 8.507059e+37
        %v888 = vand.u32 %v876, 2147483648
        %v889 = vor.u32 1.1754944e-38, %v888
        %v890 = vsel %vm887, %v889, %v885
        %v891 = vmul.f32 %v873, %v890
        %892 = vrot.lane.b32.xlu0 %v838, 64
        %v893 = vpop.permute.xlu0 %892
        %v896 = vsel %vm766, %v891, 0
        %898 = vmatpush.msra.mxu0 0.0
        %899 = vmatpush.msra.mxu0 0.0
        %900 = vmatpush.msra.mxu0 0.0
        %901 = vmatpush.msra.mxu0 0.0
        %902 = vmatpush.msra.mxu0 0.0
        %903 = vmatpush.msra.mxu0 0.0
        %904 = vmatpush.msra.mxu0 0.0
        %905 = vmatpush.msra.mxu0 0.0
        %906 = vmatpush.msra.mxu0 0.0
        %907 = vmatpush.msra.mxu0 0.0
        %908 = vmatpush.msra.mxu0 0.0
        %909 = vmatpush.msra.mxu0 0.0
        %910 = vmatpush.msra.mxu0 0.0
        %911 = vmatpush.msra.mxu0 0.0
        %912 = vmatpush.msra.mxu0 0.0
        %913 = vmatpush.msra.mxu0 %v893
        %914 = vmatmul.f32.gmra.mxu0 %v896
        %v915 = vpop.f32.mrf.mxu0
        %v916 = vadd.f32 0.0, %v915
        %917 = vdwg.mxu0
        %918 = vrot.lane.b32.xlu0 %v838, 120
        %v919 = vpop.permute.xlu0 %918
        %920 = vrot.lane.b32.xlu0 %v838, 88
        %v921 = vpop.permute.xlu0 %920
        %v922 = vsel %vm766, %v919, 0
        %v924 = vsel %vm766, %v921, 0
        %926 = vmatpush.xpose.msra.mxu0 0.0
        %927 = vmatpush.xpose.msra.mxu0 0.0
        %928 = vmatpush.xpose.msra.mxu0 0.0
        %929 = vmatpush.xpose.msra.mxu0 0.0
        %930 = vmatpush.xpose.msra.mxu0 0.0
        %931 = vmatpush.xpose.msra.mxu0 0.0
        %932 = vmatpush.xpose.msra.mxu0 0.0
        %933 = vmatpush.xpose.msra.mxu0 0.0
        %934 = vmatpush.xpose.msra.mxu0 0.0
        %935 = vmatpush.xpose.msra.mxu0 0.0
        %936 = vmatpush.xpose.msra.mxu0 0.0
        %937 = vmatpush.xpose.msra.mxu0 0.0
        %938 = vmatpush.xpose.msra.mxu0 0.0
        %939 = vmatpush.xpose.msra.mxu0 0.0
        %940 = vmatpush.xpose.msra.mxu0 0.0
        %941 = vmatpush.xpose.msra.mxu0 %v924
        %942 = vmatmul.f32.gmra.mxu0 %v922
        %v943 = vpop.f32.mrf.mxu0
        %v944 = vadd.f32 0.0, %v943
        %945 = vdwg.mxu0
        %v946 = vmul.f32 %v944, 0.35355338
        %v947 = vsel %vm766, %v946, -inf
        %948 = vmax.xlane.f32.xlu0 %v947
        %v949 = vpop.xlane.xlu0 %948
        %v950 = vsub.f32 %v946, %v949
        %v951 = vmul.f32 %v950, 1.442695
        %v952 = vpow.pop %v951
        %v953 = vsel %vm766, %v952, 0.0
        %954 = vadd.xlane.f32.xlu0 %v953
        %v955 = vpop.xlane.xlu0 %954
        %v956 = vrcp.pop %v955
        %v957 = vmul.f32 %v955, %v956
        %v958 = vsub.f32 1.0, %v957
        %v959 = vmul.f32 %v956, %v958
        %v960 = vadd.f32 %v956, %v959
        %vm961 = vweird.f32 %v955
        %vm962 = vweird.f32 %v956
        %vm963 = vmor %vm961, %vm962
        %v964 = vsel %vm963, %v956, %v960
        %v965 = vand.u32 2147483647, %v955
        %vm966 = vcmp.eq.f32.partialorder %v965, 8.507059e+37
        %v967 = vand.u32 %v955, 2147483648
        %v968 = vor.u32 1.1754944e-38, %v967
        %v969 = vsel %vm966, %v968, %v964
        %v970 = vmul.f32 %v952, %v969
        %971 = vrot.lane.b32.xlu0 %v838, 56
        %v972 = vpop.permute.xlu0 %971
        %v975 = vsel %vm766, %v970, 0
        %977 = vmatpush.msra.mxu0 0.0
        %978 = vmatpush.msra.mxu0 0.0
        %979 = vmatpush.msra.mxu0 0.0
        %980 = vmatpush.msra.mxu0 0.0
        %981 = vmatpush.msra.mxu0 0.0
        %982 = vmatpush.msra.mxu0 0.0
        %983 = vmatpush.msra.mxu0 0.0
        %984 = vmatpush.msra.mxu0 0.0
        %985 = vmatpush.msra.mxu0 0.0
        %986 = vmatpush.msra.mxu0 0.0
        %987 = vmatpush.msra.mxu0 0.0
        %988 = vmatpush.msra.mxu0 0.0
        %989 = vmatpush.msra.mxu0 0.0
        %990 = vmatpush.msra.mxu0 0.0
        %991 = vmatpush.msra.mxu0 0.0
        %992 = vmatpush.msra.mxu0 %v972
        %993 = vmatmul.f32.gmra.mxu0 %v975
        %v994 = vpop.f32.mrf.mxu0
        %v995 = vadd.f32 0.0, %v994
        %996 = vdwg.mxu0
        %997 = vrot.lane.b32.xlu0 %v838, 112
        %v998 = vpop.permute.xlu0 %997
        %999 = vrot.lane.b32.xlu0 %v838, 80
        %v1000 = vpop.permute.xlu0 %999
        %v1001 = vsel %vm766, %v998, 0
        %v1003 = vsel %vm766, %v1000, 0
        %1005 = vmatpush.xpose.msra.mxu0 0.0
        %1006 = vmatpush.xpose.msra.mxu0 0.0
        %1007 = vmatpush.xpose.msra.mxu0 0.0
        %1008 = vmatpush.xpose.msra.mxu0 0.0
        %1009 = vmatpush.xpose.msra.mxu0 0.0
        %1010 = vmatpush.xpose.msra.mxu0 0.0
        %1011 = vmatpush.xpose.msra.mxu0 0.0
        %1012 = vmatpush.xpose.msra.mxu0 0.0
        %1013 = vmatpush.xpose.msra.mxu0 0.0
        %1014 = vmatpush.xpose.msra.mxu0 0.0
        %1015 = vmatpush.xpose.msra.mxu0 0.0
        %1016 = vmatpush.xpose.msra.mxu0 0.0
        %1017 = vmatpush.xpose.msra.mxu0 0.0
        %1018 = vmatpush.xpose.msra.mxu0 0.0
        %1019 = vmatpush.xpose.msra.mxu0 0.0
        %1020 = vmatpush.xpose.msra.mxu0 %v1003
        %1021 = vmatmul.f32.gmra.mxu0 %v1001
        %v1022 = vpop.f32.mrf.mxu0
        %v1023 = vadd.f32 0.0, %v1022
        %1024 = vdwg.mxu0
        %v1025 = vmul.f32 %v1023, 0.35355338
        %v1026 = vsel %vm766, %v1025, -inf
        %1027 = vmax.xlane.f32.xlu0 %v1026
        %v1028 = vpop.xlane.xlu0 %1027
        %v1029 = vsub.f32 %v1025, %v1028
        %v1030 = vmul.f32 %v1029, 1.442695
        %v1031 = vpow.pop %v1030
        %v1032 = vsel %vm766, %v1031, 0.0
        %1033 = vadd.xlane.f32.xlu0 %v1032
        %v1034 = vpop.xlane.xlu0 %1033
        %v1035 = vrcp.pop %v1034
        %v1036 = vmul.f32 %v1034, %v1035
        %v1037 = vsub.f32 1.0, %v1036
        %v1038 = vmul.f32 %v1035, %v1037
        %v1039 = vadd.f32 %v1035, %v1038
        %vm1040 = vweird.f32 %v1034
        %vm1041 = vweird.f32 %v1035
        %vm1042 = vmor %vm1040, %vm1041
        %v1043 = vsel %vm1042, %v1035, %v1039
        %v1044 = vand.u32 2147483647, %v1034
        %vm1045 = vcmp.eq.f32.partialorder %v1044, 8.507059e+37
        %v1046 = vand.u32 %v1034, 2147483648
        %v1047 = vor.u32 1.1754944e-38, %v1046
        %v1048 = vsel %vm1045, %v1047, %v1043
        %v1049 = vmul.f32 %v1031, %v1048
        %1050 = vrot.lane.b32.xlu0 %v838, 48
        %v1051 = vpop.permute.xlu0 %1050
        %v1054 = vsel %vm766, %v1049, 0
        %1056 = vmatpush.msra.mxu0 0.0
        %1057 = vmatpush.msra.mxu0 0.0
        %1058 = vmatpush.msra.mxu0 0.0
        %1059 = vmatpush.msra.mxu0 0.0
        %1060 = vmatpush.msra.mxu0 0.0
        %1061 = vmatpush.msra.mxu0 0.0
        %1062 = vmatpush.msra.mxu0 0.0
        %1063 = vmatpush.msra.mxu0 0.0
        %1064 = vmatpush.msra.mxu0 0.0
        %1065 = vmatpush.msra.mxu0 0.0
        %1066 = vmatpush.msra.mxu0 0.0
        %1067 = vmatpush.msra.mxu0 0.0
        %1068 = vmatpush.msra.mxu0 0.0
        %1069 = vmatpush.msra.mxu0 0.0
        %1070 = vmatpush.msra.mxu0 0.0
        %1071 = vmatpush.msra.mxu0 %v1051
        %1072 = vmatmul.f32.gmra.mxu0 %v1054
        %v1073 = vpop.f32.mrf.mxu0
        %v1074 = vadd.f32 0.0, %v1073
        %1075 = vdwg.mxu0
        %1076 = vrot.lane.b32.xlu0 %v838, 104
        %v1077 = vpop.permute.xlu0 %1076
        %1078 = vrot.lane.b32.xlu0 %v838, 72
        %v1079 = vpop.permute.xlu0 %1078
        %v1080 = vsel %vm766, %v1077, 0
        %v1082 = vsel %vm766, %v1079, 0
        %1084 = vmatpush.xpose.msra.mxu0 0.0
        %1085 = vmatpush.xpose.msra.mxu0 0.0
        %1086 = vmatpush.xpose.msra.mxu0 0.0
        %1087 = vmatpush.xpose.msra.mxu0 0.0
        %1088 = vmatpush.xpose.msra.mxu0 0.0
        %1089 = vmatpush.xpose.msra.mxu0 0.0
        %1090 = vmatpush.xpose.msra.mxu0 0.0
        %1091 = vmatpush.xpose.msra.mxu0 0.0
        %1092 = vmatpush.xpose.msra.mxu0 0.0
        %1093 = vmatpush.xpose.msra.mxu0 0.0
        %1094 = vmatpush.xpose.msra.mxu0 0.0
        %1095 = vmatpush.xpose.msra.mxu0 0.0
        %1096 = vmatpush.xpose.msra.mxu0 0.0
        %1097 = vmatpush.xpose.msra.mxu0 0.0
        %1098 = vmatpush.xpose.msra.mxu0 0.0
        %1099 = vmatpush.xpose.msra.mxu0 %v1082
        %1100 = vmatmul.f32.gmra.mxu0 %v1080
        %v1101 = vpop.f32.mrf.mxu0
        %v1102 = vadd.f32 0.0, %v1101
        %1103 = vdwg.mxu0
        %v1104 = vmul.f32 %v1102, 0.35355338
        %v1105 = vsel %vm766, %v1104, -inf
        %1106 = vmax.xlane.f32.xlu0 %v1105
        %v1107 = vpop.xlane.xlu0 %1106
        %v1108 = vsub.f32 %v1104, %v1107
        %v1109 = vmul.f32 %v1108, 1.442695
        %v1110 = vpow.pop %v1109
        %v1111 = vsel %vm766, %v1110, 0.0
        %1112 = vadd.xlane.f32.xlu0 %v1111
        %v1113 = vpop.xlane.xlu0 %1112
        %v1114 = vrcp.pop %v1113
        %v1115 = vmul.f32 %v1113, %v1114
        %v1116 = vsub.f32 1.0, %v1115
        %v1117 = vmul.f32 %v1114, %v1116
        %v1118 = vadd.f32 %v1114, %v1117
        %vm1119 = vweird.f32 %v1113
        %vm1120 = vweird.f32 %v1114
        %vm1121 = vmor %vm1119, %vm1120
        %v1122 = vsel %vm1121, %v1114, %v1118
        %v1123 = vand.u32 2147483647, %v1113
        %vm1124 = vcmp.eq.f32.partialorder %v1123, 8.507059e+37
        %v1125 = vand.u32 %v1113, 2147483648
        %v1126 = vor.u32 1.1754944e-38, %v1125
        %v1127 = vsel %vm1124, %v1126, %v1122
        %v1128 = vmul.f32 %v1110, %v1127
        %1129 = vrot.lane.b32.xlu0 %v838, 40
        %v1130 = vpop.permute.xlu0 %1129
        %v1133 = vsel %vm766, %v1128, 0
        %1135 = vmatpush.msra.mxu0 0.0
        %1136 = vmatpush.msra.mxu0 0.0
        %1137 = vmatpush.msra.mxu0 0.0
        %1138 = vmatpush.msra.mxu0 0.0
        %1139 = vmatpush.msra.mxu0 0.0
        %1140 = vmatpush.msra.mxu0 0.0
        %1141 = vmatpush.msra.mxu0 0.0
        %1142 = vmatpush.msra.mxu0 0.0
        %1143 = vmatpush.msra.mxu0 0.0
        %1144 = vmatpush.msra.mxu0 0.0
        %1145 = vmatpush.msra.mxu0 0.0
        %1146 = vmatpush.msra.mxu0 0.0
        %1147 = vmatpush.msra.mxu0 0.0
        %1148 = vmatpush.msra.mxu0 0.0
        %1149 = vmatpush.msra.mxu0 0.0
        %1150 = vmatpush.msra.mxu0 %v1130
        %1151 = vmatmul.f32.gmra.mxu0 %v1133
        %v1152 = vpop.f32.mrf.mxu0
        %v1153 = vadd.f32 0.0, %v1152
        %1154 = vdwg.mxu0
        %1156 = vrot.lane.b32.xlu0 %v995, 8
        %v1157 = vpop.permute.xlu0 %1156
        %1160 = vrot.lane.b32.xlu0 %v1074, 16
        %v1161 = vpop.permute.xlu0 %1160
        %1164 = vrot.lane.b32.xlu0 %v1153, 24
        %v1165 = vpop.permute.xlu0 %1164
        %v1167 = vsel %vm766, %v916, %v1157
        %vm1168 = vcmask 130048
        %v1169 = vsel %vm1168, %v1167, %v1161
        %vm1170 = vcmask 195584
        %v1171 = vsel %vm1170, %v1169, %v1165
        %v1172 = vperm.slane %v809, 0
        %v1174 = vsel %vm761, %v1171, 0
        %1176 = vmatpush.msra.mxu0 0.0
        %1177 = vmatpush.msra.mxu0 0.0
        %1178 = vmatpush.msra.mxu0 0.0
        %1179 = vmatpush.msra.mxu0 0.0
        %1180 = vmatpush.msra.mxu0 0.0
        %1181 = vmatpush.msra.mxu0 0.0
        %1182 = vmatpush.msra.mxu0 0.0
        %1183 = vmatpush.msra.mxu0 0.0
        %1184 = vmatpush.msra.mxu0 0.0
        %1185 = vmatpush.msra.mxu0 0.0
        %1186 = vmatpush.msra.mxu0 0.0
        %1187 = vmatpush.msra.mxu0 0.0
        %1188 = vmatpush.msra.mxu0 %v799
        %1189 = vmatpush.msra.mxu0 %v798
        %1190 = vmatpush.msra.mxu0 %v797
        %1191 = vmatpush.msra.mxu0 %v796
        %1192 = vmatmul.f32.gmra.mxu0 %v1174
        %v1193 = vpop.f32.mrf.mxu0
        %v1194 = vadd.f32 %v1172, %v1193
        %1195 = vdwg.mxu0
        %v1196 = vadd.f32 %v1194, %v759
        %v1197 = vsel %vm761, %v1196, 0.0
        %1198 = vadd.xlane.f32.xlu0 %v1197
        %v1199 = vpop.xlane.xlu0 %1198
        %v1200 = vrcp.pop 32.0
        %v1201 = vmul.f32 32.0, %v1200
        %v1202 = vsub.f32 1.0, %v1201
        %v1203 = vmul.f32 %v1200, %v1202
        %v1204 = vadd.f32 %v1200, %v1203
        %vm1205 = vweird.f32 %v1200
        %v1206 = vsel %vm1205, %v1200, %v1204
        %v1207 = vmul.f32 %v1199, %v1206
        %v1208 = vsub.f32 %v1196, %v1207
        %v1209 = vmul.f32 %v1208, %v1208
        %v1210 = vsel %vm761, %v1209, 0.0
        %1211 = vadd.xlane.f32.xlu0 %v1210
        %v1212 = vpop.xlane.xlu0 %1211
        %v1213 = vmul.f32 %v1212, %v1206
        %v1214 = vadd.f32 %v1213, 1e-05
        %v1215 = vrsqrt.pop %v1214
        %v1216 = vmul.f32 %v1215, %v1214
        %v1217 = vmul.f32 %v1216, %v1215
        %v1218 = vmul.f32 0.5, %v1217
        %v1219 = vsub.f32 1.5, %v1218
        %v1220 = vmul.f32 %v1215, %v1219
        %vm1221 = vweird.f32 %v1214
        %vm1222 = vweird.f32 %v1215
        %vm1223 = vmor %vm1221, %vm1222
        %v1224 = vsel %vm1223, %v1215, %v1220
        %v1225 = vmul.f32 %v1208, %v1224
        %v1226 = vperm.slane %v812, 0
        %v1227 = vmul.f32 %v1225, %v1226
        %v1228 = vperm.slane %v813, 0
        %v1229 = vadd.f32 %v1227, %v1228
        %v1230 = vperm.slane %v810, 0
        %v1232 = vsel %vm761, %v1229, 0
        %1234 = vmatpush.msra.mxu0 0.0
        %1235 = vmatpush.msra.mxu0 0.0
        %1236 = vmatpush.msra.mxu0 0.0
        %1237 = vmatpush.msra.mxu0 0.0
        %1238 = vmatpush.msra.mxu0 0.0
        %1239 = vmatpush.msra.mxu0 0.0
        %1240 = vmatpush.msra.mxu0 0.0
        %1241 = vmatpush.msra.mxu0 0.0
        %1242 = vmatpush.msra.mxu0 0.0
        %1243 = vmatpush.msra.mxu0 0.0
        %1244 = vmatpush.msra.mxu0 0.0
        %1245 = vmatpush.msra.mxu0 0.0
        %1246 = vmatpush.msra.mxu0 %v803
        %1247 = vmatpush.msra.mxu0 %v802
        %1248 = vmatpush.msra.mxu0 %v801
        %1249 = vmatpush.msra.mxu0 %v800
        %1250 = vmatmul.f32.gmra.mxu0 %v1232
        %v1251 = vpop.f32.mrf.mxu0
        %v1252 = vadd.f32 %v1230, %v1251
        %1253 = vdwg.mxu0
        %v1254 = vmax.f32 %v1252, 0.0
        %v1255 = vperm.slane %v811, 0
        %v1257 = vsel %vm761, %v1254, 0
        %1259 = vmatpush.msra.mxu0 0.0
        %1260 = vmatpush.msra.mxu0 0.0
        %1261 = vmatpush.msra.mxu0 0.0
        %1262 = vmatpush.msra.mxu0 0.0
        %1263 = vmatpush.msra.mxu0 0.0
        %1264 = vmatpush.msra.mxu0 0.0
        %1265 = vmatpush.msra.mxu0 0.0
        %1266 = vmatpush.msra.mxu0 0.0
        %1267 = vmatpush.msra.mxu0 0.0
        %1268 = vmatpush.msra.mxu0 0.0
        %1269 = vmatpush.msra.mxu0 0.0
        %1270 = vmatpush.msra.mxu0 0.0
        %1271 = vmatpush.msra.mxu0 %v807
        %1272 = vmatpush.msra.mxu0 %v806
        %1273 = vmatpush.msra.mxu0 %v805
        %1274 = vmatpush.msra.mxu0 %v804
        %1275 = vmatmul.f32.gmra.mxu0 %v1257
        %v1276 = vpop.f32.mrf.mxu0
        %v1277 = vadd.f32 %v1255, %v1276
        %1278 = vdwg.mxu0
        %v1279 = vadd.f32 %v1277, %v1229
        %v1280 = vsel %vm761, %v1279, 0.0
        %1281 = vadd.xlane.f32.xlu0 %v1280
        %v1282 = vpop.xlane.xlu0 %1281
        %v1283 = vmul.f32 %v1282, %v1206
        %v1284 = vsub.f32 %v1279, %v1283
        %v1285 = vmul.f32 %v1284, %v1284
        %v1286 = vsel %vm761, %v1285, 0.0
        %1287 = vadd.xlane.f32.xlu0 %v1286
        %v1288 = vpop.xlane.xlu0 %1287
        %v1289 = vmul.f32 %v1288, %v1206
        %v1290 = vadd.f32 %v1289, 1e-05
        %v1291 = vrsqrt.pop %v1290
        %v1292 = vmul.f32 %v1291, %v1290
        %v1293 = vmul.f32 %v1292, %v1291
        %v1294 = vmul.f32 0.5, %v1293
        %v1295 = vsub.f32 1.5, %v1294
        %v1296 = vmul.f32 %v1291, %v1295
        %vm1297 = vweird.f32 %v1290
        %vm1298 = vweird.f32 %v1291
        %vm1299 = vmor %vm1297, %vm1298
        %v1300 = vsel %vm1299, %v1291, %v1296
        %v1301 = vmul.f32 %v1284, %v1300
        %v1302 = vperm.slane %v814, 0
        %v1303 = vmul.f32 %v1301, %v1302
        %v1304 = vperm.slane %v815, 0
        %v1305 = vadd.f32 %v1303, %v1304
        %s1306 = scalar_lea.vmem [#allocation5], 128
        %v1307 = vld [vmem:[%s1306] sm:$0xff]
        %v1308 = vld [vmem:[%s1306 + $0x20] sm:$0xff]
        %v1309 = vld [vmem:[%s1306 + $0x40] sm:$0xff]
        %v1310 = vld [vmem:[%s1306 + $0x60] sm:$0xff]
        %v1311 = vld [vmem:[%s1306 + $0x8] sm:$0xff]
        %v1312 = vld [vmem:[%s1306 + $0x28] sm:$0xff]
        %v1313 = vld [vmem:[%s1306 + $0x48] sm:$0xff]
        %v1314 = vld [vmem:[%s1306 + $0x68] sm:$0xff]
        %v1315 = vld [vmem:[%s1306 + $0x10] sm:$0xff]
        %v1316 = vld [vmem:[%s1306 + $0x30] sm:$0xff]
        %v1317 = vld [vmem:[%s1306 + $0x50] sm:$0xff]
        %v1318 = vld [vmem:[%s1306 + $0x70] sm:$0xff]
        %v1319 = vld [vmem:[%s1306 + $0x18] sm:$0xff]
        %v1320 = vld [vmem:[%s1306 + $0x38] sm:$0xff]
        %v1321 = vld [vmem:[%s1306 + $0x58] sm:$0xff]
        %v1322 = vld [vmem:[%s1306 + $0x78] sm:$0xff]
        %s1323 = scalar_lea.vmem [#allocation7], 8
        %v1324 = vld [vmem:[%s1323] sm:$0x1]
        %v1325 = vld [vmem:[%s1323 + $0x1] sm:$0x1]
        %v1326 = vld [vmem:[%s1323 + $0x2] sm:$0x1]
        %v1327 = vld [vmem:[%s1323 + $0x3] sm:$0x1]
        %v1328 = vld [vmem:[%s1323 + $0x4] sm:$0x1]
        %v1329 = vld [vmem:[%s1323 + $0x5] sm:$0x1]
        %v1330 = vld [vmem:[%s1323 + $0x6] sm:$0x1]
        %v1331 = vld [vmem:[%s1323 + $0x7] sm:$0x1]
        %v1332 = vperm.slane %v1324, 0
        %v1334 = vsel %vm761, %v1305, 0
        %1336 = vmatpush.msra.mxu0 0.0
        %1337 = vmatpush.msra.mxu0 0.0
        %1338 = vmatpush.msra.mxu0 0.0
        %1339 = vmatpush.msra.mxu0 0.0
        %1340 = vmatpush.msra.mxu0 0.0
        %1341 = vmatpush.msra.mxu0 0.0
        %1342 = vmatpush.msra.mxu0 0.0
        %1343 = vmatpush.msra.mxu0 0.0
        %1344 = vmatpush.msra.mxu0 0.0
        %1345 = vmatpush.msra.mxu0 0.0
        %1346 = vmatpush.msra.mxu0 0.0
        %1347 = vmatpush.msra.mxu0 0.0
        %1348 = vmatpush.msra.mxu0 %v1310
        %1349 = vmatpush.msra.mxu0 %v1309
        %1350 = vmatpush.msra.mxu0 %v1308
        %1351 = vmatpush.msra.mxu0 %v1307
        %1352 = vmatmul.f32.gmra.mxu0 %v1334
        %v1353 = vpop.f32.mrf.mxu0
        %v1354 = vadd.f32 %v1332, %v1353
        %1355 = vdwg.mxu0
        %1357 = vrot.lane.b32.xlu0 %v1354, 96
        %v1358 = vpop.permute.xlu0 %1357
        %v1359 = vsel %vm766, %v1354, 0
        %v1361 = vsel %vm766, %v1358, 0
        %1363 = vmatpush.xpose.msra.mxu0 0.0
        %1364 = vmatpush.xpose.msra.mxu0 0.0
        %1365 = vmatpush.xpose.msra.mxu0 0.0
        %1366 = vmatpush.xpose.msra.mxu0 0.0
        %1367 = vmatpush.xpose.msra.mxu0 0.0
        %1368 = vmatpush.xpose.msra.mxu0 0.0
        %1369 = vmatpush.xpose.msra.mxu0 0.0
        %1370 = vmatpush.xpose.msra.mxu0 0.0
        %1371 = vmatpush.xpose.msra.mxu0 0.0
        %1372 = vmatpush.xpose.msra.mxu0 0.0
        %1373 = vmatpush.xpose.msra.mxu0 0.0
        %1374 = vmatpush.xpose.msra.mxu0 0.0
        %1375 = vmatpush.xpose.msra.mxu0 0.0
        %1376 = vmatpush.xpose.msra.mxu0 0.0
        %1377 = vmatpush.xpose.msra.mxu0 0.0
        %1378 = vmatpush.xpose.msra.mxu0 %v1361
        %1379 = vmatmul.f32.gmra.mxu0 %v1359
        %v1380 = vpop.f32.mrf.mxu0
        %v1381 = vadd.f32 0.0, %v1380
        %1382 = vdwg.mxu0
        %v1383 = vmul.f32 %v1381, 0.35355338
        %v1384 = vsel %vm766, %v1383, -inf
        %1385 = vmax.xlane.f32.xlu0 %v1384
        %v1386 = vpop.xlane.xlu0 %1385
        %v1387 = vsub.f32 %v1383, %v1386
        %v1388 = vmul.f32 %v1387, 1.442695
        %v1389 = vpow.pop %v1388
        %v1390 = vsel %vm766, %v1389, 0.0
        %1391 = vadd.xlane.f32.xlu0 %v1390
        %v1392 = vpop.xlane.xlu0 %1391
        %v1393 = vrcp.pop %v1392
        %v1394 = vmul.f32 %v1392, %v1393
        %v1395 = vsub.f32 1.0, %v1394
        %v1396 = vmul.f32 %v1393, %v1395
        %v1397 = vadd.f32 %v1393, %v1396
        %vm1398 = vweird.f32 %v1392
        %vm1399 = vweird.f32 %v1393
        %vm1400 = vmor %vm1398, %vm1399
        %v1401 = vsel %vm1400, %v1393, %v1397
        %v1402 = vand.u32 2147483647, %v1392
        %vm1403 = vcmp.eq.f32.partialorder %v1402, 8.507059e+37
        %v1404 = vand.u32 %v1392, 2147483648
        %v1405 = vor.u32 1.1754944e-38, %v1404
        %v1406 = vsel %vm1403, %v1405, %v1401
        %v1407 = vmul.f32 %v1389, %v1406
        %1408 = vst.msk [vmem:[%s722] sm:$0xff] %vm766, %v1407
        %1409 = vrot.lane.b32.xlu0 %v1354, 64
        %v1410 = vpop.permute.xlu0 %1409
        %v1413 = vsel %vm766, %v1407, 0
        %1415 = vmatpush.msra.mxu0 0.0
        %1416 = vmatpush.msra.mxu0 0.0
        %1417 = vmatpush.msra.mxu0 0.0
        %1418 = vmatpush.msra.mxu0 0.0
        %1419 = vmatpush.msra.mxu0 0.0
        %1420 = vmatpush.msra.mxu0 0.0
        %1421 = vmatpush.msra.mxu0 0.0
        %1422 = vmatpush.msra.mxu0 0.0
        %1423 = vmatpush.msra.mxu0 0.0
        %1424 = vmatpush.msra.mxu0 0.0
        %1425 = vmatpush.msra.mxu0 0.0
        %1426 = vmatpush.msra.mxu0 0.0
        %1427 = vmatpush.msra.mxu0 0.0
        %1428 = vmatpush.msra.mxu0 0.0
        %1429 = vmatpush.msra.mxu0 0.0
        %1430 = vmatpush.msra.mxu0 %v1410
        %1431 = vmatmul.f32.gmra.mxu0 %v1413
        %v1432 = vpop.f32.mrf.mxu0
        %v1433 = vadd.f32 0.0, %v1432
        %1434 = vdwg.mxu0
        %1435 = vrot.lane.b32.xlu0 %v1354, 120
        %v1436 = vpop.permute.xlu0 %1435
        %1437 = vrot.lane.b32.xlu0 %v1354, 88
        %v1438 = vpop.permute.xlu0 %1437
        %v1439 = vsel %vm766, %v1436, 0
        %v1441 = vsel %vm766, %v1438, 0
        %1443 = vmatpush.xpose.msra.mxu0 0.0
        %1444 = vmatpush.xpose.msra.mxu0 0.0
        %1445 = vmatpush.xpose.msra.mxu0 0.0
        %1446 = vmatpush.xpose.msra.mxu0 0.0
        %1447 = vmatpush.xpose.msra.mxu0 0.0
        %1448 = vmatpush.xpose.msra.mxu0 0.0
        %1449 = vmatpush.xpose.msra.mxu0 0.0
        %1450 = vmatpush.xpose.msra.mxu0 0.0
        %1451 = vmatpush.xpose.msra.mxu0 0.0
        %1452 = vmatpush.xpose.msra.mxu0 0.0
        %1453 = vmatpush.xpose.msra.mxu0 0.0
        %1454 = vmatpush.xpose.msra.mxu0 0.0
        %1455 = vmatpush.xpose.msra.mxu0 0.0
        %1456 = vmatpush.xpose.msra.mxu0 0.0
        %1457 = vmatpush.xpose.msra.mxu0 0.0
        %1458 = vmatpush.xpose.msra.mxu0 %v1441
        %1459 = vmatmul.f32.gmra.mxu0 %v1439
        %v1460 = vpop.f32.mrf.mxu0
        %v1461 = vadd.f32 0.0, %v1460
        %1462 = vdwg.mxu0
        %v1463 = vmul.f32 %v1461, 0.35355338
        %v1464 = vsel %vm766, %v1463, -inf
        %1465 = vmax.xlane.f32.xlu0 %v1464
        %v1466 = vpop.xlane.xlu0 %1465
        %v1467 = vsub.f32 %v1463, %v1466
        %v1468 = vmul.f32 %v1467, 1.442695
        %v1469 = vpow.pop %v1468
        %v1470 = vsel %vm766, %v1469, 0.0
        %1471 = vadd.xlane.f32.xlu0 %v1470
        %v1472 = vpop.xlane.xlu0 %1471
        %v1473 = vrcp.pop %v1472
        %v1474 = vmul.f32 %v1472, %v1473
        %v1475 = vsub.f32 1.0, %v1474
        %v1476 = vmul.f32 %v1473, %v1475
        %v1477 = vadd.f32 %v1473, %v1476
        %vm1478 = vweird.f32 %v1472
        %vm1479 = vweird.f32 %v1473
        %vm1480 = vmor %vm1478, %vm1479
        %v1481 = vsel %vm1480, %v1473, %v1477
        %v1482 = vand.u32 2147483647, %v1472
        %vm1483 = vcmp.eq.f32.partialorder %v1482, 8.507059e+37
        %v1484 = vand.u32 %v1472, 2147483648
        %v1485 = vor.u32 1.1754944e-38, %v1484
        %v1486 = vsel %vm1483, %v1485, %v1481
        %v1487 = vmul.f32 %v1469, %v1486
        %s1488 = scalar_lea.vmem %s722, 8
        %1489 = vst.msk [vmem:[%s1488] sm:$0xff] %vm766, %v1487
        %1490 = vrot.lane.b32.xlu0 %v1354, 56
        %v1491 = vpop.permute.xlu0 %1490
        %v1494 = vsel %vm766, %v1487, 0
        %1496 = vmatpush.msra.mxu0 0.0
        %1497 = vmatpush.msra.mxu0 0.0
        %1498 = vmatpush.msra.mxu0 0.0
        %1499 = vmatpush.msra.mxu0 0.0
        %1500 = vmatpush.msra.mxu0 0.0
        %1501 = vmatpush.msra.mxu0 0.0
        %1502 = vmatpush.msra.mxu0 0.0
        %1503 = vmatpush.msra.mxu0 0.0
        %1504 = vmatpush.msra.mxu0 0.0
        %1505 = vmatpush.msra.mxu0 0.0
        %1506 = vmatpush.msra.mxu0 0.0
        %1507 = vmatpush.msra.mxu0 0.0
        %1508 = vmatpush.msra.mxu0 0.0
        %1509 = vmatpush.msra.mxu0 0.0
        %1510 = vmatpush.msra.mxu0 0.0
        %1511 = vmatpush.msra.mxu0 %v1491
        %1512 = vmatmul.f32.gmra.mxu0 %v1494
        %v1513 = vpop.f32.mrf.mxu0
        %v1514 = vadd.f32 0.0, %v1513
        %1515 = vdwg.mxu0
        %1516 = vrot.lane.b32.xlu0 %v1354, 112
        %v1517 = vpop.permute.xlu0 %1516
        %1518 = vrot.lane.b32.xlu0 %v1354, 80
        %v1519 = vpop.permute.xlu0 %1518
        %v1520 = vsel %vm766, %v1517, 0
        %v1522 = vsel %vm766, %v1519, 0
        %1524 = vmatpush.xpose.msra.mxu0 0.0
        %1525 = vmatpush.xpose.msra.mxu0 0.0
        %1526 = vmatpush.xpose.msra.mxu0 0.0
        %1527 = vmatpush.xpose.msra.mxu0 0.0
        %1528 = vmatpush.xpose.msra.mxu0 0.0
        %1529 = vmatpush.xpose.msra.mxu0 0.0
        %1530 = vmatpush.xpose.msra.mxu0 0.0
        %1531 = vmatpush.xpose.msra.mxu0 0.0
        %1532 = vmatpush.xpose.msra.mxu0 0.0
        %1533 = vmatpush.xpose.msra.mxu0 0.0
        %1534 = vmatpush.xpose.msra.mxu0 0.0
        %1535 = vmatpush.xpose.msra.mxu0 0.0
        %1536 = vmatpush.xpose.msra.mxu0 0.0
        %1537 = vmatpush.xpose.msra.mxu0 0.0
        %1538 = vmatpush.xpose.msra.mxu0 0.0
        %1539 = vmatpush.xpose.msra.mxu0 %v1522
        %1540 = vmatmul.f32.gmra.mxu0 %v1520
        %v1541 = vpop.f32.mrf.mxu0
        %v1542 = vadd.f32 0.0, %v1541
        %1543 = vdwg.mxu0
        %v1544 = vmul.f32 %v1542, 0.35355338
        %v1545 = vsel %vm766, %v1544, -inf
        %1546 = vmax.xlane.f32.xlu0 %v1545
        %v1547 = vpop.xlane.xlu0 %1546
        %v1548 = vsub.f32 %v1544, %v1547
        %v1549 = vmul.f32 %v1548, 1.442695
        %v1550 = vpow.pop %v1549
        %v1551 = vsel %vm766, %v1550, 0.0
        %1552 = vadd.xlane.f32.xlu0 %v1551
        %v1553 = vpop.xlane.xlu0 %1552
        %v1554 = vrcp.pop %v1553
        %v1555 = vmul.f32 %v1553, %v1554
        %v1556 = vsub.f32 1.0, %v1555
        %v1557 = vmul.f32 %v1554, %v1556
        %v1558 = vadd.f32 %v1554, %v1557
        %vm1559 = vweird.f32 %v1553
        %vm1560 = vweird.f32 %v1554
        %vm1561 = vmor %vm1559, %vm1560
        %v1562 = vsel %vm1561, %v1554, %v1558
        %v1563 = vand.u32 2147483647, %v1553
        %vm1564 = vcmp.eq.f32.partialorder %v1563, 8.507059e+37
        %v1565 = vand.u32 %v1553, 2147483648
        %v1566 = vor.u32 1.1754944e-38, %v1565
        %v1567 = vsel %vm1564, %v1566, %v1562
        %v1568 = vmul.f32 %v1550, %v1567
        %s1569 = scalar_lea.vmem %s722, 16
        %1570 = vst.msk [vmem:[%s1569] sm:$0xff] %vm766, %v1568
        %1571 = vrot.lane.b32.xlu0 %v1354, 48
        %v1572 = vpop.permute.xlu0 %1571
        %v1575 = vsel %vm766, %v1568, 0
        %1577 = vmatpush.msra.mxu0 0.0
        %1578 = vmatpush.msra.mxu0 0.0
        %1579 = vmatpush.msra.mxu0 0.0
        %1580 = vmatpush.msra.mxu0 0.0
        %1581 = vmatpush.msra.mxu0 0.0
        %1582 = vmatpush.msra.mxu0 0.0
        %1583 = vmatpush.msra.mxu0 0.0
        %1584 = vmatpush.msra.mxu0 0.0
        %1585 = vmatpush.msra.mxu0 0.0
        %1586 = vmatpush.msra.mxu0 0.0
        %1587 = vmatpush.msra.mxu0 0.0
        %1588 = vmatpush.msra.mxu0 0.0
        %1589 = vmatpush.msra.mxu0 0.0
        %1590 = vmatpush.msra.mxu0 0.0
        %1591 = vmatpush.msra.mxu0 0.0
        %1592 = vmatpush.msra.mxu0 %v1572
        %1593 = vmatmul.f32.gmra.mxu0 %v1575
        %v1594 = vpop.f32.mrf.mxu0
        %v1595 = vadd.f32 0.0, %v1594
        %1596 = vdwg.mxu0
        %1597 = vrot.lane.b32.xlu0 %v1354, 104
        %v1598 = vpop.permute.xlu0 %1597
        %1599 = vrot.lane.b32.xlu0 %v1354, 72
        %v1600 = vpop.permute.xlu0 %1599
        %v1601 = vsel %vm766, %v1598, 0
        %v1603 = vsel %vm766, %v1600, 0
        %1605 = vmatpush.xpose.msra.mxu0 0.0
        %1606 = vmatpush.xpose.msra.mxu0 0.0
        %1607 = vmatpush.xpose.msra.mxu0 0.0
        %1608 = vmatpush.xpose.msra.mxu0 0.0
        %1609 = vmatpush.xpose.msra.mxu0 0.0
        %1610 = vmatpush.xpose.msra.mxu0 0.0
        %1611 = vmatpush.xpose.msra.mxu0 0.0
        %1612 = vmatpush.xpose.msra.mxu0 0.0
        %1613 = vmatpush.xpose.msra.mxu0 0.0
        %1614 = vmatpush.xpose.msra.mxu0 0.0
        %1615 = vmatpush.xpose.msra.mxu0 0.0
        %1616 = vmatpush.xpose.msra.mxu0 0.0
        %1617 = vmatpush.xpose.msra.mxu0 0.0
        %1618 = vmatpush.xpose.msra.mxu0 0.0
        %1619 = vmatpush.xpose.msra.mxu0 0.0
        %1620 = vmatpush.xpose.msra.mxu0 %v1603
        %1621 = vmatmul.f32.gmra.mxu0 %v1601
        %v1622 = vpop.f32.mrf.mxu0
        %v1623 = vadd.f32 0.0, %v1622
        %1624 = vdwg.mxu0
        %v1625 = vmul.f32 %v1623, 0.35355338
        %v1626 = vsel %vm766, %v1625, -inf
        %1627 = vmax.xlane.f32.xlu0 %v1626
        %v1628 = vpop.xlane.xlu0 %1627
        %v1629 = vsub.f32 %v1625, %v1628
        %v1630 = vmul.f32 %v1629, 1.442695
        %v1631 = vpow.pop %v1630
        %v1632 = vsel %vm766, %v1631, 0.0
        %1633 = vadd.xlane.f32.xlu0 %v1632
        %v1634 = vpop.xlane.xlu0 %1633
        %v1635 = vrcp.pop %v1634
        %v1636 = vmul.f32 %v1634, %v1635
        %v1637 = vsub.f32 1.0, %v1636
        %v1638 = vmul.f32 %v1635, %v1637
        %v1639 = vadd.f32 %v1635, %v1638
        %vm1640 = vweird.f32 %v1634
        %vm1641 = vweird.f32 %v1635
        %vm1642 = vmor %vm1640, %vm1641
        %v1643 = vsel %vm1642, %v1635, %v1639
        %v1644 = vand.u32 2147483647, %v1634
        %vm1645 = vcmp.eq.f32.partialorder %v1644, 8.507059e+37
        %v1646 = vand.u32 %v1634, 2147483648
        %v1647 = vor.u32 1.1754944e-38, %v1646
        %v1648 = vsel %vm1645, %v1647, %v1643
        %v1649 = vmul.f32 %v1631, %v1648
        %s1650 = scalar_lea.vmem %s722, 24
        %1651 = vst.msk [vmem:[%s1650] sm:$0xff] %vm766, %v1649
        %1652 = vrot.lane.b32.xlu0 %v1354, 40
        %v1653 = vpop.permute.xlu0 %1652
        %v1656 = vsel %vm766, %v1649, 0
        %1658 = vmatpush.msra.mxu0 0.0
        %1659 = vmatpush.msra.mxu0 0.0
        %1660 = vmatpush.msra.mxu0 0.0
        %1661 = vmatpush.msra.mxu0 0.0
        %1662 = vmatpush.msra.mxu0 0.0
        %1663 = vmatpush.msra.mxu0 0.0
        %1664 = vmatpush.msra.mxu0 0.0
        %1665 = vmatpush.msra.mxu0 0.0
        %1666 = vmatpush.msra.mxu0 0.0
        %1667 = vmatpush.msra.mxu0 0.0
        %1668 = vmatpush.msra.mxu0 0.0
        %1669 = vmatpush.msra.mxu0 0.0
        %1670 = vmatpush.msra.mxu0 0.0
        %1671 = vmatpush.msra.mxu0 0.0
        %1672 = vmatpush.msra.mxu0 0.0
        %1673 = vmatpush.msra.mxu0 %v1653
        %1674 = vmatmul.f32.gmra.mxu0 %v1656
        %v1675 = vpop.f32.mrf.mxu0
        %v1676 = vadd.f32 0.0, %v1675
        %1677 = vdwg.mxu0
        %1679 = vrot.lane.b32.xlu0 %v1514, 8
        %v1680 = vpop.permute.xlu0 %1679
        %1683 = vrot.lane.b32.xlu0 %v1595, 16
        %v1684 = vpop.permute.xlu0 %1683
        %1687 = vrot.lane.b32.xlu0 %v1676, 24
        %v1688 = vpop.permute.xlu0 %1687
        %v1690 = vsel %vm766, %v1433, %v1680
        %v1691 = vsel %vm1168, %v1690, %v1684
        %v1692 = vsel %vm1170, %v1691, %v1688
        %v1693 = vperm.slane %v1325, 0
        %v1695 = vsel %vm761, %v1692, 0
        %1697 = vmatpush.msra.mxu0 0.0
        %1698 = vmatpush.msra.mxu0 0.0
        %1699 = vmatpush.msra.mxu0 0.0
        %1700 = vmatpush.msra.mxu0 0.0
        %1701 = vmatpush.msra.mxu0 0.0
        %1702 = vmatpush.msra.mxu0 0.0
        %1703 = vmatpush.msra.mxu0 0.0
        %1704 = vmatpush.msra.mxu0 0.0
        %1705 = vmatpush.msra.mxu0 0.0
        %1706 = vmatpush.msra.mxu0 0.0
        %1707 = vmatpush.msra.mxu0 0.0
        %1708 = vmatpush.msra.mxu0 0.0
        %1709 = vmatpush.msra.mxu0 %v1314
        %1710 = vmatpush.msra.mxu0 %v1313
        %1711 = vmatpush.msra.mxu0 %v1312
        %1712 = vmatpush.msra.mxu0 %v1311
        %1713 = vmatmul.f32.gmra.mxu0 %v1695
        %v1714 = vpop.f32.mrf.mxu0
        %v1715 = vadd.f32 %v1693, %v1714
        %1716 = vdwg.mxu0
        %v1717 = vadd.f32 %v1715, %v1305
        %v1718 = vsel %vm761, %v1717, 0.0
        %1719 = vadd.xlane.f32.xlu0 %v1718
        %v1720 = vpop.xlane.xlu0 %1719
        %v1721 = vmul.f32 %v1720, %v1206
        %v1722 = vsub.f32 %v1717, %v1721
        %v1723 = vmul.f32 %v1722, %v1722
        %v1724 = vsel %vm761, %v1723, 0.0
        %1725 = vadd.xlane.f32.xlu0 %v1724
        %v1726 = vpop.xlane.xlu0 %1725
        %v1727 = vmul.f32 %v1726, %v1206
        %v1728 = vadd.f32 %v1727, 1e-05
        %v1729 = vrsqrt.pop %v1728
        %v1730 = vmul.f32 %v1729, %v1728
        %v1731 = vmul.f32 %v1730, %v1729
        %v1732 = vmul.f32 0.5, %v1731
        %v1733 = vsub.f32 1.5, %v1732
        %v1734 = vmul.f32 %v1729, %v1733
        %vm1735 = vweird.f32 %v1728
        %vm1736 = vweird.f32 %v1729
        %vm1737 = vmor %vm1735, %vm1736
        %v1738 = vsel %vm1737, %v1729, %v1734
        %v1739 = vmul.f32 %v1722, %v1738
        %v1740 = vperm.slane %v1328, 0
        %v1741 = vmul.f32 %v1739, %v1740
        %v1742 = vperm.slane %v1329, 0
        %v1743 = vadd.f32 %v1741, %v1742
        %v1744 = vperm.slane %v1326, 0
        %v1746 = vsel %vm761, %v1743, 0
        %1748 = vmatpush.msra.mxu0 0.0
        %1749 = vmatpush.msra.mxu0 0.0
        %1750 = vmatpush.msra.mxu0 0.0
        %1751 = vmatpush.msra.mxu0 0.0
        %1752 = vmatpush.msra.mxu0 0.0
        %1753 = vmatpush.msra.mxu0 0.0
        %1754 = vmatpush.msra.mxu0 0.0
        %1755 = vmatpush.msra.mxu0 0.0
        %1756 = vmatpush.msra.mxu0 0.0
        %1757 = vmatpush.msra.mxu0 0.0
        %1758 = vmatpush.msra.mxu0 0.0
        %1759 = vmatpush.msra.mxu0 0.0
        %1760 = vmatpush.msra.mxu0 %v1318
        %1761 = vmatpush.msra.mxu0 %v1317
        %1762 = vmatpush.msra.mxu0 %v1316
        %1763 = vmatpush.msra.mxu0 %v1315
        %1764 = vmatmul.f32.gmra.mxu0 %v1746
        %v1765 = vpop.f32.mrf.mxu0
        %v1766 = vadd.f32 %v1744, %v1765
        %1767 = vdwg.mxu0
        %v1768 = vmax.f32 %v1766, 0.0
        %v1769 = vperm.slane %v1327, 0
        %v1771 = vsel %vm761, %v1768, 0
        %1773 = vmatpush.msra.mxu0 0.0
        %1774 = vmatpush.msra.mxu0 0.0
        %1775 = vmatpush.msra.mxu0 0.0
        %1776 = vmatpush.msra.mxu0 0.0
        %1777 = vmatpush.msra.mxu0 0.0
        %1778 = vmatpush.msra.mxu0 0.0
        %1779 = vmatpush.msra.mxu0 0.0
        %1780 = vmatpush.msra.mxu0 0.0
        %1781 = vmatpush.msra.mxu0 0.0
        %1782 = vmatpush.msra.mxu0 0.0
        %1783 = vmatpush.msra.mxu0 0.0
        %1784 = vmatpush.msra.mxu0 0.0
        %1785 = vmatpush.msra.mxu0 %v1322
        %1786 = vmatpush.msra.mxu0 %v1321
        %1787 = vmatpush.msra.mxu0 %v1320
        %1788 = vmatpush.msra.mxu0 %v1319
        %1789 = vmatmul.f32.gmra.mxu0 %v1771
        %v1790 = vpop.f32.mrf.mxu0
        %v1791 = vadd.f32 %v1769, %v1790
        %1792 = vdwg.mxu0
        %v1793 = vadd.f32 %v1791, %v1743
        %v1794 = vsel %vm761, %v1793, 0.0
        %1795 = vadd.xlane.f32.xlu0 %v1794
        %v1796 = vpop.xlane.xlu0 %1795
        %v1797 = vmul.f32 %v1796, %v1206
        %v1798 = vsub.f32 %v1793, %v1797
        %v1799 = vmul.f32 %v1798, %v1798
        %v1800 = vsel %vm761, %v1799, 0.0
        %1801 = vadd.xlane.f32.xlu0 %v1800
        %v1802 = vpop.xlane.xlu0 %1801
        %v1803 = vmul.f32 %v1802, %v1206
        %v1804 = vadd.f32 %v1803, 1e-05
        %v1805 = vrsqrt.pop %v1804
        %v1806 = vmul.f32 %v1805, %v1804
        %v1807 = vmul.f32 %v1806, %v1805
        %v1808 = vmul.f32 0.5, %v1807
        %v1809 = vsub.f32 1.5, %v1808
        %v1810 = vmul.f32 %v1805, %v1809
        %vm1811 = vweird.f32 %v1804
        %vm1812 = vweird.f32 %v1805
        %vm1813 = vmor %vm1811, %vm1812
        %v1814 = vsel %vm1813, %v1805, %v1810
        %v1815 = vmul.f32 %v1798, %v1814
        %v1816 = vperm.slane %v1330, 0
        %v1817 = vmul.f32 %v1815, %v1816
        %v1818 = vperm.slane %v1331, 0
        %v1819 = vadd.f32 %v1817, %v1818
        %v1820 = vld [vmem:[#allocation8] sm:$0xff]
        %v1821 = vld [vmem:[#allocation8 + $0x20] sm:$0xff]
        %v1822 = vld [vmem:[#allocation8 + $0x40] sm:$0xff]
        %v1823 = vld [vmem:[#allocation8 + $0x60] sm:$0xff]
        %v1824 = vld [vmem:[#allocation8 + $0x8] sm:$0xff]
        %v1825 = vld [vmem:[#allocation8 + $0x28] sm:$0xff]
        %v1826 = vld [vmem:[#allocation8 + $0x48] sm:$0xff]
        %v1827 = vld [vmem:[#allocation8 + $0x68] sm:$0xff]
        %v1828 = vld [vmem:[#allocation8 + $0x10] sm:$0xff]
        %v1829 = vld [vmem:[#allocation8 + $0x30] sm:$0xff]
        %v1830 = vld [vmem:[#allocation8 + $0x50] sm:$0xff]
        %v1831 = vld [vmem:[#allocation8 + $0x70] sm:$0xff]
        %v1832 = vld [vmem:[#allocation8 + $0x18] sm:$0xff]
        %v1833 = vld [vmem:[#allocation8 + $0x38] sm:$0xff]
        %v1834 = vld [vmem:[#allocation8 + $0x58] sm:$0xff]
        %v1835 = vld [vmem:[#allocation8 + $0x78] sm:$0xff]
        %v1836 = vld [vmem:[#allocation10] sm:$0x1]
        %v1837 = vld [vmem:[#allocation10 + $0x1] sm:$0x1]
        %v1838 = vld [vmem:[#allocation10 + $0x2] sm:$0x1]
        %v1839 = vld [vmem:[#allocation10 + $0x3] sm:$0x1]
        %v1840 = vld [vmem:[#allocation10 + $0x4] sm:$0x1]
        %v1841 = vld [vmem:[#allocation10 + $0x5] sm:$0x1]
        %v1842 = vld [vmem:[#allocation10 + $0x6] sm:$0x1]
        %v1843 = vld [vmem:[#allocation10 + $0x7] sm:$0x1]
        %v1844 = vperm.slane %v1836, 0
        %v1846 = vsel %vm761, %v788, 0
        %1848 = vmatpush.msra.mxu0 0.0
        %1849 = vmatpush.msra.mxu0 0.0
        %1850 = vmatpush.msra.mxu0 0.0
        %1851 = vmatpush.msra.mxu0 0.0
        %1852 = vmatpush.msra.mxu0 0.0
        %1853 = vmatpush.msra.mxu0 0.0
        %1854 = vmatpush.msra.mxu0 0.0
        %1855 = vmatpush.msra.mxu0 0.0
        %1856 = vmatpush.msra.mxu0 0.0
        %1857 = vmatpush.msra.mxu0 0.0
        %1858 = vmatpush.msra.mxu0 0.0
        %1859 = vmatpush.msra.mxu0 0.0
        %1860 = vmatpush.msra.mxu0 %v1823
        %1861 = vmatpush.msra.mxu0 %v1822
        %1862 = vmatpush.msra.mxu0 %v1821
        %1863 = vmatpush.msra.mxu0 %v1820
        %1864 = vmatmul.f32.gmra.mxu0 %v1846
        %v1865 = vpop.f32.mrf.mxu0
        %v1866 = vadd.f32 %v1844, %v1865
        %1867 = vdwg.mxu0
        %1869 = vrot.lane.b32.xlu0 %v1866, 96
        %v1870 = vpop.permute.xlu0 %1869
        %v1871 = vsel %vm766, %v1866, 0
        %v1873 = vsel %vm766, %v1870, 0
        %1875 = vmatpush.xpose.msra.mxu0 0.0
        %1876 = vmatpush.xpose.msra.mxu0 0.0
        %1877 = vmatpush.xpose.msra.mxu0 0.0
        %1878 = vmatpush.xpose.msra.mxu0 0.0
        %1879 = vmatpush.xpose.msra.mxu0 0.0
        %1880 = vmatpush.xpose.msra.mxu0 0.0
        %1881 = vmatpush.xpose.msra.mxu0 0.0
        %1882 = vmatpush.xpose.msra.mxu0 0.0
        %1883 = vmatpush.xpose.msra.mxu0 0.0
        %1884 = vmatpush.xpose.msra.mxu0 0.0
        %1885 = vmatpush.xpose.msra.mxu0 0.0
        %1886 = vmatpush.xpose.msra.mxu0 0.0
        %1887 = vmatpush.xpose.msra.mxu0 0.0
        %1888 = vmatpush.xpose.msra.mxu0 0.0
        %1889 = vmatpush.xpose.msra.mxu0 0.0
        %1890 = vmatpush.xpose.msra.mxu0 %v1873
        %1891 = vmatmul.f32.gmra.mxu0 %v1871
        %v1892 = vpop.f32.mrf.mxu0
        %v1893 = vadd.f32 0.0, %v1892
        %1894 = vdwg.mxu0
        %v1895 = vmul.f32 %v1893, 0.35355338
        %vm1896 = vcmask 27648
        %v1897 = vsel %vm1896, %v1895, -inf
        %1898 = vmax.xlane.f32.xlu0 %v1897
        %v1899 = vpop.xlane.xlu0 %1898
        %v1900 = vsub.f32 %v1895, %v1899
        %v1901 = vmul.f32 %v1900, 1.442695
        %v1902 = vpow.pop %v1901
        %v1903 = vsel %vm1896, %v1902, 0.0
        %1904 = vadd.xlane.f32.xlu0 %v1903
        %v1905 = vpop.xlane.xlu0 %1904
        %v1906 = vrcp.pop %v1905
        %v1907 = vmul.f32 %v1905, %v1906
        %v1908 = vsub.f32 1.0, %v1907
        %v1909 = vmul.f32 %v1906, %v1908
        %v1910 = vadd.f32 %v1906, %v1909
        %vm1911 = vweird.f32 %v1905
        %vm1912 = vweird.f32 %v1906
        %vm1913 = vmor %vm1911, %vm1912
        %v1914 = vsel %vm1913, %v1906, %v1910
        %v1915 = vand.u32 2147483647, %v1905
        %vm1916 = vcmp.eq.f32.partialorder %v1915, 8.507059e+37
        %v1917 = vand.u32 %v1905, 2147483648
        %v1918 = vor.u32 1.1754944e-38, %v1917
        %v1919 = vsel %vm1916, %v1918, %v1914
        %v1920 = vmul.f32 %v1902, %v1919
        %1921 = vrot.lane.b32.xlu0 %v1866, 64
        %v1922 = vpop.permute.xlu0 %1921
        %v1924 = vsel %vm733, %v1920, 0
        %v1926 = vsel %vm737, %v1922, 0
        %1928 = vmatpush.msra.mxu0 0.0
        %1929 = vmatpush.msra.mxu0 0.0
        %1930 = vmatpush.msra.mxu0 0.0
        %1931 = vmatpush.msra.mxu0 0.0
        %1932 = vmatpush.msra.mxu0 0.0
        %1933 = vmatpush.msra.mxu0 0.0
        %1934 = vmatpush.msra.mxu0 0.0
        %1935 = vmatpush.msra.mxu0 0.0
        %1936 = vmatpush.msra.mxu0 0.0
        %1937 = vmatpush.msra.mxu0 0.0
        %1938 = vmatpush.msra.mxu0 0.0
        %1939 = vmatpush.msra.mxu0 0.0
        %1940 = vmatpush.msra.mxu0 0.0
        %1941 = vmatpush.msra.mxu0 0.0
        %1942 = vmatpush.msra.mxu0 0.0
        %1943 = vmatpush.msra.mxu0 %v1926
        %1944 = vmatmul.f32.gmra.mxu0 %v1924
        %v1945 = vpop.f32.mrf.mxu0
        %v1946 = vadd.f32 0.0, %v1945
        %1947 = vdwg.mxu0
        %1948 = vrot.lane.b32.xlu0 %v1866, 120
        %v1949 = vpop.permute.xlu0 %1948
        %1950 = vrot.lane.b32.xlu0 %v1866, 88
        %v1951 = vpop.permute.xlu0 %1950
        %v1952 = vsel %vm766, %v1949, 0
        %v1954 = vsel %vm766, %v1951, 0
        %1956 = vmatpush.xpose.msra.mxu0 0.0
        %1957 = vmatpush.xpose.msra.mxu0 0.0
        %1958 = vmatpush.xpose.msra.mxu0 0.0
        %1959 = vmatpush.xpose.msra.mxu0 0.0
        %1960 = vmatpush.xpose.msra.mxu0 0.0
        %1961 = vmatpush.xpose.msra.mxu0 0.0
        %1962 = vmatpush.xpose.msra.mxu0 0.0
        %1963 = vmatpush.xpose.msra.mxu0 0.0
        %1964 = vmatpush.xpose.msra.mxu0 0.0
        %1965 = vmatpush.xpose.msra.mxu0 0.0
        %1966 = vmatpush.xpose.msra.mxu0 0.0
        %1967 = vmatpush.xpose.msra.mxu0 0.0
        %1968 = vmatpush.xpose.msra.mxu0 0.0
        %1969 = vmatpush.xpose.msra.mxu0 0.0
        %1970 = vmatpush.xpose.msra.mxu0 0.0
        %1971 = vmatpush.xpose.msra.mxu0 %v1954
        %1972 = vmatmul.f32.gmra.mxu0 %v1952
        %v1973 = vpop.f32.mrf.mxu0
        %v1974 = vadd.f32 0.0, %v1973
        %1975 = vdwg.mxu0
        %v1976 = vmul.f32 %v1974, 0.35355338
        %v1977 = vsel %vm1896, %v1976, -inf
        %1978 = vmax.xlane.f32.xlu0 %v1977
        %v1979 = vpop.xlane.xlu0 %1978
        %v1980 = vsub.f32 %v1976, %v1979
        %v1981 = vmul.f32 %v1980, 1.442695
        %v1982 = vpow.pop %v1981
        %v1983 = vsel %vm1896, %v1982, 0.0
        %1984 = vadd.xlane.f32.xlu0 %v1983
        %v1985 = vpop.xlane.xlu0 %1984
        %v1986 = vrcp.pop %v1985
        %v1987 = vmul.f32 %v1985, %v1986
        %v1988 = vsub.f32 1.0, %v1987
        %v1989 = vmul.f32 %v1986, %v1988
        %v1990 = vadd.f32 %v1986, %v1989
        %vm1991 = vweird.f32 %v1985
        %vm1992 = vweird.f32 %v1986
        %vm1993 = vmor %vm1991, %vm1992
        %v1994 = vsel %vm1993, %v1986, %v1990
        %v1995 = vand.u32 2147483647, %v1985
        %vm1996 = vcmp.eq.f32.partialorder %v1995, 8.507059e+37
        %v1997 = vand.u32 %v1985, 2147483648
        %v1998 = vor.u32 1.1754944e-38, %v1997
        %v1999 = vsel %vm1996, %v1998, %v1994
        %v2000 = vmul.f32 %v1982, %v1999
        %2001 = vrot.lane.b32.xlu0 %v1866, 56
        %v2002 = vpop.permute.xlu0 %2001
        %v2004 = vsel %vm733, %v2000, 0
        %v2006 = vsel %vm737, %v2002, 0
        %2008 = vmatpush.msra.mxu0 0.0
        %2009 = vmatpush.msra.mxu0 0.0
        %2010 = vmatpush.msra.mxu0 0.0
        %2011 = vmatpush.msra.mxu0 0.0
        %2012 = vmatpush.msra.mxu0 0.0
        %2013 = vmatpush.msra.mxu0 0.0
        %2014 = vmatpush.msra.mxu0 0.0
        %2015 = vmatpush.msra.mxu0 0.0
        %2016 = vmatpush.msra.mxu0 0.0
        %2017 = vmatpush.msra.mxu0 0.0
        %2018 = vmatpush.msra.mxu0 0.0
        %2019 = vmatpush.msra.mxu0 0.0
        %2020 = vmatpush.msra.mxu0 0.0
        %2021 = vmatpush.msra.mxu0 0.0
        %2022 = vmatpush.msra.mxu0 0.0
        %2023 = vmatpush.msra.mxu0 %v2006
        %2024 = vmatmul.f32.gmra.mxu0 %v2004
        %v2025 = vpop.f32.mrf.mxu0
        %v2026 = vadd.f32 0.0, %v2025
        %2027 = vdwg.mxu0
        %2028 = vrot.lane.b32.xlu0 %v1866, 112
        %v2029 = vpop.permute.xlu0 %2028
        %2030 = vrot.lane.b32.xlu0 %v1866, 80
        %v2031 = vpop.permute.xlu0 %2030
        %v2032 = vsel %vm766, %v2029, 0
        %v2034 = vsel %vm766, %v2031, 0
        %2036 = vmatpush.xpose.msra.mxu0 0.0
        %2037 = vmatpush.xpose.msra.mxu0 0.0
        %2038 = vmatpush.xpose.msra.mxu0 0.0
        %2039 = vmatpush.xpose.msra.mxu0 0.0
        %2040 = vmatpush.xpose.msra.mxu0 0.0
        %2041 = vmatpush.xpose.msra.mxu0 0.0
        %2042 = vmatpush.xpose.msra.mxu0 0.0
        %2043 = vmatpush.xpose.msra.mxu0 0.0
        %2044 = vmatpush.xpose.msra.mxu0 0.0
        %2045 = vmatpush.xpose.msra.mxu0 0.0
        %2046 = vmatpush.xpose.msra.mxu0 0.0
        %2047 = vmatpush.xpose.msra.mxu0 0.0
        %2048 = vmatpush.xpose.msra.mxu0 0.0
        %2049 = vmatpush.xpose.msra.mxu0 0.0
        %2050 = vmatpush.xpose.msra.mxu0 0.0
        %2051 = vmatpush.xpose.msra.mxu0 %v2034
        %2052 = vmatmul.f32.gmra.mxu0 %v2032
        %v2053 = vpop.f32.mrf.mxu0
        %v2054 = vadd.f32 0.0, %v2053
        %2055 = vdwg.mxu0
        %v2056 = vmul.f32 %v2054, 0.35355338
        %v2057 = vsel %vm1896, %v2056, -inf
        %2058 = vmax.xlane.f32.xlu0 %v2057
        %v2059 = vpop.xlane.xlu0 %2058
        %v2060 = vsub.f32 %v2056, %v2059
        %v2061 = vmul.f32 %v2060, 1.442695
        %v2062 = vpow.pop %v2061
        %v2063 = vsel %vm1896, %v2062, 0.0
        %2064 = vadd.xlane.f32.xlu0 %v2063
        %v2065 = vpop.xlane.xlu0 %2064
        %v2066 = vrcp.pop %v2065
        %v2067 = vmul.f32 %v2065, %v2066
        %v2068 = vsub.f32 1.0, %v2067
        %v2069 = vmul.f32 %v2066, %v2068
        %v2070 = vadd.f32 %v2066, %v2069
        %vm2071 = vweird.f32 %v2065
        %vm2072 = vweird.f32 %v2066
        %vm2073 = vmor %vm2071, %vm2072
        %v2074 = vsel %vm2073, %v2066, %v2070
        %v2075 = vand.u32 2147483647, %v2065
        %vm2076 = vcmp.eq.f32.partialorder %v2075, 8.507059e+37
        %v2077 = vand.u32 %v2065, 2147483648
        %v2078 = vor.u32 1.1754944e-38, %v2077
        %v2079 = vsel %vm2076, %v2078, %v2074
        %v2080 = vmul.f32 %v2062, %v2079
        %2081 = vrot.lane.b32.xlu0 %v1866, 48
        %v2082 = vpop.permute.xlu0 %2081
        %v2084 = vsel %vm733, %v2080, 0
        %v2086 = vsel %vm737, %v2082, 0
        %2088 = vmatpush.msra.mxu0 0.0
        %2089 = vmatpush.msra.mxu0 0.0
        %2090 = vmatpush.msra.mxu0 0.0
        %2091 = vmatpush.msra.mxu0 0.0
        %2092 = vmatpush.msra.mxu0 0.0
        %2093 = vmatpush.msra.mxu0 0.0
        %2094 = vmatpush.msra.mxu0 0.0
        %2095 = vmatpush.msra.mxu0 0.0
        %2096 = vmatpush.msra.mxu0 0.0
        %2097 = vmatpush.msra.mxu0 0.0
        %2098 = vmatpush.msra.mxu0 0.0
        %2099 = vmatpush.msra.mxu0 0.0
        %2100 = vmatpush.msra.mxu0 0.0
        %2101 = vmatpush.msra.mxu0 0.0
        %2102 = vmatpush.msra.mxu0 0.0
        %2103 = vmatpush.msra.mxu0 %v2086
        %2104 = vmatmul.f32.gmra.mxu0 %v2084
        %v2105 = vpop.f32.mrf.mxu0
        %v2106 = vadd.f32 0.0, %v2105
        %2107 = vdwg.mxu0
        %2108 = vrot.lane.b32.xlu0 %v1866, 104
        %v2109 = vpop.permute.xlu0 %2108
        %2110 = vrot.lane.b32.xlu0 %v1866, 72
        %v2111 = vpop.permute.xlu0 %2110
        %v2112 = vsel %vm766, %v2109, 0
        %v2114 = vsel %vm766, %v2111, 0
        %2116 = vmatpush.xpose.msra.mxu0 0.0
        %2117 = vmatpush.xpose.msra.mxu0 0.0
        %2118 = vmatpush.xpose.msra.mxu0 0.0
        %2119 = vmatpush.xpose.msra.mxu0 0.0
        %2120 = vmatpush.xpose.msra.mxu0 0.0
        %2121 = vmatpush.xpose.msra.mxu0 0.0
        %2122 = vmatpush.xpose.msra.mxu0 0.0
        %2123 = vmatpush.xpose.msra.mxu0 0.0
        %2124 = vmatpush.xpose.msra.mxu0 0.0
        %2125 = vmatpush.xpose.msra.mxu0 0.0
        %2126 = vmatpush.xpose.msra.mxu0 0.0
        %2127 = vmatpush.xpose.msra.mxu0 0.0
        %2128 = vmatpush.xpose.msra.mxu0 0.0
        %2129 = vmatpush.xpose.msra.mxu0 0.0
        %2130 = vmatpush.xpose.msra.mxu0 0.0
        %2131 = vmatpush.xpose.msra.mxu0 %v2114
        %2132 = vmatmul.f32.gmra.mxu0 %v2112
        %v2133 = vpop.f32.mrf.mxu0
        %v2134 = vadd.f32 0.0, %v2133
        %2135 = vdwg.mxu0
        %v2136 = vmul.f32 %v2134, 0.35355338
        %v2137 = vsel %vm1896, %v2136, -inf
        %2138 = vmax.xlane.f32.xlu0 %v2137
        %v2139 = vpop.xlane.xlu0 %2138
        %v2140 = vsub.f32 %v2136, %v2139
        %v2141 = vmul.f32 %v2140, 1.442695
        %v2142 = vpow.pop %v2141
        %v2143 = vsel %vm1896, %v2142, 0.0
        %2144 = vadd.xlane.f32.xlu0 %v2143
        %v2145 = vpop.xlane.xlu0 %2144
        %v2146 = vrcp.pop %v2145
        %v2147 = vmul.f32 %v2145, %v2146
        %v2148 = vsub.f32 1.0, %v2147
        %v2149 = vmul.f32 %v2146, %v2148
        %v2150 = vadd.f32 %v2146, %v2149
        %vm2151 = vweird.f32 %v2145
        %vm2152 = vweird.f32 %v2146
        %vm2153 = vmor %vm2151, %vm2152
        %v2154 = vsel %vm2153, %v2146, %v2150
        %v2155 = vand.u32 2147483647, %v2145
        %vm2156 = vcmp.eq.f32.partialorder %v2155, 8.507059e+37
        %v2157 = vand.u32 %v2145, 2147483648
        %v2158 = vor.u32 1.1754944e-38, %v2157
        %v2159 = vsel %vm2156, %v2158, %v2154
        %v2160 = vmul.f32 %v2142, %v2159
        %2161 = vrot.lane.b32.xlu0 %v1866, 40
        %v2162 = vpop.permute.xlu0 %2161
        %v2164 = vsel %vm733, %v2160, 0
        %v2166 = vsel %vm737, %v2162, 0
        %2168 = vmatpush.msra.mxu0 0.0
        %2169 = vmatpush.msra.mxu0 0.0
        %2170 = vmatpush.msra.mxu0 0.0
        %2171 = vmatpush.msra.mxu0 0.0
        %2172 = vmatpush.msra.mxu0 0.0
        %2173 = vmatpush.msra.mxu0 0.0
        %2174 = vmatpush.msra.mxu0 0.0
        %2175 = vmatpush.msra.mxu0 0.0
        %2176 = vmatpush.msra.mxu0 0.0
        %2177 = vmatpush.msra.mxu0 0.0
        %2178 = vmatpush.msra.mxu0 0.0
        %2179 = vmatpush.msra.mxu0 0.0
        %2180 = vmatpush.msra.mxu0 0.0
        %2181 = vmatpush.msra.mxu0 0.0
        %2182 = vmatpush.msra.mxu0 0.0
        %2183 = vmatpush.msra.mxu0 %v2166
        %2184 = vmatmul.f32.gmra.mxu0 %v2164
        %v2185 = vpop.f32.mrf.mxu0
        %v2186 = vadd.f32 0.0, %v2185
        %2187 = vdwg.mxu0
        %2189 = vrot.lane.b32.xlu0 %v2026, 8
        %v2190 = vpop.permute.xlu0 %2189
        %2193 = vrot.lane.b32.xlu0 %v2106, 16
        %v2194 = vpop.permute.xlu0 %2193
        %2197 = vrot.lane.b32.xlu0 %v2186, 24
        %v2198 = vpop.permute.xlu0 %2197
        %v2200 = vsel %vm766, %v1946, %v2190
        %v2201 = vsel %vm1168, %v2200, %v2194
        %v2202 = vsel %vm1170, %v2201, %v2198
        %v2203 = vperm.slane %v1837, 0
        %v2205 = vsel %vm761, %v2202, 0
        %2207 = vmatpush.msra.mxu0 0.0
        %2208 = vmatpush.msra.mxu0 0.0
        %2209 = vmatpush.msra.mxu0 0.0
        %2210 = vmatpush.msra.mxu0 0.0
        %2211 = vmatpush.msra.mxu0 0.0
        %2212 = vmatpush.msra.mxu0 0.0
        %2213 = vmatpush.msra.mxu0 0.0
        %2214 = vmatpush.msra.mxu0 0.0
        %2215 = vmatpush.msra.mxu0 0.0
        %2216 = vmatpush.msra.mxu0 0.0
        %2217 = vmatpush.msra.mxu0 0.0
        %2218 = vmatpush.msra.mxu0 0.0
        %2219 = vmatpush.msra.mxu0 %v1827
        %2220 = vmatpush.msra.mxu0 %v1826
        %2221 = vmatpush.msra.mxu0 %v1825
        %2222 = vmatpush.msra.mxu0 %v1824
        %2223 = vmatmul.f32.gmra.mxu0 %v2205
        %v2224 = vpop.f32.mrf.mxu0
        %v2225 = vadd.f32 %v2203, %v2224
        %2226 = vdwg.mxu0
        %v2227 = vadd.f32 %v2225, %v788
        %v2228 = vsel %vm790, %v2227, 0.0
        %2229 = vadd.xlane.f32.xlu0 %v2228
        %v2230 = vpop.xlane.xlu0 %2229
        %v2231 = vmul.f32 %v2230, %v1206
        %v2232 = vsub.f32 %v2227, %v2231
        %v2233 = vmul.f32 %v2232, %v2232
        %v2234 = vsel %vm790, %v2233, 0.0
        %2235 = vadd.xlane.f32.xlu0 %v2234
        %v2236 = vpop.xlane.xlu0 %2235
        %v2237 = vmul.f32 %v2236, %v1206
        %v2238 = vadd.f32 %v2237, 1e-05
        %v2239 = vrsqrt.pop %v2238
        %v2240 = vmul.f32 %v2239, %v2238
        %v2241 = vmul.f32 %v2240, %v2239
        %v2242 = vmul.f32 0.5, %v2241
        %v2243 = vsub.f32 1.5, %v2242
        %v2244 = vmul.f32 %v2239, %v2243
        %vm2245 = vweird.f32 %v2238
        %vm2246 = vweird.f32 %v2239
        %vm2247 = vmor %vm2245, %vm2246
        %v2248 = vsel %vm2247, %v2239, %v2244
        %v2249 = vmul.f32 %v2232, %v2248
        %v2250 = vperm.slane %v1840, 0
        %v2251 = vmul.f32 %v2249, %v2250
        %v2252 = vperm.slane %v1841, 0
        %v2253 = vadd.f32 %v2251, %v2252
        %v2254 = vperm.slane %v1838, 0
        %v2256 = vsel %vm761, %v2253, 0
        %2258 = vmatpush.msra.mxu0 0.0
        %2259 = vmatpush.msra.mxu0 0.0
        %2260 = vmatpush.msra.mxu0 0.0
        %2261 = vmatpush.msra.mxu0 0.0
        %2262 = vmatpush.msra.mxu0 0.0
        %2263 = vmatpush.msra.mxu0 0.0
        %2264 = vmatpush.msra.mxu0 0.0
        %2265 = vmatpush.msra.mxu0 0.0
        %2266 = vmatpush.msra.mxu0 0.0
        %2267 = vmatpush.msra.mxu0 0.0
        %2268 = vmatpush.msra.mxu0 0.0
        %2269 = vmatpush.msra.mxu0 0.0
        %2270 = vmatpush.msra.mxu0 %v1831
        %2271 = vmatpush.msra.mxu0 %v1830
        %2272 = vmatpush.msra.mxu0 %v1829
        %2273 = vmatpush.msra.mxu0 %v1828
        %2274 = vmatmul.f32.gmra.mxu0 %v2256
        %v2275 = vpop.f32.mrf.mxu0
        %v2276 = vadd.f32 %v2254, %v2275
        %2277 = vdwg.mxu0
        %v2278 = vmax.f32 %v2276, 0.0
        %v2279 = vperm.slane %v1839, 0
        %v2281 = vsel %vm761, %v2278, 0
        %2283 = vmatpush.msra.mxu0 0.0
        %2284 = vmatpush.msra.mxu0 0.0
        %2285 = vmatpush.msra.mxu0 0.0
        %2286 = vmatpush.msra.mxu0 0.0
        %2287 = vmatpush.msra.mxu0 0.0
        %2288 = vmatpush.msra.mxu0 0.0
        %2289 = vmatpush.msra.mxu0 0.0
        %2290 = vmatpush.msra.mxu0 0.0
        %2291 = vmatpush.msra.mxu0 0.0
        %2292 = vmatpush.msra.mxu0 0.0
        %2293 = vmatpush.msra.mxu0 0.0
        %2294 = vmatpush.msra.mxu0 0.0
        %2295 = vmatpush.msra.mxu0 %v1835
        %2296 = vmatpush.msra.mxu0 %v1834
        %2297 = vmatpush.msra.mxu0 %v1833
        %2298 = vmatpush.msra.mxu0 %v1832
        %2299 = vmatmul.f32.gmra.mxu0 %v2281
        %v2300 = vpop.f32.mrf.mxu0
        %v2301 = vadd.f32 %v2279, %v2300
        %2302 = vdwg.mxu0
        %v2303 = vadd.f32 %v2301, %v2253
        %v2304 = vsel %vm790, %v2303, 0.0
        %2305 = vadd.xlane.f32.xlu0 %v2304
        %v2306 = vpop.xlane.xlu0 %2305
        %v2307 = vmul.f32 %v2306, %v1206
        %v2308 = vsub.f32 %v2303, %v2307
        %v2309 = vmul.f32 %v2308, %v2308
        %v2310 = vsel %vm790, %v2309, 0.0
        %2311 = vadd.xlane.f32.xlu0 %v2310
        %v2312 = vpop.xlane.xlu0 %2311
        %v2313 = vmul.f32 %v2312, %v1206
        %v2314 = vadd.f32 %v2313, 1e-05
        %v2315 = vrsqrt.pop %v2314
        %v2316 = vmul.f32 %v2315, %v2314
        %v2317 = vmul.f32 %v2316, %v2315
        %v2318 = vmul.f32 0.5, %v2317
        %v2319 = vsub.f32 1.5, %v2318
        %v2320 = vmul.f32 %v2315, %v2319
        %vm2321 = vweird.f32 %v2314
        %vm2322 = vweird.f32 %v2315
        %vm2323 = vmor %vm2321, %vm2322
        %v2324 = vsel %vm2323, %v2315, %v2320
        %v2325 = vmul.f32 %v2308, %v2324
        %v2326 = vperm.slane %v1842, 0
        %v2327 = vmul.f32 %v2325, %v2326
        %v2328 = vperm.slane %v1843, 0
        %v2329 = vadd.f32 %v2327, %v2328
        %s2330 = scalar_lea.vmem [#allocation8], 128
        %v2331 = vld [vmem:[%s2330] sm:$0xff]
        %v2332 = vld [vmem:[%s2330 + $0x20] sm:$0xff]
        %v2333 = vld [vmem:[%s2330 + $0x40] sm:$0xff]
        %v2334 = vld [vmem:[%s2330 + $0x60] sm:$0xff]
        %v2335 = vld [vmem:[%s2330 + $0x8] sm:$0xff]
        %v2336 = vld [vmem:[%s2330 + $0x28] sm:$0xff]
        %v2337 = vld [vmem:[%s2330 + $0x48] sm:$0xff]
        %v2338 = vld [vmem:[%s2330 + $0x68] sm:$0xff]
        %v2339 = vld [vmem:[%s2330 + $0x10] sm:$0xff]
        %v2340 = vld [vmem:[%s2330 + $0x30] sm:$0xff]
        %v2341 = vld [vmem:[%s2330 + $0x50] sm:$0xff]
        %v2342 = vld [vmem:[%s2330 + $0x70] sm:$0xff]
        %v2343 = vld [vmem:[%s2330 + $0x18] sm:$0xff]
        %v2344 = vld [vmem:[%s2330 + $0x38] sm:$0xff]
        %v2345 = vld [vmem:[%s2330 + $0x58] sm:$0xff]
        %v2346 = vld [vmem:[%s2330 + $0x78] sm:$0xff]
        %s2347 = scalar_lea.vmem [#allocation10], 8
        %v2348 = vld [vmem:[%s2347] sm:$0x1]
        %v2349 = vld [vmem:[%s2347 + $0x1] sm:$0x1]
        %v2350 = vld [vmem:[%s2347 + $0x2] sm:$0x1]
        %v2351 = vld [vmem:[%s2347 + $0x3] sm:$0x1]
        %v2352 = vld [vmem:[%s2347 + $0x4] sm:$0x1]
        %v2353 = vld [vmem:[%s2347 + $0x5] sm:$0x1]
        %v2354 = vld [vmem:[%s2347 + $0x6] sm:$0x1]
        %v2355 = vld [vmem:[%s2347 + $0x7] sm:$0x1]
        %v2356 = vperm.slane %v2348, 0
        %v2358 = vsel %vm761, %v2329, 0
        %2360 = vmatpush.msra.mxu0 0.0
        %2361 = vmatpush.msra.mxu0 0.0
        %2362 = vmatpush.msra.mxu0 0.0
        %2363 = vmatpush.msra.mxu0 0.0
        %2364 = vmatpush.msra.mxu0 0.0
        %2365 = vmatpush.msra.mxu0 0.0
        %2366 = vmatpush.msra.mxu0 0.0
        %2367 = vmatpush.msra.mxu0 0.0
        %2368 = vmatpush.msra.mxu0 0.0
        %2369 = vmatpush.msra.mxu0 0.0
        %2370 = vmatpush.msra.mxu0 0.0
        %2371 = vmatpush.msra.mxu0 0.0
        %2372 = vmatpush.msra.mxu0 %v2334
        %2373 = vmatpush.msra.mxu0 %v2333
        %2374 = vmatpush.msra.mxu0 %v2332
        %2375 = vmatpush.msra.mxu0 %v2331
        %2376 = vmatmul.f32.gmra.mxu0 %v2358
        %v2377 = vpop.f32.mrf.mxu0
        %v2378 = vadd.f32 %v2356, %v2377
        %2379 = vdwg.mxu0
        %2381 = vrot.lane.b32.xlu0 %v2378, 96
        %v2382 = vpop.permute.xlu0 %2381
        %v2383 = vsel %vm766, %v2378, 0
        %v2385 = vsel %vm766, %v2382, 0
        %2387 = vmatpush.xpose.msra.mxu0 0.0
        %2388 = vmatpush.xpose.msra.mxu0 0.0
        %2389 = vmatpush.xpose.msra.mxu0 0.0
        %2390 = vmatpush.xpose.msra.mxu0 0.0
        %2391 = vmatpush.xpose.msra.mxu0 0.0
        %2392 = vmatpush.xpose.msra.mxu0 0.0
        %2393 = vmatpush.xpose.msra.mxu0 0.0
        %2394 = vmatpush.xpose.msra.mxu0 0.0
        %2395 = vmatpush.xpose.msra.mxu0 0.0
        %2396 = vmatpush.xpose.msra.mxu0 0.0
        %2397 = vmatpush.xpose.msra.mxu0 0.0
        %2398 = vmatpush.xpose.msra.mxu0 0.0
        %2399 = vmatpush.xpose.msra.mxu0 0.0
        %2400 = vmatpush.xpose.msra.mxu0 0.0
        %2401 = vmatpush.xpose.msra.mxu0 0.0
        %2402 = vmatpush.xpose.msra.mxu0 %v2385
        %2403 = vmatmul.f32.gmra.mxu0 %v2383
        %v2404 = vpop.f32.mrf.mxu0
        %v2405 = vadd.f32 0.0, %v2404
        %2406 = vdwg.mxu0
        %v2407 = vmul.f32 %v2405, 0.35355338
        %v2408 = vsel %vm1896, %v2407, -inf
        %2409 = vmax.xlane.f32.xlu0 %v2408
        %v2410 = vpop.xlane.xlu0 %2409
        %v2411 = vsub.f32 %v2407, %v2410
        %v2412 = vmul.f32 %v2411, 1.442695
        %v2413 = vpow.pop %v2412
        %v2414 = vsel %vm1896, %v2413, 0.0
        %2415 = vadd.xlane.f32.xlu0 %v2414
        %v2416 = vpop.xlane.xlu0 %2415
        %v2417 = vrcp.pop %v2416
        %v2418 = vmul.f32 %v2416, %v2417
        %v2419 = vsub.f32 1.0, %v2418
        %v2420 = vmul.f32 %v2417, %v2419
        %v2421 = vadd.f32 %v2417, %v2420
        %vm2422 = vweird.f32 %v2416
        %vm2423 = vweird.f32 %v2417
        %vm2424 = vmor %vm2422, %vm2423
        %v2425 = vsel %vm2424, %v2417, %v2421
        %v2426 = vand.u32 2147483647, %v2416
        %vm2427 = vcmp.eq.f32.partialorder %v2426, 8.507059e+37
        %v2428 = vand.u32 %v2416, 2147483648
        %v2429 = vor.u32 1.1754944e-38, %v2428
        %v2430 = vsel %vm2427, %v2429, %v2425
        %v2431 = vmul.f32 %v2413, %v2430
        %2432 = vst.msk [vmem:[%s727] sm:$0xf] %vm1896, %v2431
        %2433 = vrot.lane.b32.xlu0 %v2378, 64
        %v2434 = vpop.permute.xlu0 %2433
        %v2436 = vsel %vm733, %v2431, 0
        %v2438 = vsel %vm737, %v2434, 0
        %2440 = vmatpush.msra.mxu0 0.0
        %2441 = vmatpush.msra.mxu0 0.0
        %2442 = vmatpush.msra.mxu0 0.0
        %2443 = vmatpush.msra.mxu0 0.0
        %2444 = vmatpush.msra.mxu0 0.0
        %2445 = vmatpush.msra.mxu0 0.0
        %2446 = vmatpush.msra.mxu0 0.0
        %2447 = vmatpush.msra.mxu0 0.0
        %2448 = vmatpush.msra.mxu0 0.0
        %2449 = vmatpush.msra.mxu0 0.0
        %2450 = vmatpush.msra.mxu0 0.0
        %2451 = vmatpush.msra.mxu0 0.0
        %2452 = vmatpush.msra.mxu0 0.0
        %2453 = vmatpush.msra.mxu0 0.0
        %2454 = vmatpush.msra.mxu0 0.0
        %2455 = vmatpush.msra.mxu0 %v2438
        %2456 = vmatmul.f32.gmra.mxu0 %v2436
        %v2457 = vpop.f32.mrf.mxu0
        %v2458 = vadd.f32 0.0, %v2457
        %2459 = vdwg.mxu0
        %2460 = vrot.lane.b32.xlu0 %v2378, 120
        %v2461 = vpop.permute.xlu0 %2460
        %2462 = vrot.lane.b32.xlu0 %v2378, 88
        %v2463 = vpop.permute.xlu0 %2462
        %v2464 = vsel %vm766, %v2461, 0
        %v2466 = vsel %vm766, %v2463, 0
        %2468 = vmatpush.xpose.msra.mxu0 0.0
        %2469 = vmatpush.xpose.msra.mxu0 0.0
        %2470 = vmatpush.xpose.msra.mxu0 0.0
        %2471 = vmatpush.xpose.msra.mxu0 0.0
        %2472 = vmatpush.xpose.msra.mxu0 0.0
        %2473 = vmatpush.xpose.msra.mxu0 0.0
        %2474 = vmatpush.xpose.msra.mxu0 0.0
        %2475 = vmatpush.xpose.msra.mxu0 0.0
        %2476 = vmatpush.xpose.msra.mxu0 0.0
        %2477 = vmatpush.xpose.msra.mxu0 0.0
        %2478 = vmatpush.xpose.msra.mxu0 0.0
        %2479 = vmatpush.xpose.msra.mxu0 0.0
        %2480 = vmatpush.xpose.msra.mxu0 0.0
        %2481 = vmatpush.xpose.msra.mxu0 0.0
        %2482 = vmatpush.xpose.msra.mxu0 0.0
        %2483 = vmatpush.xpose.msra.mxu0 %v2466
        %2484 = vmatmul.f32.gmra.mxu0 %v2464
        %v2485 = vpop.f32.mrf.mxu0
        %v2486 = vadd.f32 0.0, %v2485
        %2487 = vdwg.mxu0
        %v2488 = vmul.f32 %v2486, 0.35355338
        %v2489 = vsel %vm1896, %v2488, -inf
        %2490 = vmax.xlane.f32.xlu0 %v2489
        %v2491 = vpop.xlane.xlu0 %2490
        %v2492 = vsub.f32 %v2488, %v2491
        %v2493 = vmul.f32 %v2492, 1.442695
        %v2494 = vpow.pop %v2493
        %v2495 = vsel %vm1896, %v2494, 0.0
        %2496 = vadd.xlane.f32.xlu0 %v2495
        %v2497 = vpop.xlane.xlu0 %2496
        %v2498 = vrcp.pop %v2497
        %v2499 = vmul.f32 %v2497, %v2498
        %v2500 = vsub.f32 1.0, %v2499
        %v2501 = vmul.f32 %v2498, %v2500
        %v2502 = vadd.f32 %v2498, %v2501
        %vm2503 = vweird.f32 %v2497
        %vm2504 = vweird.f32 %v2498
        %vm2505 = vmor %vm2503, %vm2504
        %v2506 = vsel %vm2505, %v2498, %v2502
        %v2507 = vand.u32 2147483647, %v2497
        %vm2508 = vcmp.eq.f32.partialorder %v2507, 8.507059e+37
        %v2509 = vand.u32 %v2497, 2147483648
        %v2510 = vor.u32 1.1754944e-38, %v2509
        %v2511 = vsel %vm2508, %v2510, %v2506
        %v2512 = vmul.f32 %v2494, %v2511
        %s2513 = scalar_lea.vmem %s727, 4
        %2514 = vst.msk [vmem:[%s2513] sm:$0xf] %vm1896, %v2512
        %2515 = vrot.lane.b32.xlu0 %v2378, 56
        %v2516 = vpop.permute.xlu0 %2515
        %v2518 = vsel %vm733, %v2512, 0
        %v2520 = vsel %vm737, %v2516, 0
        %2522 = vmatpush.msra.mxu0 0.0
        %2523 = vmatpush.msra.mxu0 0.0
        %2524 = vmatpush.msra.mxu0 0.0
        %2525 = vmatpush.msra.mxu0 0.0
        %2526 = vmatpush.msra.mxu0 0.0
        %2527 = vmatpush.msra.mxu0 0.0
        %2528 = vmatpush.msra.mxu0 0.0
        %2529 = vmatpush.msra.mxu0 0.0
        %2530 = vmatpush.msra.mxu0 0.0
        %2531 = vmatpush.msra.mxu0 0.0
        %2532 = vmatpush.msra.mxu0 0.0
        %2533 = vmatpush.msra.mxu0 0.0
        %2534 = vmatpush.msra.mxu0 0.0
        %2535 = vmatpush.msra.mxu0 0.0
        %2536 = vmatpush.msra.mxu0 0.0
        %2537 = vmatpush.msra.mxu0 %v2520
        %2538 = vmatmul.f32.gmra.mxu0 %v2518
        %v2539 = vpop.f32.mrf.mxu0
        %v2540 = vadd.f32 0.0, %v2539
        %2541 = vdwg.mxu0
        %2542 = vrot.lane.b32.xlu0 %v2378, 112
        %v2543 = vpop.permute.xlu0 %2542
        %2544 = vrot.lane.b32.xlu0 %v2378, 80
        %v2545 = vpop.permute.xlu0 %2544
        %v2546 = vsel %vm766, %v2543, 0
        %v2548 = vsel %vm766, %v2545, 0
        %2550 = vmatpush.xpose.msra.mxu0 0.0
        %2551 = vmatpush.xpose.msra.mxu0 0.0
        %2552 = vmatpush.xpose.msra.mxu0 0.0
        %2553 = vmatpush.xpose.msra.mxu0 0.0
        %2554 = vmatpush.xpose.msra.mxu0 0.0
        %2555 = vmatpush.xpose.msra.mxu0 0.0
        %2556 = vmatpush.xpose.msra.mxu0 0.0
        %2557 = vmatpush.xpose.msra.mxu0 0.0
        %2558 = vmatpush.xpose.msra.mxu0 0.0
        %2559 = vmatpush.xpose.msra.mxu0 0.0
        %2560 = vmatpush.xpose.msra.mxu0 0.0
        %2561 = vmatpush.xpose.msra.mxu0 0.0
        %2562 = vmatpush.xpose.msra.mxu0 0.0
        %2563 = vmatpush.xpose.msra.mxu0 0.0
        %2564 = vmatpush.xpose.msra.mxu0 0.0
        %2565 = vmatpush.xpose.msra.mxu0 %v2548
        %2566 = vmatmul.f32.gmra.mxu0 %v2546
        %v2567 = vpop.f32.mrf.mxu0
        %v2568 = vadd.f32 0.0, %v2567
        %2569 = vdwg.mxu0
        %v2570 = vmul.f32 %v2568, 0.35355338
        %v2571 = vsel %vm1896, %v2570, -inf
        %2572 = vmax.xlane.f32.xlu0 %v2571
        %v2573 = vpop.xlane.xlu0 %2572
        %v2574 = vsub.f32 %v2570, %v2573
        %v2575 = vmul.f32 %v2574, 1.442695
        %v2576 = vpow.pop %v2575
        %v2577 = vsel %vm1896, %v2576, 0.0
        %2578 = vadd.xlane.f32.xlu0 %v2577
        %v2579 = vpop.xlane.xlu0 %2578
        %v2580 = vrcp.pop %v2579
        %v2581 = vmul.f32 %v2579, %v2580
        %v2582 = vsub.f32 1.0, %v2581
        %v2583 = vmul.f32 %v2580, %v2582
        %v2584 = vadd.f32 %v2580, %v2583
        %vm2585 = vweird.f32 %v2579
        %vm2586 = vweird.f32 %v2580
        %vm2587 = vmor %vm2585, %vm2586
        %v2588 = vsel %vm2587, %v2580, %v2584
        %v2589 = vand.u32 2147483647, %v2579
        %vm2590 = vcmp.eq.f32.partialorder %v2589, 8.507059e+37
        %v2591 = vand.u32 %v2579, 2147483648
        %v2592 = vor.u32 1.1754944e-38, %v2591
        %v2593 = vsel %vm2590, %v2592, %v2588
        %v2594 = vmul.f32 %v2576, %v2593
        %s2595 = scalar_lea.vmem %s727, 8
        %2596 = vst.msk [vmem:[%s2595] sm:$0xf] %vm1896, %v2594
        %2597 = vrot.lane.b32.xlu0 %v2378, 48
        %v2598 = vpop.permute.xlu0 %2597
        %v2600 = vsel %vm733, %v2594, 0
        %v2602 = vsel %vm737, %v2598, 0
        %2604 = vmatpush.msra.mxu0 0.0
        %2605 = vmatpush.msra.mxu0 0.0
        %2606 = vmatpush.msra.mxu0 0.0
        %2607 = vmatpush.msra.mxu0 0.0
        %2608 = vmatpush.msra.mxu0 0.0
        %2609 = vmatpush.msra.mxu0 0.0
        %2610 = vmatpush.msra.mxu0 0.0
        %2611 = vmatpush.msra.mxu0 0.0
        %2612 = vmatpush.msra.mxu0 0.0
        %2613 = vmatpush.msra.mxu0 0.0
        %2614 = vmatpush.msra.mxu0 0.0
        %2615 = vmatpush.msra.mxu0 0.0
        %2616 = vmatpush.msra.mxu0 0.0
        %2617 = vmatpush.msra.mxu0 0.0
        %2618 = vmatpush.msra.mxu0 0.0
        %2619 = vmatpush.msra.mxu0 %v2602
        %2620 = vmatmul.f32.gmra.mxu0 %v2600
        %v2621 = vpop.f32.mrf.mxu0
        %v2622 = vadd.f32 0.0, %v2621
        %2623 = vdwg.mxu0
        %2624 = vrot.lane.b32.xlu0 %v2378, 104
        %v2625 = vpop.permute.xlu0 %2624
        %2626 = vrot.lane.b32.xlu0 %v2378, 72
        %v2627 = vpop.permute.xlu0 %2626
        %v2628 = vsel %vm766, %v2625, 0
        %v2630 = vsel %vm766, %v2627, 0
        %2632 = vmatpush.xpose.msra.mxu0 0.0
        %2633 = vmatpush.xpose.msra.mxu0 0.0
        %2634 = vmatpush.xpose.msra.mxu0 0.0
        %2635 = vmatpush.xpose.msra.mxu0 0.0
        %2636 = vmatpush.xpose.msra.mxu0 0.0
        %2637 = vmatpush.xpose.msra.mxu0 0.0
        %2638 = vmatpush.xpose.msra.mxu0 0.0
        %2639 = vmatpush.xpose.msra.mxu0 0.0
        %2640 = vmatpush.xpose.msra.mxu0 0.0
        %2641 = vmatpush.xpose.msra.mxu0 0.0
        %2642 = vmatpush.xpose.msra.mxu0 0.0
        %2643 = vmatpush.xpose.msra.mxu0 0.0
        %2644 = vmatpush.xpose.msra.mxu0 0.0
        %2645 = vmatpush.xpose.msra.mxu0 0.0
        %2646 = vmatpush.xpose.msra.mxu0 0.0
        %2647 = vmatpush.xpose.msra.mxu0 %v2630
        %2648 = vmatmul.f32.gmra.mxu0 %v2628
        %v2649 = vpop.f32.mrf.mxu0
        %v2650 = vadd.f32 0.0, %v2649
        %2651 = vdwg.mxu0
        %v2652 = vmul.f32 %v2650, 0.35355338
        %v2653 = vsel %vm1896, %v2652, -inf
        %2654 = vmax.xlane.f32.xlu0 %v2653
        %v2655 = vpop.xlane.xlu0 %2654
        %v2656 = vsub.f32 %v2652, %v2655
        %v2657 = vmul.f32 %v2656, 1.442695
        %v2658 = vpow.pop %v2657
        %v2659 = vsel %vm1896, %v2658, 0.0
        %2660 = vadd.xlane.f32.xlu0 %v2659
        %v2661 = vpop.xlane.xlu0 %2660
        %v2662 = vrcp.pop %v2661
        %v2663 = vmul.f32 %v2661, %v2662
        %v2664 = vsub.f32 1.0, %v2663
        %v2665 = vmul.f32 %v2662, %v2664
        %v2666 = vadd.f32 %v2662, %v2665
        %vm2667 = vweird.f32 %v2661
        %vm2668 = vweird.f32 %v2662
        %vm2669 = vmor %vm2667, %vm2668
        %v2670 = vsel %vm2669, %v2662, %v2666
        %v2671 = vand.u32 2147483647, %v2661
        %vm2672 = vcmp.eq.f32.partialorder %v2671, 8.507059e+37
        %v2673 = vand.u32 %v2661, 2147483648
        %v2674 = vor.u32 1.1754944e-38, %v2673
        %v2675 = vsel %vm2672, %v2674, %v2670
        %v2676 = vmul.f32 %v2658, %v2675
        %s2677 = scalar_lea.vmem %s727, 12
        %2678 = vst.msk [vmem:[%s2677] sm:$0xf] %vm1896, %v2676
        %2679 = vrot.lane.b32.xlu0 %v2378, 40
        %v2680 = vpop.permute.xlu0 %2679
        %v2682 = vsel %vm733, %v2676, 0
        %v2684 = vsel %vm737, %v2680, 0
        %2686 = vmatpush.msra.mxu0 0.0
        %2687 = vmatpush.msra.mxu0 0.0
        %2688 = vmatpush.msra.mxu0 0.0
        %2689 = vmatpush.msra.mxu0 0.0
        %2690 = vmatpush.msra.mxu0 0.0
        %2691 = vmatpush.msra.mxu0 0.0
        %2692 = vmatpush.msra.mxu0 0.0
        %2693 = vmatpush.msra.mxu0 0.0
        %2694 = vmatpush.msra.mxu0 0.0
        %2695 = vmatpush.msra.mxu0 0.0
        %2696 = vmatpush.msra.mxu0 0.0
        %2697 = vmatpush.msra.mxu0 0.0
        %2698 = vmatpush.msra.mxu0 0.0
        %2699 = vmatpush.msra.mxu0 0.0
        %2700 = vmatpush.msra.mxu0 0.0
        %2701 = vmatpush.msra.mxu0 %v2684
        %2702 = vmatmul.f32.gmra.mxu0 %v2682
        %v2703 = vpop.f32.mrf.mxu0
        %v2704 = vadd.f32 0.0, %v2703
        %2705 = vdwg.mxu0
        %2707 = vrot.lane.b32.xlu0 %v2540, 8
        %v2708 = vpop.permute.xlu0 %2707
        %2711 = vrot.lane.b32.xlu0 %v2622, 16
        %v2712 = vpop.permute.xlu0 %2711
        %2715 = vrot.lane.b32.xlu0 %v2704, 24
        %v2716 = vpop.permute.xlu0 %2715
        %v2718 = vsel %vm766, %v2458, %v2708
        %v2719 = vsel %vm1168, %v2718, %v2712
        %v2720 = vsel %vm1170, %v2719, %v2716
        %v2721 = vperm.slane %v2349, 0
        %v2723 = vsel %vm761, %v2720, 0
        %2725 = vmatpush.msra.mxu0 0.0
        %2726 = vmatpush.msra.mxu0 0.0
        %2727 = vmatpush.msra.mxu0 0.0
        %2728 = vmatpush.msra.mxu0 0.0
        %2729 = vmatpush.msra.mxu0 0.0
        %2730 = vmatpush.msra.mxu0 0.0
        %2731 = vmatpush.msra.mxu0 0.0
        %2732 = vmatpush.msra.mxu0 0.0
        %2733 = vmatpush.msra.mxu0 0.0
        %2734 = vmatpush.msra.mxu0 0.0
        %2735 = vmatpush.msra.mxu0 0.0
        %2736 = vmatpush.msra.mxu0 0.0
        %2737 = vmatpush.msra.mxu0 %v2338
        %2738 = vmatpush.msra.mxu0 %v2337
        %2739 = vmatpush.msra.mxu0 %v2336
        %2740 = vmatpush.msra.mxu0 %v2335
        %2741 = vmatmul.f32.gmra.mxu0 %v2723
        %v2742 = vpop.f32.mrf.mxu0
        %v2743 = vadd.f32 %v2721, %v2742
        %2744 = vdwg.mxu0
        %v2745 = vadd.f32 %v2743, %v2329
        %v2746 = vsel %vm790, %v2745, 0.0
        %2747 = vadd.xlane.f32.xlu0 %v2746
        %v2748 = vpop.xlane.xlu0 %2747
        %v2749 = vmul.f32 %v2748, %v1206
        %v2750 = vsub.f32 %v2745, %v2749
        %v2751 = vmul.f32 %v2750, %v2750
        %v2752 = vsel %vm790, %v2751, 0.0
        %2753 = vadd.xlane.f32.xlu0 %v2752
        %v2754 = vpop.xlane.xlu0 %2753
        %v2755 = vmul.f32 %v2754, %v1206
        %v2756 = vadd.f32 %v2755, 1e-05
        %v2757 = vrsqrt.pop %v2756
        %v2758 = vmul.f32 %v2757, %v2756
        %v2759 = vmul.f32 %v2758, %v2757
        %v2760 = vmul.f32 0.5, %v2759
        %v2761 = vsub.f32 1.5, %v2760
        %v2762 = vmul.f32 %v2757, %v2761
        %vm2763 = vweird.f32 %v2756
        %vm2764 = vweird.f32 %v2757
        %vm2765 = vmor %vm2763, %vm2764
        %v2766 = vsel %vm2765, %v2757, %v2762
        %v2767 = vmul.f32 %v2750, %v2766
        %v2768 = vperm.slane %v2352, 0
        %v2769 = vmul.f32 %v2767, %v2768
        %v2770 = vperm.slane %v2353, 0
        %v2771 = vadd.f32 %v2769, %v2770
        %v2772 = vperm.slane %v2350, 0
        %v2774 = vsel %vm761, %v2771, 0
        %2776 = vmatpush.msra.mxu0 0.0
        %2777 = vmatpush.msra.mxu0 0.0
        %2778 = vmatpush.msra.mxu0 0.0
        %2779 = vmatpush.msra.mxu0 0.0
        %2780 = vmatpush.msra.mxu0 0.0
        %2781 = vmatpush.msra.mxu0 0.0
        %2782 = vmatpush.msra.mxu0 0.0
        %2783 = vmatpush.msra.mxu0 0.0
        %2784 = vmatpush.msra.mxu0 0.0
        %2785 = vmatpush.msra.mxu0 0.0
        %2786 = vmatpush.msra.mxu0 0.0
        %2787 = vmatpush.msra.mxu0 0.0
        %2788 = vmatpush.msra.mxu0 %v2342
        %2789 = vmatpush.msra.mxu0 %v2341
        %2790 = vmatpush.msra.mxu0 %v2340
        %2791 = vmatpush.msra.mxu0 %v2339
        %2792 = vmatmul.f32.gmra.mxu0 %v2774
        %v2793 = vpop.f32.mrf.mxu0
        %v2794 = vadd.f32 %v2772, %v2793
        %2795 = vdwg.mxu0
        %v2796 = vmax.f32 %v2794, 0.0
        %v2797 = vperm.slane %v2351, 0
        %v2799 = vsel %vm761, %v2796, 0
        %2801 = vmatpush.msra.mxu0 0.0
        %2802 = vmatpush.msra.mxu0 0.0
        %2803 = vmatpush.msra.mxu0 0.0
        %2804 = vmatpush.msra.mxu0 0.0
        %2805 = vmatpush.msra.mxu0 0.0
        %2806 = vmatpush.msra.mxu0 0.0
        %2807 = vmatpush.msra.mxu0 0.0
        %2808 = vmatpush.msra.mxu0 0.0
        %2809 = vmatpush.msra.mxu0 0.0
        %2810 = vmatpush.msra.mxu0 0.0
        %2811 = vmatpush.msra.mxu0 0.0
        %2812 = vmatpush.msra.mxu0 0.0
        %2813 = vmatpush.msra.mxu0 %v2346
        %2814 = vmatpush.msra.mxu0 %v2345
        %2815 = vmatpush.msra.mxu0 %v2344
        %2816 = vmatpush.msra.mxu0 %v2343
        %2817 = vmatmul.f32.gmra.mxu0 %v2799
        %v2818 = vpop.f32.mrf.mxu0
        %v2819 = vadd.f32 %v2797, %v2818
        %2820 = vdwg.mxu0
        %v2821 = vadd.f32 %v2819, %v2771
        %v2822 = vsel %vm790, %v2821, 0.0
        %2823 = vadd.xlane.f32.xlu0 %v2822
        %v2824 = vpop.xlane.xlu0 %2823
        %v2825 = vmul.f32 %v2824, %v1206
        %v2826 = vsub.f32 %v2821, %v2825
        %v2827 = vmul.f32 %v2826, %v2826
        %v2828 = vsel %vm790, %v2827, 0.0
        %2829 = vadd.xlane.f32.xlu0 %v2828
        %v2830 = vpop.xlane.xlu0 %2829
        %v2831 = vmul.f32 %v2830, %v1206
        %v2832 = vadd.f32 %v2831, 1e-05
        %v2833 = vrsqrt.pop %v2832
        %v2834 = vmul.f32 %v2833, %v2832
        %v2835 = vmul.f32 %v2834, %v2833
        %v2836 = vmul.f32 0.5, %v2835
        %v2837 = vsub.f32 1.5, %v2836
        %v2838 = vmul.f32 %v2833, %v2837
        %vm2839 = vweird.f32 %v2832
        %vm2840 = vweird.f32 %v2833
        %vm2841 = vmor %vm2839, %vm2840
        %v2842 = vsel %vm2841, %v2833, %v2838
        %v2843 = vmul.f32 %v2826, %v2842
        %v2844 = vperm.slane %v2354, 0
        %v2845 = vmul.f32 %v2843, %v2844
        %v2846 = vperm.slane %v2355, 0
        %v2847 = vadd.f32 %v2845, %v2846
        %v2848 = vld [vmem:[%s10] sm:$0x3f]
        %v2849 = vld [vmem:[#allocation11] sm:$0xff]
        %v2850 = vld [vmem:[#allocation11 + $0x8] sm:$0xff]
        %v2851 = vld [vmem:[#allocation11 + $0x10] sm:$0xff]
        %v2852 = vld [vmem:[#allocation11 + $0x18] sm:$0xff]
        %v2853 = vld [vmem:[#allocation11 + $0x20] sm:$0xff]
        %v2854 = vld [vmem:[#allocation11 + $0x28] sm:$0xff]
        %v2855 = vmul.f32 %v1819, %v2849
        %v2856 = vmul.f32 %v1819, %v2850
        %v2857 = vmul.f32 %v1819, %v2851
        %v2858 = vmul.f32 %v1819, %v2852
        %v2859 = vmul.f32 %v1819, %v2853
        %v2860 = vmul.f32 %v1819, %v2854
        %v2861 = vsel %vm761, %v2855, 0.0
        %2862 = vadd.xlane.f32.xlu0 %v2861
        %v2863 = vpop.xlane.xlu0 %2862
        %v2864 = vsel %vm761, %v2856, 0.0
        %2865 = vadd.xlane.f32.xlu0 %v2864
        %v2866 = vpop.xlane.xlu0 %2865
        %v2867 = vsel %vm761, %v2857, 0.0
        %2868 = vadd.xlane.f32.xlu0 %v2867
        %v2869 = vpop.xlane.xlu0 %2868
        %v2870 = vsel %vm761, %v2858, 0.0
        %2871 = vadd.xlane.f32.xlu0 %v2870
        %v2872 = vpop.xlane.xlu0 %2871
        %v2873 = vsel %vm761, %v2859, 0.0
        %2874 = vadd.xlane.f32.xlu0 %v2873
        %v2875 = vpop.xlane.xlu0 %2874
        %v2876 = vsel %vm761, %v2860, 0.0
        %2877 = vadd.xlane.f32.xlu0 %v2876
        %v2878 = vpop.xlane.xlu0 %2877
        %v2885 = vlaneseq
        %v2886 = vand.u32 %v2885, 127
        %v2887 = vperm.slane %v2863, %v2886
        %v2888 = vperm.slane %v2866, %v2886
        %v2889 = vperm.slane %v2869, %v2886
        %v2890 = vperm.slane %v2872, %v2886
        %v2891 = vperm.slane %v2875, %v2886
        %v2892 = vperm.slane %v2878, %v2886
        %vm2893 = vcmask 1041409
        %v2894 = vsel %vm2893, %v2888, %v2887
        %vm2895 = vcmask 1042434
        %v2896 = vsel %vm2895, %v2889, %v2894
        %vm2897 = vcmask 1043459
        %v2898 = vsel %vm2897, %v2890, %v2896
        %vm2899 = vcmask 1044484
        %v2900 = vsel %vm2899, %v2891, %v2898
        %vm2901 = vcmask 1045509
        %v2902 = vsel %vm2901, %v2892, %v2900
        %vm2904 = vcmask 62464
        %v2905 = vsel %vm2904, %v2902, 0.0
        %2906 = vadd.xlane.f32.xlu0 %v2905
        %v2907 = vpop.xlane.xlu0 %2906
        %v2908 = vld [vmem:[%s9] sm:$0xf]
        %v2909 = vld [vmem:[%s9 + $0x4] sm:$0xf]
        %v2910 = vld [vmem:[%s9 + $0x8] sm:$0xf]
        %v2911 = vld [vmem:[%s9 + $0xc] sm:$0xf]
        %v2912 = vld [vmem:[%s9 + $0x10] sm:$0xf]
        %v2913 = vld [vmem:[%s9 + $0x14] sm:$0xf]
        %v2914 = vmul.f32 %v2847, %v2908
        %v2915 = vmul.f32 %v2847, %v2909
        %v2916 = vmul.f32 %v2847, %v2910
        %v2917 = vmul.f32 %v2847, %v2911
        %v2918 = vmul.f32 %v2847, %v2912
        %v2919 = vmul.f32 %v2847, %v2913
        %v2920 = vsel %vm790, %v2914, 0.0
        %2921 = vadd.xlane.f32.xlu0 %v2920
        %v2922 = vpop.xlane.xlu0 %2921
        %v2923 = vsel %vm790, %v2915, 0.0
        %2924 = vadd.xlane.f32.xlu0 %v2923
        %v2925 = vpop.xlane.xlu0 %2924
        %v2926 = vsel %vm790, %v2916, 0.0
        %2927 = vadd.xlane.f32.xlu0 %v2926
        %v2928 = vpop.xlane.xlu0 %2927
        %v2929 = vsel %vm790, %v2917, 0.0
        %2930 = vadd.xlane.f32.xlu0 %v2929
        %v2931 = vpop.xlane.xlu0 %2930
        %v2932 = vsel %vm790, %v2918, 0.0
        %2933 = vadd.xlane.f32.xlu0 %v2932
        %v2934 = vpop.xlane.xlu0 %2933
        %v2935 = vsel %vm790, %v2919, 0.0
        %2936 = vadd.xlane.f32.xlu0 %v2935
        %v2937 = vpop.xlane.xlu0 %2936
        %v2944 = vperm.slane %v2922, %v2886
        %v2945 = vperm.slane %v2925, %v2886
        %v2946 = vperm.slane %v2928, %v2886
        %v2947 = vperm.slane %v2931, %v2886
        %v2948 = vperm.slane %v2934, %v2886
        %v2949 = vperm.slane %v2937, %v2886
        %v2950 = vsel %vm2893, %v2945, %v2944
        %v2951 = vsel %vm2895, %v2946, %v2950
        %v2952 = vsel %vm2897, %v2947, %v2951
        %v2953 = vsel %vm2899, %v2948, %v2952
        %v2954 = vsel %vm2901, %v2949, %v2953
        %vm2956 = vcmask 29696
        %v2957 = vsel %vm2956, %v2954, 0.0
        %2958 = vadd.xlane.f32.xlu0 %v2957
        %v2959 = vpop.xlane.xlu0 %2958
        %v2960 = vadd.f32 %v2907, %v2959
        %v2961 = vadd.f32 %v2960, %v2848
        %vm2962 = vcmask 1024
        %v2963 = vsel %vm2962, %v2961, -inf
        %v2964 = vrot.slane %v2963, 4
        %v2965 = vmax.f32 %v2963, %v2964
        %v2966 = vrot.slane %v2965, 2
        %v2967 = vmax.f32 %v2965, %v2966
        %v2968 = vrot.slane %v2967, 1
        %v2969 = vmax.f32 %v2967, %v2968
        %v2970 = vsub.f32 %v2961, %v2969
        %v2971 = vmul.f32 %v2970, 1.442695
        %v2972 = vpow.pop %v2971
        %v2973 = vsel %vm2962, %v2972, 0.0
        %v2974 = vrot.slane %v2973, 4
        %v2975 = vadd.f32 %v2973, %v2974
        %v2976 = vrot.slane %v2975, 2
        %v2977 = vadd.f32 %v2975, %v2976
        %v2978 = vrot.slane %v2977, 1
        %v2979 = vadd.f32 %v2977, %v2978
        %v2980 = vrcp.pop %v2979
        %v2981 = vmul.f32 %v2979, %v2980
        %v2982 = vsub.f32 1.0, %v2981
        %v2983 = vmul.f32 %v2980, %v2982
        %v2984 = vadd.f32 %v2980, %v2983
        %vm2985 = vweird.f32 %v2979
        %vm2986 = vweird.f32 %v2980
        %vm2987 = vmor %vm2985, %vm2986
        %v2988 = vsel %vm2987, %v2980, %v2984
        %v2989 = vand.u32 2147483647, %v2979
        %vm2990 = vcmp.eq.f32.partialorder %v2989, 8.507059e+37
        %v2991 = vand.u32 %v2979, 2147483648
        %v2992 = vor.u32 1.1754944e-38, %v2991
        %v2993 = vsel %vm2990, %v2992, %v2988
        %v2994 = vmul.f32 %v2972, %v2993
        %2995 = vst.msk [vmem:[%s712] sm:$0x3] %vm2962, %v2994
        %v2996 = vperm.slane %v2994, 0
        %v2997 = vmul.f32 %v2996, %v2907
        %v2998 = vperm.slane %v2994, 1
        %v2999 = vmul.f32 %v2998, %v2959
        %v3000 = vadd.f32 %v2997, %v2999
        %v3001 = vadd.f32 %v3000, %v2848
        %vm3002 = vcmask 5122
        %3003 = vst.msk [vmem:[%s708 - $0x2] sm:$0x3c] %vm3002, %v3001
        %s3005 = vtos %v2994
        %v3006 = vstv %s3005
        %v3008 = vmul.f32 %v1819, %v3006
        %3009 = vst.msk [vmem:[%s717] sm:$0xff] %vm761, %v3008
        %v3010 = vrot.slane %v2994, 1
        %s3011 = vtos %v3010
        %v3012 = vstv %s3011
        %v3014 = vmul.f32 %v2847, %v3012
        %3015 = vst.msk [vmem:[%s717 + $0x8] sm:$0xf] %vm790, %v3014
        %p3016 = scmp.lt.s32.totalorder %s39, 1
        %s3017 = scalar_select %p3016, %s39, 1
        %s3018 = smul.addr %s3017, 4
        %s3019 = scalar_lea.vmem %s11, %s3018
        %p3020 = scmp.lt.s32.totalorder %s39, 1
        %s3021 = scalar_select %p3020, %s39, 1
        %s3022 = smul.addr %s3021, 2
        %s3023 = scalar_lea.vmem %s12, %s3022
        %p3024 = scmp.lt.s32.totalorder %s39, 1
        %s3025 = scalar_select %p3024, %s39, 1
        %s3026 = smul.addr %s3025, 2
        %s3027 = smul.addr %s3026, 8
        %s3028 = scalar_lea.vmem %s13, %s3027
        %s3029 = sand.u32 %s366, 1
        %s3030 = scalar_lea.sflag [#allocation4], %s3029
        %s3031 = sand.u32 %s366, 1
        %s3032 = smul.addr %s3031, 8
        %s3033 = scalar_lea.vmem [#allocation13], %s3032
        %s3034 = sand.u32 %s392, 1
        %s3035 = scalar_lea.sflag [#allocation15], %s3034
        %s3036 = sand.u32 %s392, 1
        %s3037 = smul.addr %s3036, 4
        %s3038 = scalar_lea.vmem [#allocation14], %s3037
        %p3039 = scmp.lt.s32.totalorder %s39, 1
        %s3040 = scalar_select %p3039, %s39, 1
        %s3041 = smul.addr %s3040, 4
        %s3042 = smul.addr %s3041, 8
        %s3043 = scalar_lea.vmem %s16, %s3042
        %p3044 = scmp.lt.s32.totalorder %s39, 1
        %s3045 = scalar_select %p3044, %s39, 1
        %s3046 = smul.addr %s3045, 4
        %s3047 = smul.addr %s3046, 4
        %s3048 = scalar_lea.vmem %s17, %s3047
        // Predicated region
        $region89: #{transformer_forward.1} parent=63 // pred_check
          %p3049 = pneg %p298
        $region90: #{transformer_forward.1} parent=63 // pred_check_branch
          %3051 = sbr.rel (%p3049) target = $region92
        $region91: #{transformer_forward.1} parent=63 // pred_region
          _
        $region92: #{transformer_forward.1} parent=63 // pred_fallthru
          _
        // Predicated region
        $region93: #{transformer_forward.1} parent=63 // pred_check
          %p3052 = pneg %p324
        $region94: #{transformer_forward.1} parent=63 // pred_check_branch
          %3054 = sbr.rel (%p3052) target = $region96
        $region95: #{transformer_forward.1} parent=63 // pred_region
          _
        $region96: #{transformer_forward.1} parent=63 // pred_fallthru
          _
        // Predicated region
        $region97: #{transformer_forward.1} parent=63 // pred_check
          %p3055 = pneg %p350
        $region98: #{transformer_forward.1} parent=63 // pred_check_branch
          %3057 = sbr.rel (%p3055) target = $region100
        $region99: #{transformer_forward.1} parent=63 // pred_region
          _
        $region100: #{transformer_forward.1} parent=63 // pred_fallthru
          _
        // Predicated region
        $region101: #{transformer_forward.1} parent=63 // pred_check
          %p3058 = pneg %p376
        $region102: #{transformer_forward.1} parent=63 // pred_check_branch
          %3060 = sbr.rel (%p3058) target = $region104
        $region103: #{transformer_forward.1} parent=63 // pred_region
          %3062 = vsyncadd %s3030, 0
          %s3063 = smul.addr %s39, 8
          %s3064 = scalar_lea.hbm %s14, %s3063
          %s3066 = sshll.u32 %s3033, 4
          %s3067 = int_to_ptr.vmem [resolvable:$true] %s3066
          %s3068 = sshll.u32 %s3064, 4
          %s3069 = int_to_ptr.hbm [resolvable:$true] %s3068
          %3071 = dma.vmem_to_hbm [thread:$0]  %s3067, 128, %s3069, %s3030
        $region104: #{transformer_forward.1} parent=63 // pred_fallthru
          _
        // Predicated region
        $region105: #{transformer_forward.1} parent=63 // pred_check
          %p3072 = pneg %p402
        $region106: #{transformer_forward.1} parent=63 // pred_check_branch
          %3074 = sbr.rel (%p3072) target = $region108
        $region107: #{transformer_forward.1} parent=63 // pred_region
          %3076 = vsyncadd %s3035, 0
          %s3077 = smul.addr %s39, 4
          %s3078 = scalar_lea.hbm %s15, %s3077
          %s3080 = sshll.u32 %s3038, 4
          %s3081 = int_to_ptr.vmem [resolvable:$true] %s3080
          %s3082 = sshll.u32 %s3078, 4
          %s3083 = int_to_ptr.hbm [resolvable:$true] %s3082
          %3085 = dma.vmem_to_hbm [thread:$0]  %s3081, 64, %s3083, %s3035
        $region108: #{transformer_forward.1} parent=63 // pred_fallthru
          _
        // Predicated region
        $region109: #{transformer_forward.1} parent=63 // pred_check
          %p3086 = pneg %p428
        $region110: #{transformer_forward.1} parent=63 // pred_check_branch
          %3088 = sbr.rel (%p3086) target = $region112
        $region111: #{transformer_forward.1} parent=63 // pred_region
          _
        $region112: #{transformer_forward.1} parent=63 // pred_fallthru
          _
        // Predicated region
        $region113: #{transformer_forward.1} parent=63 // pred_check
          %p3089 = pneg %p454
        $region114: #{transformer_forward.1} parent=63 // pred_check_branch
          %3091 = sbr.rel (%p3089) target = $region116
        $region115: #{transformer_forward.1} parent=63 // pred_region
          _
        $region116: #{transformer_forward.1} parent=63 // pred_fallthru
          _
      $region64: #{transformer_forward.1} parent=5 // pred_fallthru
        _
      %p3092 = scmp.le.s32.totalorder 2, %s34
      // Predicated region
      $region117: #{transformer_forward.1} parent=5 // pred_check
        %p3093 = pneg %p3092
      $region118: #{transformer_forward.1} parent=5 // pred_check_branch
        %3095 = sbr.rel (%p3093) target = $region120
      $region119: #{transformer_forward.1} parent=5 // pred_region
        %s3096 = ssub.s32 %s34, 2
        // Predicated region
        $region121: #{transformer_forward.1} parent=119 // pred_check
          %p3097 = pneg %p304
        $region122: #{transformer_forward.1} parent=119 // pred_check_branch
          %3099 = sbr.rel (%p3097) target = $region124
        $region123: #{transformer_forward.1} parent=119 // pred_region
          %p3100 = scmp.lt.s32.totalorder %s40, 1
          %s3101 = scalar_select %p3100, %s40, 1
          %s3102 = smul.addr %s3101, 4
          %s3103 = scalar_lea.vmem %s11, %s3102
        $region124: #{transformer_forward.1} parent=119 // pred_fallthru
          _
        // Predicated region
        $region125: #{transformer_forward.1} parent=119 // pred_check
          %p3104 = pneg %p330
        $region126: #{transformer_forward.1} parent=119 // pred_check_branch
          %3106 = sbr.rel (%p3104) target = $region128
        $region127: #{transformer_forward.1} parent=119 // pred_region
          %p3107 = scmp.lt.s32.totalorder %s40, 1
          %s3108 = scalar_select %p3107, %s40, 1
          %s3109 = smul.addr %s3108, 2
          %s3110 = scalar_lea.vmem %s12, %s3109
        $region128: #{transformer_forward.1} parent=119 // pred_fallthru
          _
        // Predicated region
        $region129: #{transformer_forward.1} parent=119 // pred_check
          %p3111 = pneg %p356
        $region130: #{transformer_forward.1} parent=119 // pred_check_branch
          %3113 = sbr.rel (%p3111) target = $region132
        $region131: #{transformer_forward.1} parent=119 // pred_region
          %p3114 = scmp.lt.s32.totalorder %s40, 1
          %s3115 = scalar_select %p3114, %s40, 1
          %s3116 = smul.addr %s3115, 2
          %s3117 = smul.addr %s3116, 8
          %s3118 = scalar_lea.vmem %s13, %s3117
        $region132: #{transformer_forward.1} parent=119 // pred_fallthru
          _
        // Predicated region
        $region133: #{transformer_forward.1} parent=119 // pred_check
          %p3119 = pneg %p382
        $region134: #{transformer_forward.1} parent=119 // pred_check_branch
          %3121 = sbr.rel (%p3119) target = $region136
        $region135: #{transformer_forward.1} parent=119 // pred_region
          %s3122 = sand.u32 %s367, 1
          %s3123 = scalar_lea.sflag [#allocation4], %s3122
          %s3124 = sand.u32 %s367, 1
          %s3125 = smul.addr %s3124, 8
          %s3126 = scalar_lea.vmem [#allocation13], %s3125
          %3128 = dma.done %s3123, 128
        $region136: #{transformer_forward.1} parent=119 // pred_fallthru
          _
        // Predicated region
        $region137: #{transformer_forward.1} parent=119 // pred_check
          %p3129 = pneg %p408
        $region138: #{transformer_forward.1} parent=119 // pred_check_branch
          %3131 = sbr.rel (%p3129) target = $region140
        $region139: #{transformer_forward.1} parent=119 // pred_region
          %s3132 = sand.u32 %s393, 1
          %s3133 = scalar_lea.sflag [#allocation15], %s3132
          %s3134 = sand.u32 %s393, 1
          %s3135 = smul.addr %s3134, 4
          %s3136 = scalar_lea.vmem [#allocation14], %s3135
          %3138 = dma.done %s3133, 64
        $region140: #{transformer_forward.1} parent=119 // pred_fallthru
          _
        // Predicated region
        $region141: #{transformer_forward.1} parent=119 // pred_check
          %p3139 = pneg %p434
        $region142: #{transformer_forward.1} parent=119 // pred_check_branch
          %3141 = sbr.rel (%p3139) target = $region144
        $region143: #{transformer_forward.1} parent=119 // pred_region
          %p3142 = scmp.lt.s32.totalorder %s40, 1
          %s3143 = scalar_select %p3142, %s40, 1
          %s3144 = smul.addr %s3143, 4
          %s3145 = smul.addr %s3144, 8
          %s3146 = scalar_lea.vmem %s16, %s3145
        $region144: #{transformer_forward.1} parent=119 // pred_fallthru
          _
        // Predicated region
        $region145: #{transformer_forward.1} parent=119 // pred_check
          %p3147 = pneg %p460
        $region146: #{transformer_forward.1} parent=119 // pred_check_branch
          %3149 = sbr.rel (%p3147) target = $region148
        $region147: #{transformer_forward.1} parent=119 // pred_region
          %p3150 = scmp.lt.s32.totalorder %s40, 1
          %s3151 = scalar_select %p3150, %s40, 1
          %s3152 = smul.addr %s3151, 4
          %s3153 = smul.addr %s3152, 4
          %s3154 = scalar_lea.vmem %s17, %s3153
        $region148: #{transformer_forward.1} parent=119 // pred_fallthru
          _
      $region120: #{transformer_forward.1} parent=5 // pred_fallthru
        _
    $region6: #{transformer_forward.1} parent=1 // loop_footer
      %s38 = sadd.s32 1, %s34
    $region7: #{transformer_forward.1} parent=1 // loop_footer_branch
      %33 = sbr.rel target = $region3
    $region8: #{transformer_forward.1} parent=1 // loop_exit
      _
    %3155 = vsyncpa [#allocation3], 1
    %s3156 = scalar_lea.sflag [#allocation3], 1
    %3157 = vsyncpa %s3156, 1
    %3158 = vsyncpa [#allocation6], 1
    %3159 = vsyncpa [#allocation9], 1
    %3160 = vsyncpa [#allocation12], 1
    %3161 = vsyncpa [#allocation4], 1
    %s3162 = scalar_lea.sflag [#allocation4], 1
    %3163 = vsyncpa %s3162, 1
    %3164 = vsyncpa [#allocation15], 1
    %s3165 = scalar_lea.sflag [#allocation15], 1
    %3166 = vsyncpa %s3165, 1

</llo_original>
